<compile_context>
chip_gen: v6e
topology: v6e:2x2x1
jax: 0.10.0
libtpu: 0.0.40
codegen_flags: <defaults>
</compile_context>

<pallas_src>
import jax
import jax.numpy as jnp
from jax import lax
from jax.experimental import pallas as pl
from jax.experimental.pallas import tpu as pltpu


def _vq_nearest_kernel(z_ref, emb_ref, embT_ref, esqh_ref,
                       zq_ref, idx_ref, usage_ref, sqsum_ref):
    z = z_ref[0]                       # (D, tm)   spatial positions on lanes
    emb = emb_ref[...]                 # (NE, D)
    eT = embT_ref[...]                 # (D, NE)
    ne = emb.shape[0]

    # 0.5*d[k, m] = 0.5*||e_k||^2 - <e_k, z_m>   (||z||^2 term and the global
    # factor 2 are dropped, exactly as in the torch code's argmin).
    # D is tiny, so fp32 contract precision on the MXU costs nothing and keeps
    # argmin parity with an f32 reference (distance gaps here are ~1e-5).
    ez = lax.dot_general(emb, z, (((1,), (0,)), ((), ())),
                         preferred_element_type=jnp.float32,
                         precision=lax.Precision.HIGHEST)        # (NE, tm)
    d = esqh_ref[...] - ez                                       # (NE, tm)

    # argmin over the codebook axis (sublanes), first occurrence on ties
    # (matches torch.argmin).
    min_d = jnp.min(d, axis=0, keepdims=True)                    # (1, tm)
    iota = lax.broadcasted_iota(jnp.int32, d.shape, 0)           # (NE, tm)
    masked = jnp.where(d == min_d, iota, jnp.int32(ne))
    index = jnp.min(masked, axis=0, keepdims=True)               # (1, tm) i32

    # codebook gather via exact one-hot column-select on the MXU -> (D, tm)
    one_hot = (iota == index).astype(jnp.float32)                # (NE, tm)
    zq = lax.dot_general(eT, one_hot, (((1,), (0,)), ((), ())),
                         preferred_element_type=jnp.float32,
                         precision=lax.Precision.HIGHEST)        # (D, tm)

    zq_ref[0] = zq                                               # lane-dense store
    idx_ref[...] = index.reshape(idx_ref.shape)                  # lane-dense row

    # per-codebook-entry usage flag for `diversity` (cross-lane max on the XLU)
    usage = jnp.max(one_hot, axis=1, keepdims=True)              # (NE, 1)
    usage_ref[...] = usage.reshape(usage_ref.shape)

    diff = zq - z
    sqsum_ref[...] = jnp.sum(diff * diff).reshape(sqsum_ref.shape)


def _choose_tm(hw, ne):
    """Largest lane-tile that divides HW, is a multiple of 128, and keeps the
    (NE, tm) argmin temporaries within a modest VMEM budget (safe on v7x's
    smaller 64 MiB VMEM as well as v5e/v6e)."""
    budget_bytes = 4 * 1024 * 1024            # ~4 live (NE, tm) f32/i32 arrays
    cap = max(128, budget_bytes // (4 * 4 * ne))
    cap = min(cap, 2048)
    best = None
    t = 128
    while t <= min(hw, cap):
        if hw % t == 0:
            best = t
        t += 128
    return best if best is not None else hw   # small/odd HW: take the whole row


def vector_quantizer_nearest(z_nchw, embedding_weight, beta=0.25, tm=None):
    N, C, H, W = z_nchw.shape
    NE, D = embedding_weight.shape
    assert C == D, "in_channels must equal embedding_dim for mode='nearest'"
    HW = H * W
    if tm is None:
        tm = _choose_tm(HW, NE)
    assert HW % tm == 0, f"H*W={HW} must be divisible by tm={tm}"
    T = HW // tm

    # NCHW is already channels-first: a reshape is all the layout work needed.
    z = z_nchw.reshape(N, D, HW).astype(jnp.float32)
    emb = embedding_weight.astype(jnp.float32)                # (NE, D)
    emb_t = emb.T                                             # (D, NE) lane-dense
    esq_half = (0.5 * jnp.sum(emb * emb, axis=1))[:, None]    # (NE, 1)

    zq_flat, idx4, usage4, sq_part = pl.pallas_call(
        _vq_nearest_kernel,
        out_shape=(
            jax.ShapeDtypeStruct((N, D, HW), jnp.float32),
            jax.ShapeDtypeStruct((N, T, 1, tm), jnp.int32),
            jax.ShapeDtypeStruct((N, T, NE, 1), jnp.float32),
            jax.ShapeDtypeStruct((N, T, 1, 1), jnp.float32),
        ),
        grid_spec=pltpu.PrefetchScalarGridSpec(
            num_scalar_prefetch=0,
            grid=(N, T),
            in_specs=[
                pl.BlockSpec((1, D, tm), lambda i, j: (i, 0, j)),      # z tile
                pl.BlockSpec((NE, D), lambda i, j: (0, 0)),            # codebook (resident)
                pl.BlockSpec((D, NE), lambda i, j: (0, 0)),            # codebook^T (resident)
                pl.BlockSpec((NE, 1), lambda i, j: (0, 0)),            # 0.5*||e||^2 column
            ],
            out_specs=[
                pl.BlockSpec((1, D, tm), lambda i, j: (i, 0, j)),       # z_q tile
                pl.BlockSpec((1, 1, 1, tm), lambda i, j: (i, j, 0, 0)),  # indices
                pl.BlockSpec((1, 1, NE, 1), lambda i, j: (i, j, 0, 0)),  # usage flags
                pl.BlockSpec((1, 1, 1, 1), lambda i, j: (i, j, 0, 0)),   # partial sq-err
            ],
        ),
        compiler_params=pltpu.CompilerParams(
            dimension_semantics=("parallel", "parallel")),
    )(z, emb, emb_t, esq_half)

    index = idx4.reshape(N, H, W)

    # loss = mean((z_q.detach() - z)^2) + beta * mean((z_q - z.detach())^2)
    # (identical forward value for both terms)
    mse = jnp.sum(sq_part) / (N * HW * D)
    loss = (1.0 + beta) * mse

    # straight-through estimator: z_q = z + (z_q - z).detach()
    #   -> forward value equals the selected codebook entries (already NCHW).
    z_q = zq_flat.reshape(N, D, H, W)

    # diversity = sum_b |unique(index[b])| / (N*H*W), computed from the kernel's
    # per-block usage flags (pure reductions, no XLA scatter needed).
    used = jnp.max(usage4.reshape(N, T, NE), axis=1) > 0.0     # (N, NE)
    diversity = jnp.sum(used) / (N * HW)

    return {"z_q": z_q, "index": index, "loss": loss, "diversity": diversity}


if __name__ == "__main__":
    key = jax.random.PRNGKey(0)
    k_z, k_e = jax.random.split(key)

    N, D, H, W = 2, 4, 16, 16
    NE = 256
    beta = 0.25

    z = jax.random.normal(k_z, (N, D, H, W), dtype=jnp.float32)
    # nn.init.uniform_(embedding.weight, -1/NE, 1/NE)
    emb = jax.random.uniform(k_e, (NE, D), minval=-1.0 / NE, maxval=1.0 / NE,
                             dtype=jnp.float32)

    out = vector_quantizer_nearest(z, emb, beta=beta)
    jax.block_until_ready(out)

    # pure-JAX reference of the torch forward semantics
    z_last = jnp.transpose(z, (0, 2, 3, 1))                                  # channel_last
    d_ref = jnp.sum(emb ** 2, axis=1) - 2.0 * jnp.einsum(
        "nhwd,kd->nhwk", z_last, emb, precision=lax.Precision.HIGHEST)
    idx_ref = jnp.argmin(d_ref, axis=-1).astype(jnp.int32)
    zq_ref_last = emb[idx_ref]
    loss_ref = (1.0 + beta) * jnp.mean((zq_ref_last - z_last) ** 2)

    idx_k = out["index"]
    assert idx_k.shape == (N, H, W) and idx_k.dtype == jnp.int32
    assert out["z_q"].shape == (N, D, H, W)

    # nearest-codebook check (tie-tolerant): the kernel's pick attains the
    # minimal reference distance at every position.
    d_min = jnp.min(d_ref, axis=-1)
    d_sel = jnp.take_along_axis(d_ref, idx_k[..., None], axis=-1)[..., 0]
    assert bool(jnp.all(d_sel <= d_min + 1e-6))
    # exact-index agreement (ties are absent for this random data)
    match_frac = jnp.mean((idx_k == idx_ref).astype(jnp.float32))
    assert float(match_frac) >= 0.99

    # z_q equals the selected codebook rows (channel-first)
    zq_expect = jnp.transpose(emb[idx_k], (0, 3, 1, 2))
    assert jnp.allclose(out["z_q"], zq_expect, atol=1e-5)
    assert jnp.allclose(out["loss"], loss_ref, atol=1e-5, rtol=1e-5)

    # diversity agrees with torch's per-batch unique() count over the kernel's indices
    div_from_idx = sum(int(jnp.unique(idx_k[b]).size) for b in range(N)) / (N * H * W)
    assert abs(float(out["diversity"]) - div_from_idx) < 1e-6

    print("KERNEL_OK")
</pallas_src>

<mosaic_0001>
module attributes {stable_mosaic.version = 11 : i64} {
  func.func @_vq_nearest_kernel(%arg0: i32, %arg1: i32, %arg2: memref<1x4x256xf32, #tpu.memory_space<vmem>>, %arg3: memref<256x4xf32, #tpu.memory_space<vmem>>, %arg4: memref<4x256xf32, #tpu.memory_space<vmem>>, %arg5: memref<256x1xf32, #tpu.memory_space<vmem>>, %arg6: memref<1x4x256xf32, #tpu.memory_space<vmem>>, %arg7: memref<1x1x1x256xi32, #tpu.memory_space<vmem>>, %arg8: memref<1x1x256x1xf32, #tpu.memory_space<vmem>>, %arg9: memref<1x1x1x1xf32, #tpu.memory_space<vmem>>) attributes {dimension_semantics = [#tpu.dimension_semantics<parallel>, #tpu.dimension_semantics<parallel>], iteration_bounds = array<i64: 2, 1>, scalar_prefetch = 0 : i64, scratch_operands = 0 : i64, tpu.core_type = #tpu.core_type<tc>, window_params = [{transform_indices = @transform_0, window_bounds = array<i64: 1, 4, 256>}, {pipeline_mode = #tpu.pipeline_mode<synchronous>, transform_indices = @transform_1, window_bounds = array<i64: 256, 4>}, {pipeline_mode = #tpu.pipeline_mode<synchronous>, transform_indices = @transform_2, window_bounds = array<i64: 4, 256>}, {pipeline_mode = #tpu.pipeline_mode<synchronous>, transform_indices = @transform_3, window_bounds = array<i64: 256, 1>}, {transform_indices = @transform_4, window_bounds = array<i64: 1, 4, 256>}, {transform_indices = @transform_5, window_bounds = array<i64: 1, 1, 1, 256>}, {transform_indices = @transform_6, window_bounds = array<i64: 1, 1, 256, 1>}, {transform_indices = @transform_7, window_bounds = array<i64: 1, 1, 1, 1>}]} {
    %c0 = arith.constant 0 : index
    %c0_0 = arith.constant 0 : index
    %c0_1 = arith.constant 0 : index
    %0 = vector.load %arg2[%c0, %c0_0, %c0_1] : memref<1x4x256xf32, #tpu.memory_space<vmem>>, vector<1x4x256xf32>
    %1 = vector.shape_cast %0 : vector<1x4x256xf32> to vector<4x256xf32>
    %c0_2 = arith.constant 0 : index
    %c0_3 = arith.constant 0 : index
    %2 = vector.load %arg3[%c0_2, %c0_3] : memref<256x4xf32, #tpu.memory_space<vmem>>, vector<256x4xf32>
    %c0_4 = arith.constant 0 : index
    %c0_5 = arith.constant 0 : index
    %3 = vector.load %arg4[%c0_4, %c0_5] : memref<4x256xf32, #tpu.memory_space<vmem>>, vector<4x256xf32>
    %cst = arith.constant dense<0.000000e+00> : vector<256x256xf32>
    %4 = tpu.matmul %2, %1, %cst {dimension_numbers = #tpu.dot_dimension_numbers<[1], [0], [0], [1], [0, 0, 1, 1], [], []>, precision = #tpu.contract_precision<fp32>} : vector<256x4xf32>, vector<4x256xf32>, vector<256x256xf32> -> vector<256x256xf32>
    %c0_6 = arith.constant 0 : index
    %c0_7 = arith.constant 0 : index
    %5 = vector.load %arg5[%c0_6, %c0_7] : memref<256x1xf32, #tpu.memory_space<vmem>>, vector<256x1xf32>
    %6 = vector.broadcast %5 : vector<256x1xf32> to vector<256x256xf32>
    %7 = arith.subf %6, %4 : vector<256x256xf32>
    %cst_8 = arith.constant dense<0x7F800000> : vector<256xf32>
    %8 = vector.multi_reduction <minimumf>, %7, %cst_8 [0] : vector<256x256xf32> to vector<256xf32>
    %9 = vector.shape_cast %8 : vector<256xf32> to vector<1x256xf32>
    %10 = tpu.iota {dimensions = array<i32: 0>} : vector<256x256xi32>
    %11 = vector.broadcast %9 : vector<1x256xf32> to vector<256x256xf32>
    %12 = arith.cmpf oeq, %7, %11 : vector<256x256xf32>
    %c256_i32 = arith.constant 256 : i32
    %13 = vector.broadcast %c256_i32 : i32 to vector<256x256xi32>
    %14 = arith.select %12, %10, %13 : vector<256x256xi1>, vector<256x256xi32>
    %cst_9 = arith.constant dense<2147483647> : vector<256xi32>
    %15 = vector.multi_reduction <minsi>, %14, %cst_9 [0] : vector<256x256xi32> to vector<256xi32>
    %16 = vector.shape_cast %15 : vector<256xi32> to vector<1x256xi32>
    %17 = vector.broadcast %16 : vector<1x256xi32> to vector<256x256xi32>
    %18 = arith.cmpi eq, %10, %17 : vector<256x256xi32>
    %19 = arith.extui %18 : vector<256x256xi1> to vector<256x256xi32>
    %20 = arith.sitofp %19 : vector<256x256xi32> to vector<256x256xf32>
    %cst_10 = arith.constant dense<0.000000e+00> : vector<4x256xf32>
    %21 = tpu.matmul %3, %20, %cst_10 {dimension_numbers = #tpu.dot_dimension_numbers<[1], [0], [0], [1], [0, 0, 1, 1], [], []>, precision = #tpu.contract_precision<fp32>} : vector<4x256xf32>, vector<256x256xf32>, vector<4x256xf32> -> vector<4x256xf32>
    %c0_11 = arith.constant 0 : index
    %c0_12 = arith.constant 0 : index
    %c0_13 = arith.constant 0 : index
    %22 = vector.load %arg6[%c0_11, %c0_12, %c0_13] : memref<1x4x256xf32, #tpu.memory_space<vmem>>, vector<1x4x256xf32>
    %23 = vector.shape_cast %22 : vector<1x4x256xf32> to vector<4x256xf32>
    %24 = vector.shape_cast %21 : vector<4x256xf32> to vector<1x4x256xf32>
    tpu.vector_store %arg6[%c0_11, %c0_12, %c0_13], %24 {strides = array<i32>} : memref<1x4x256xf32, #tpu.memory_space<vmem>>, vector<1x4x256xf32>,
    %25 = vector.shape_cast %16 : vector<1x256xi32> to vector<1x1x1x256xi32>
    %c0_14 = arith.constant 0 : index
    %c0_15 = arith.constant 0 : index
    %c0_16 = arith.constant 0 : index
    %c0_17 = arith.constant 0 : index
    %26 = vector.load %arg7[%c0_14, %c0_15, %c0_16, %c0_17] : memref<1x1x1x256xi32, #tpu.memory_space<vmem>>, vector<1x1x1x256xi32>
    tpu.vector_store %arg7[%c0_14, %c0_15, %c0_16, %c0_17], %25 {strides = array<i32>} : memref<1x1x1x256xi32, #tpu.memory_space<vmem>>, vector<1x1x1x256xi32>,
    %cst_18 = arith.constant dense<0xFF800000> : vector<256xf32>
    %27 = vector.multi_reduction <maximumf>, %20, %cst_18 [1] : vector<256x256xf32> to vector<256xf32>
    %28 = vector.shape_cast %27 : vector<256xf32> to vector<256x1xf32>
    %29 = vector.shape_cast %28 : vector<256x1xf32> to vector<1x1x256x1xf32>
    %c0_19 = arith.constant 0 : index
    %c0_20 = arith.constant 0 : index
    %c0_21 = arith.constant 0 : index
    %c0_22 = arith.constant 0 : index
    %30 = vector.load %arg8[%c0_19, %c0_20, %c0_21, %c0_22] : memref<1x1x256x1xf32, #tpu.memory_space<vmem>>, vector<1x1x256x1xf32>
    tpu.vector_store %arg8[%c0_19, %c0_20, %c0_21, %c0_22], %29 {strides = array<i32>} : memref<1x1x256x1xf32, #tpu.memory_space<vmem>>, vector<1x1x256x1xf32>,
    %31 = arith.subf %21, %1 : vector<4x256xf32>
    %32 = arith.mulf %31, %31 : vector<4x256xf32>
    %33 = vector.shape_cast %32 : vector<4x256xf32> to vector<1x4x256xf32>
    %cst_23 = arith.constant dense<0.000000e+00> : vector<1xf32>
    %34 = vector.multi_reduction <add>, %33, %cst_23 [1, 2] : vector<1x4x256xf32> to vector<1xf32>
    %35 = vector.shape_cast %34 : vector<1xf32> to vector<1x1x1xf32>
    %36 = vector.extract %35[0, 0, 0] : f32 from vector<1x1x1xf32>
    %37 = vector.broadcast %36 : f32 to vector<1x1x1x1xf32>
    %c0_24 = arith.constant 0 : index
    %c0_25 = arith.constant 0 : index
    %c0_26 = arith.constant 0 : index
    %c0_27 = arith.constant 0 : index
    %38 = vector.load %arg9[%c0_24, %c0_25, %c0_26, %c0_27] : memref<1x1x1x1xf32, #tpu.memory_space<vmem>>, vector<1x1x1x1xf32>
    tpu.vector_store %arg9[%c0_24, %c0_25, %c0_26, %c0_27], %37 {strides = array<i32>} : memref<1x1x1x1xf32, #tpu.memory_space<vmem>>, vector<1x1x1x1xf32>,
    return
  }
  func.func @transform_0(%arg0: i32, %arg1: i32) -> (i32, i32, i32) {
    %c0_i32 = arith.constant 0 : i32
    %c0_i32_0 = arith.constant 0 : i32
    return %arg0, %c0_i32, %arg1 : i32, i32, i32
  }
  func.func @transform_1(%arg0: i32, %arg1: i32) -> (i32, i32) {
    %c0_i32 = arith.constant 0 : i32
    %c0_i32_0 = arith.constant 0 : i32
    %c0_i32_1 = arith.constant 0 : i32
    return %c0_i32, %c0_i32_0 : i32, i32
  }
  func.func @transform_2(%arg0: i32, %arg1: i32) -> (i32, i32) {
    %c0_i32 = arith.constant 0 : i32
    %c0_i32_0 = arith.constant 0 : i32
    %c0_i32_1 = arith.constant 0 : i32
    return %c0_i32, %c0_i32_0 : i32, i32
  }
  func.func @transform_3(%arg0: i32, %arg1: i32) -> (i32, i32) {
    %c0_i32 = arith.constant 0 : i32
    %c0_i32_0 = arith.constant 0 : i32
    %c0_i32_1 = arith.constant 0 : i32
    return %c0_i32, %c0_i32_0 : i32, i32
  }
  func.func @transform_4(%arg0: i32, %arg1: i32) -> (i32, i32, i32) {
    %c0_i32 = arith.constant 0 : i32
    %c0_i32_0 = arith.constant 0 : i32
    return %arg0, %c0_i32, %arg1 : i32, i32, i32
  }
  func.func @transform_5(%arg0: i32, %arg1: i32) -> (i32, i32, i32, i32) {
    %c0_i32 = arith.constant 0 : i32
    %c0_i32_0 = arith.constant 0 : i32
    %c0_i32_1 = arith.constant 0 : i32
    return %arg0, %arg1, %c0_i32, %c0_i32_0 : i32, i32, i32, i32
  }
  func.func @transform_6(%arg0: i32, %arg1: i32) -> (i32, i32, i32, i32) {
    %c0_i32 = arith.constant 0 : i32
    %c0_i32_0 = arith.constant 0 : i32
    %c0_i32_1 = arith.constant 0 : i32
    return %arg0, %arg1, %c0_i32, %c0_i32_0 : i32, i32, i32, i32
  }
  func.func @transform_7(%arg0: i32, %arg1: i32) -> (i32, i32, i32, i32) {
    %c0_i32 = arith.constant 0 : i32
    %c0_i32_0 = arith.constant 0 : i32
    %c0_i32_1 = arith.constant 0 : i32
    return %arg0, %arg1, %c0_i32, %c0_i32_0 : i32, i32, i32, i32
  }
}

</mosaic_0001>

<llo_original>
// kernel: tpu_custom_call.1
$region0: #{tpu_custom_call.1}
  #allocation0 [shape = 'u32[]', space=smem, size = 0x4, offset = 0x4, fixed_abs, tag = 'smem constant byte address 0x4 - core index']
  #allocation1 [shape = 'u32[144,128]{1,0:T(1,128)}', space=vmem, size = 0x12000, scoped, tag = 'internal scratch']
  %s0 = inlined_call_operand.vmem [shape: f32[2,4,256], index: 0, kind: input, shape index: {}]
  %s1 = inlined_call_operand.vmem [shape: f32[256,4], index: 1, kind: input, shape index: {}]
  %s2 = inlined_call_operand.vmem [shape: f32[4,256], index: 2, kind: input, shape index: {}]
  %s3 = inlined_call_operand.vmem [shape: f32[256,1], index: 3, kind: input, shape index: {}]
  %s4 = inlined_call_operand.hbm [shape: f32[2,4,256], index: 4, kind: output, shape index: {0}]
  %s5 = inlined_call_operand.hbm [shape: s32[2,1,1,256], index: 5, kind: output, shape index: {1}]
  %s6 = inlined_call_operand.vmem [shape: f32[2,1,256,1], index: 6, kind: output, shape index: {2}]
  %s7 = inlined_call_operand.vmem [shape: f32[2,1,1,1], index: 7, kind: output, shape index: {3}]
  %8 = xla_tuple %s4, %s5, %s6, %s7
  %s9 = sld [smem:[#allocation0]]
  $region73: #{tpu_custom_call.1} parent=0
    _
  %s11 = ssub.s32 1, %s9
  %s12 = scalar_select 0, %s11, %s9
  $region1: #{tpu_custom_call.1} parent=0
    #allocation2 [shape = 'u8[8192]{0}', space=vmem, size = 0x2000, scoped, tag = 'output window, operand 0']
    #allocation3 [shape = 's32[2]{0}', space=sflag, size = 0x8, scoped, tag = 'scoped memory for tpu_custom_call.1']
    #allocation4 [shape = 'u8[2048]{0}', space=vmem, size = 0x800, scoped, tag = 'output window, operand 1']
    #allocation5 [shape = 's32[2]{0}', space=sflag, size = 0x8, scoped, tag = 'scoped memory for tpu_custom_call.1']
    %13 = vsyncpa [#allocation3], 0
    %s14 = scalar_lea.sflag [#allocation3], 1
    %15 = vsyncpa %s14, 0
    %16 = vsyncpa [#allocation5], 0
    %s17 = scalar_lea.sflag [#allocation5], 1
    %18 = vsyncpa %s17, 0
    loop: start=0, step=1, limit=4
    $region2: #{tpu_custom_call.1} parent=1 // loop_pre_header
      _
    $region3: #{tpu_custom_call.1} parent=1 // loop_header
      %s20 = sphi 0, %s24
      %p21 = scmp.ge.s32.totalorder %s20, 4
      %s27 = sphi 0, %s39
      %s28 = sphi 0, %s35
      %s29 = sphi 0, %s27
      %s30 = sphi 0, %s28
      %s31 = sphi 0, %s29
      %s32 = sphi 0, %s30
      %s44 = sphi 0, %s46
      %s47 = sphi 0, %s44
      %s48 = sphi 0, %s47
      %s64 = sphi 0, %s48
      %s68 = sphi 0, %s68
      %s70 = sphi 0, %s68
      %s71 = sphi 0, %s70
      %s85 = sphi 0, %s71
      %s89 = sphi 0, %s89
      %s91 = sphi 0, %s89
      %s92 = sphi 0, %s91
      %s106 = sphi 0, %s92
      %s110 = sphi 0, %s110
      %s112 = sphi 0, %s110
      %s113 = sphi 0, %s112
      %s127 = sphi 0, %s113
      %s135 = sphi 0, %s137
      %s138 = sphi 0, %s135
      %s139 = sphi 0, %s138
      %s155 = sphi 0, %s139
      %s163 = sphi 0, %s165
      %s166 = sphi 0, %s163
      %s167 = sphi 0, %s166
      %s183 = sphi 0, %s167
      %s191 = sphi 0, %s193
      %s194 = sphi 0, %s191
      %s195 = sphi 0, %s194
      %s211 = sphi 0, %s195
      %s219 = sphi 0, %s221
      %s222 = sphi 0, %s219
      %s223 = sphi 0, %s222
      %s239 = sphi 0, %s223
    $region4: #{tpu_custom_call.1} parent=1 // loop_header_branch
      %23 = sbr.rel (%p21) target = $region8
    $region5: #{tpu_custom_call.1} parent=1 // loop_body
      %s25 = ssub.s32 %s20, 1
      %s26 = ssub.s32 %s20, 2
      %s33 = sadd.s32 1, %s28
      %p34 = scmp.ge.s32.totalorder %s33, 1
      %s35 = scalar_select %p34, 0, %s33
      %s36 = sadd.s32 1, %s27
      %s37 = scalar_select %p34, %s36, %s27
      %p38 = scmp.ge.s32.totalorder %s37, 2
      %s39 = scalar_select %p38, 0, %s37
      %s40 = ssub.s32 %s27, %s39
      %s41 = ssub.s32 %s28, %s35
      %s42 = sor.u32 %s40, %s41
      %p43 = scmp.eq.s32.totalorder %s42, 0
      %s45 = sadd.s32 %s44, 1
      %s46 = scalar_select %p43, %s44, %s45
      %p49 = pneg %p43
      %p50 = scmp.eq.s32.totalorder %s20, 1
      %p51 = por %p49, %p50
      %p52 = scmp.ne.s32.totalorder %s44, %s47
      %p53 = scmp.eq.s32.totalorder %s20, 0
      %p54 = por %p52, %p53
      %p55 = scmp.ne.s32.totalorder %s44, %s47
      %p56 = scmp.eq.s32.totalorder %s25, 1
      %p57 = por %p55, %p56
      %p58 = scmp.ne.s32.totalorder %s47, %s48
      %p59 = scmp.eq.s32.totalorder %s25, 0
      %p60 = por %p58, %p59
      %p61 = scmp.ne.s32.totalorder %s47, %s48
      %p62 = scmp.eq.s32.totalorder %s26, 1
      %p63 = por %p61, %p62
      %p65 = scmp.ne.s32.totalorder %s48, %s64
      %p66 = scmp.eq.s32.totalorder %s26, 0
      %p67 = por %p65, %p66
      %s69 = sadd.s32 %s68, 1
      %p72 = scmp.eq.s32.totalorder %s20, 1
      %p73 = scmp.ne.s32.totalorder %s68, %s70
      %p74 = scmp.eq.s32.totalorder %s20, 0
      %p75 = por %p73, %p74
      %p76 = scmp.ne.s32.totalorder %s68, %s70
      %p77 = scmp.eq.s32.totalorder %s25, 1
      %p78 = por %p76, %p77
      %p79 = scmp.ne.s32.totalorder %s70, %s71
      %p80 = scmp.eq.s32.totalorder %s25, 0
      %p81 = por %p79, %p80
      %p82 = scmp.ne.s32.totalorder %s70, %s71
      %p83 = scmp.eq.s32.totalorder %s26, 1
      %p84 = por %p82, %p83
      %p86 = scmp.ne.s32.totalorder %s71, %s85
      %p87 = scmp.eq.s32.totalorder %s26, 0
      %p88 = por %p86, %p87
      %s90 = sadd.s32 %s89, 1
      %p93 = scmp.eq.s32.totalorder %s20, 1
      %p94 = scmp.ne.s32.totalorder %s89, %s91
      %p95 = scmp.eq.s32.totalorder %s20, 0
      %p96 = por %p94, %p95
      %p97 = scmp.ne.s32.totalorder %s89, %s91
      %p98 = scmp.eq.s32.totalorder %s25, 1
      %p99 = por %p97, %p98
      %p100 = scmp.ne.s32.totalorder %s91, %s92
      %p101 = scmp.eq.s32.totalorder %s25, 0
      %p102 = por %p100, %p101
      %p103 = scmp.ne.s32.totalorder %s91, %s92
      %p104 = scmp.eq.s32.totalorder %s26, 1
      %p105 = por %p103, %p104
      %p107 = scmp.ne.s32.totalorder %s92, %s106
      %p108 = scmp.eq.s32.totalorder %s26, 0
      %p109 = por %p107, %p108
      %s111 = sadd.s32 %s110, 1
      %p114 = scmp.eq.s32.totalorder %s20, 1
      %p115 = scmp.ne.s32.totalorder %s110, %s112
      %p116 = scmp.eq.s32.totalorder %s20, 0
      %p117 = por %p115, %p116
      %p118 = scmp.ne.s32.totalorder %s110, %s112
      %p119 = scmp.eq.s32.totalorder %s25, 1
      %p120 = por %p118, %p119
      %p121 = scmp.ne.s32.totalorder %s112, %s113
      %p122 = scmp.eq.s32.totalorder %s25, 0
      %p123 = por %p121, %p122
      %p124 = scmp.ne.s32.totalorder %s112, %s113
      %p125 = scmp.eq.s32.totalorder %s26, 1
      %p126 = por %p124, %p125
      %p128 = scmp.ne.s32.totalorder %s113, %s127
      %p129 = scmp.eq.s32.totalorder %s26, 0
      %p130 = por %p128, %p129
      %s131 = ssub.s32 %s27, %s39
      %s132 = ssub.s32 %s28, %s35
      %s133 = sor.u32 %s131, %s132
      %p134 = scmp.eq.s32.totalorder %s133, 0
      %s136 = sadd.s32 %s135, 1
      %s137 = scalar_select %p134, %s135, %s136
      %p140 = pneg %p134
      %p141 = scmp.eq.s32.totalorder %s20, 1
      %p142 = por %p140, %p141
      %p143 = scmp.ne.s32.totalorder %s135, %s138
      %p144 = scmp.eq.s32.totalorder %s20, 0
      %p145 = por %p143, %p144
      %p146 = scmp.ne.s32.totalorder %s135, %s138
      %p147 = scmp.eq.s32.totalorder %s25, 1
      %p148 = por %p146, %p147
      %p149 = scmp.ne.s32.totalorder %s138, %s139
      %p150 = scmp.eq.s32.totalorder %s25, 0
      %p151 = por %p149, %p150
      %p152 = scmp.ne.s32.totalorder %s138, %s139
      %p153 = scmp.eq.s32.totalorder %s26, 1
      %p154 = por %p152, %p153
      %p156 = scmp.ne.s32.totalorder %s139, %s155
      %p157 = scmp.eq.s32.totalorder %s26, 0
      %p158 = por %p156, %p157
      %s159 = ssub.s32 %s27, %s39
      %s160 = ssub.s32 %s28, %s35
      %s161 = sor.u32 %s159, %s160
      %p162 = scmp.eq.s32.totalorder %s161, 0
      %s164 = sadd.s32 %s163, 1
      %s165 = scalar_select %p162, %s163, %s164
      %p168 = pneg %p162
      %p169 = scmp.eq.s32.totalorder %s20, 1
      %p170 = por %p168, %p169
      %p171 = scmp.ne.s32.totalorder %s163, %s166
      %p172 = scmp.eq.s32.totalorder %s20, 0
      %p173 = por %p171, %p172
      %p174 = scmp.ne.s32.totalorder %s163, %s166
      %p175 = scmp.eq.s32.totalorder %s25, 1
      %p176 = por %p174, %p175
      %p177 = scmp.ne.s32.totalorder %s166, %s167
      %p178 = scmp.eq.s32.totalorder %s25, 0
      %p179 = por %p177, %p178
      %p180 = scmp.ne.s32.totalorder %s166, %s167
      %p181 = scmp.eq.s32.totalorder %s26, 1
      %p182 = por %p180, %p181
      %p184 = scmp.ne.s32.totalorder %s167, %s183
      %p185 = scmp.eq.s32.totalorder %s26, 0
      %p186 = por %p184, %p185
      %s187 = ssub.s32 %s27, %s39
      %s188 = ssub.s32 %s28, %s35
      %s189 = sor.u32 %s187, %s188
      %p190 = scmp.eq.s32.totalorder %s189, 0
      %s192 = sadd.s32 %s191, 1
      %s193 = scalar_select %p190, %s191, %s192
      %p196 = pneg %p190
      %p197 = scmp.eq.s32.totalorder %s20, 1
      %p198 = por %p196, %p197
      %p199 = scmp.ne.s32.totalorder %s191, %s194
      %p200 = scmp.eq.s32.totalorder %s20, 0
      %p201 = por %p199, %p200
      %p202 = scmp.ne.s32.totalorder %s191, %s194
      %p203 = scmp.eq.s32.totalorder %s25, 1
      %p204 = por %p202, %p203
      %p205 = scmp.ne.s32.totalorder %s194, %s195
      %p206 = scmp.eq.s32.totalorder %s25, 0
      %p207 = por %p205, %p206
      %p208 = scmp.ne.s32.totalorder %s194, %s195
      %p209 = scmp.eq.s32.totalorder %s26, 1
      %p210 = por %p208, %p209
      %p212 = scmp.ne.s32.totalorder %s195, %s211
      %p213 = scmp.eq.s32.totalorder %s26, 0
      %p214 = por %p212, %p213
      %s215 = ssub.s32 %s27, %s39
      %s216 = ssub.s32 %s28, %s35
      %s217 = sor.u32 %s215, %s216
      %p218 = scmp.eq.s32.totalorder %s217, 0
      %s220 = sadd.s32 %s219, 1
      %s221 = scalar_select %p218, %s219, %s220
      %p224 = pneg %p218
      %p225 = scmp.eq.s32.totalorder %s20, 1
      %p226 = por %p224, %p225
      %p227 = scmp.ne.s32.totalorder %s219, %s222
      %p228 = scmp.eq.s32.totalorder %s20, 0
      %p229 = por %p227, %p228
      %p230 = scmp.ne.s32.totalorder %s219, %s222
      %p231 = scmp.eq.s32.totalorder %s25, 1
      %p232 = por %p230, %p231
      %p233 = scmp.ne.s32.totalorder %s222, %s223
      %p234 = scmp.eq.s32.totalorder %s25, 0
      %p235 = por %p233, %p234
      %p236 = scmp.ne.s32.totalorder %s222, %s223
      %p237 = scmp.eq.s32.totalorder %s26, 1
      %p238 = por %p236, %p237
      %p240 = scmp.ne.s32.totalorder %s223, %s239
      %p241 = scmp.eq.s32.totalorder %s26, 0
      %p242 = por %p240, %p241
      %p243 = scmp.le.s32.totalorder 1, %s20
      %p244 = scmp.lt.s32.totalorder %s20, 3
      %p245 = pnand %p243, %p244
      %p246 = pneg %p245
      // Predicated region
      $region9: #{tpu_custom_call.1} parent=5 // pred_check
        _
      $region10: #{tpu_custom_call.1} parent=5 // pred_check_branch
        %248 = sbr.rel (%p245) target = $region12
      $region11: #{tpu_custom_call.1} parent=5 // pred_region
        %s249 = ssub.s32 %s20, 1
        // Predicated region
        $region13: #{tpu_custom_call.1} parent=11 // pred_check
          %p250 = pneg %p81
        $region14: #{tpu_custom_call.1} parent=11 // pred_check_branch
          %252 = sbr.rel (%p250) target = $region16
        $region15: #{tpu_custom_call.1} parent=11 // pred_region
          _
        $region16: #{tpu_custom_call.1} parent=11 // pred_fallthru
          _
        // Predicated region
        $region17: #{tpu_custom_call.1} parent=11 // pred_check
          %p253 = pneg %p102
        $region18: #{tpu_custom_call.1} parent=11 // pred_check_branch
          %255 = sbr.rel (%p253) target = $region20
        $region19: #{tpu_custom_call.1} parent=11 // pred_region
          _
        $region20: #{tpu_custom_call.1} parent=11 // pred_fallthru
          _
        // Predicated region
        $region21: #{tpu_custom_call.1} parent=11 // pred_check
          %p256 = pneg %p123
        $region22: #{tpu_custom_call.1} parent=11 // pred_check_branch
          %258 = sbr.rel (%p256) target = $region24
        $region23: #{tpu_custom_call.1} parent=11 // pred_region
          _
        $region24: #{tpu_custom_call.1} parent=11 // pred_fallthru
          _
      $region12: #{tpu_custom_call.1} parent=5 // pred_fallthru
        _
      %p259 = scmp.lt.s32.totalorder %s20, 2
      // Predicated region
      $region25: #{tpu_custom_call.1} parent=5 // pred_check
        %p260 = pneg %p259
      $region26: #{tpu_custom_call.1} parent=5 // pred_check_branch
        %262 = sbr.rel (%p260) target = $region28
      $region27: #{tpu_custom_call.1} parent=5 // pred_region
        // Predicated region
        $region29: #{tpu_custom_call.1} parent=27 // pred_check
          %p263 = pneg %p54
        $region30: #{tpu_custom_call.1} parent=27 // pred_check_branch
          %265 = sbr.rel (%p263) target = $region32
        $region31: #{tpu_custom_call.1} parent=27 // pred_region
          %s266 = smul.u32 2, %s28
          %p267 = scmp.lt.s32.totalorder %s27, 1
          %s268 = scalar_select %p267, %s27, 1
          %p269 = scmp.lt.s32.totalorder %s266, 1
          %s270 = scalar_select %p269, %s266, 1
          %s271 = smul.addr %s268, 2
          %s272 = sadd.s32 %s270, %s271
          %s273 = smul.addr %s272, 4
          %s274 = scalar_lea.vmem %s0, %s273
          %s275 = smul.u32 2, %s28
        $region32: #{tpu_custom_call.1} parent=27 // pred_fallthru
          _
      $region28: #{tpu_custom_call.1} parent=5 // pred_fallthru
        _
      %p276 = scmp.le.s32.totalorder 1, %s20
      %p277 = scmp.lt.s32.totalorder %s20, 3
      %p278 = pnand %p276, %p277
      %p279 = pneg %p278
      // Predicated region
      $region33: #{tpu_custom_call.1} parent=5 // pred_check
        _
      $region34: #{tpu_custom_call.1} parent=5 // pred_check_branch
        %281 = sbr.rel (%p278) target = $region36
      $region35: #{tpu_custom_call.1} parent=5 // pred_region
        %s282 = ssub.s32 %s20, 1
        %s283 = smul.u32 2, %s30
        %p284 = scmp.lt.s32.totalorder %s29, 1
        %s285 = scalar_select %p284, %s29, 1
        %p286 = scmp.lt.s32.totalorder %s283, 1
        %s287 = scalar_select %p286, %s283, 1
        %s288 = smul.addr %s285, 2
        %s289 = sadd.s32 %s287, %s288
        %s290 = smul.addr %s289, 4
        %s291 = scalar_lea.vmem %s0, %s290
        %p292 = pneg %p60
        %p293 = pneg %p57
        %p294 = pneg %p81
        %p295 = pneg %p78
        %p296 = pneg %p102
        %p297 = pneg %p99
        %p298 = pneg %p123
        %p299 = pneg %p120
        %p300 = pneg %p151
        %p301 = pneg %p148
        %s302 = sand.u32 %s138, 1
        %s303 = scalar_lea.sflag [#allocation3], %s302
        %s304 = sand.u32 %s138, 1
        %s305 = smul.addr %s304, 8
        %s306 = scalar_lea.vmem [#allocation2], %s305
        %p307 = pneg %p179
        %p308 = pneg %p176
        %s309 = sand.u32 %s166, 1
        %s310 = scalar_lea.sflag [#allocation5], %s309
        %s311 = sand.u32 %s166, 1
        %s312 = smul.addr %s311, 2
        %s313 = scalar_lea.vmem [#allocation4], %s312
        %p314 = pneg %p207
        %p315 = pneg %p204
        %p316 = scmp.lt.s32.totalorder %s29, 1
        %s317 = scalar_select %p316, %s29, 1
        %p318 = scmp.lt.s32.totalorder %s30, 0
        %s319 = scalar_select %p318, %s30, 0
        %s320 = smul.addr %s319, 32
        %s321 = smul.addr %s317, 32
        %s322 = sadd.s32 %s320, %s321
        %s323 = smul.addr %s322, 8
        %s324 = scalar_lea.vmem %s6, %s323
        %p325 = pneg %p235
        %p326 = pneg %p232
        %p327 = scmp.lt.s32.totalorder %s29, 1
        %s328 = scalar_select %p327, %s29, 1
        %p329 = scmp.lt.s32.totalorder %s30, 0
        %s330 = scalar_select %p329, %s30, 0
        %s331 = sadd.s32 %s330, %s328
        %s332 = scalar_lea.vmem %s7, %s331
        %s333 = smul.u32 2, %s30
        %p334 = scmp.lt.s32.totalorder %s29, 1
        %s335 = scalar_select %p334, %s29, 1
        %p336 = scmp.lt.s32.totalorder %s333, 1
        %s337 = scalar_select %p336, %s333, 1
        %s338 = smul.addr %s335, 2
        %s339 = sadd.s32 %s337, %s338
        %s340 = smul.addr %s339, 4
        %s341 = scalar_lea.vmem %s0, %s340
        %s342 = smul.u32 2, %s30
        %s343 = smul.u32 2, %s30
        %p344 = scmp.lt.s32.totalorder %s29, 1
        %s345 = scalar_select %p344, %s29, 1
        %p346 = scmp.lt.s32.totalorder %s30, 0
        %s347 = scalar_select %p346, %s30, 0
        %s348 = smul.addr %s347, 32
        %s349 = smul.addr %s345, 32
        %s350 = sadd.s32 %s348, %s349
        %s351 = smul.addr %s350, 8
        %s352 = scalar_lea.vmem %s6, %s351
        %p353 = scmp.lt.s32.totalorder %s29, 1
        %s354 = scalar_select %p353, %s29, 1
        %p355 = scmp.lt.s32.totalorder %s30, 0
        %s356 = scalar_select %p355, %s30, 0
        %s357 = sadd.s32 %s356, %s354
        %s358 = scalar_lea.vmem %s7, %s357
        %v359 = vld [vmem:[%s341] sm:$0xff]
        %v360 = vld [vmem:[%s1] sm:$0xff]
        %v361 = vld [vmem:[%s1 + $0x8] sm:$0xff]
        %v362 = vld [vmem:[%s1 + $0x10] sm:$0xff]
        %v363 = vld [vmem:[%s1 + $0x18] sm:$0xff]
        %v364 = vld [vmem:[%s1 + $0x20] sm:$0xff]
        %v365 = vld [vmem:[%s1 + $0x28] sm:$0xff]
        %v366 = vld [vmem:[%s1 + $0x30] sm:$0xff]
        %v367 = vld [vmem:[%s1 + $0x38] sm:$0xff]
        %v368 = vld [vmem:[%s1 + $0x40] sm:$0xff]
        %v369 = vld [vmem:[%s1 + $0x48] sm:$0xff]
        %v370 = vld [vmem:[%s1 + $0x50] sm:$0xff]
        %v371 = vld [vmem:[%s1 + $0x58] sm:$0xff]
        %v372 = vld [vmem:[%s1 + $0x60] sm:$0xff]
        %v373 = vld [vmem:[%s1 + $0x68] sm:$0xff]
        %v374 = vld [vmem:[%s1 + $0x70] sm:$0xff]
        %v375 = vld [vmem:[%s1 + $0x78] sm:$0xff]
        %v376 = vld [vmem:[%s1 + $0x80] sm:$0xff]
        %v377 = vld [vmem:[%s1 + $0x88] sm:$0xff]
        %v378 = vld [vmem:[%s1 + $0x90] sm:$0xff]
        %v379 = vld [vmem:[%s1 + $0x98] sm:$0xff]
        %v380 = vld [vmem:[%s1 + $0xa0] sm:$0xff]
        %v381 = vld [vmem:[%s1 + $0xa8] sm:$0xff]
        %v382 = vld [vmem:[%s1 + $0xb0] sm:$0xff]
        %v383 = vld [vmem:[%s1 + $0xb8] sm:$0xff]
        %v384 = vld [vmem:[%s1 + $0xc0] sm:$0xff]
        %v385 = vld [vmem:[%s1 + $0xc8] sm:$0xff]
        %v386 = vld [vmem:[%s1 + $0xd0] sm:$0xff]
        %v387 = vld [vmem:[%s1 + $0xd8] sm:$0xff]
        %v388 = vld [vmem:[%s1 + $0xe0] sm:$0xff]
        %v389 = vld [vmem:[%s1 + $0xe8] sm:$0xff]
        %v390 = vld [vmem:[%s1 + $0xf0] sm:$0xff]
        %v391 = vld [vmem:[%s1 + $0xf8] sm:$0xff]
        %v392 = vld [vmem:[%s2] sm:$0xff]
        %v394 = vcombine.high %v359, %v359
        %vm395 = vcmask 31744
        %v397 = vsel %vm395, %v360, 0
        %v400 = vsel %vm395, %v361, 0
        %v403 = vsel %vm395, %v362, 0
        %v406 = vsel %vm395, %v363, 0
        %v409 = vsel %vm395, %v364, 0
        %v412 = vsel %vm395, %v365, 0
        %v415 = vsel %vm395, %v366, 0
        %v418 = vsel %vm395, %v367, 0
        %v421 = vsel %vm395, %v368, 0
        %v424 = vsel %vm395, %v369, 0
        %v427 = vsel %vm395, %v370, 0
        %v430 = vsel %vm395, %v371, 0
        %v433 = vsel %vm395, %v372, 0
        %v436 = vsel %vm395, %v373, 0
        %v439 = vsel %vm395, %v374, 0
        %v442 = vsel %vm395, %v375, 0
        %v445 = vsel %vm395, %v376, 0
        %v448 = vsel %vm395, %v377, 0
        %v451 = vsel %vm395, %v378, 0
        %v454 = vsel %vm395, %v379, 0
        %v457 = vsel %vm395, %v380, 0
        %v460 = vsel %vm395, %v381, 0
        %v463 = vsel %vm395, %v382, 0
        %v466 = vsel %vm395, %v383, 0
        %v469 = vsel %vm395, %v384, 0
        %v472 = vsel %vm395, %v385, 0
        %v475 = vsel %vm395, %v386, 0
        %v478 = vsel %vm395, %v387, 0
        %v481 = vsel %vm395, %v388, 0
        %v484 = vsel %vm395, %v389, 0
        %v487 = vsel %vm395, %v390, 0
        %v490 = vsel %vm395, %v391, 0
        %vm492 = vcmask 1043456
        %v493 = vsel %vm492, %v359, 0
        %v495 = vsel %vm492, %v394, 0
        %497 = vmatprep.subr.mxu0 0.0
        %498 = vmatpush1.msra.mxu0 0.0
        %499 = vmatprep.subr.mxu0 0.0
        %500 = vmatpush1.msra.mxu0 0.0
        %501 = vmatprep.subr.mxu0 0.0
        %502 = vmatpush1.msra.mxu0 0.0
        %503 = vmatprep.subr.mxu0 0.0
        %504 = vmatpush1.msra.mxu0 0.0
        %505 = vmatprep.subr.mxu0 0.0
        %506 = vmatpush1.msra.mxu0 0.0
        %507 = vmatprep.subr.mxu0 0.0
        %508 = vmatpush1.msra.mxu0 0.0
        %509 = vmatprep.subr.mxu0 0.0
        %510 = vmatpush1.msra.mxu0 0.0
        %511 = vmatprep.subr.mxu0 0.0
        %512 = vmatpush1.msra.mxu0 0.0
        %513 = vmatprep.subr.mxu0 0.0
        %514 = vmatpush1.msra.mxu0 0.0
        %515 = vmatprep.subr.mxu0 0.0
        %516 = vmatpush1.msra.mxu0 0.0
        %517 = vmatprep.subr.mxu0 0.0
        %518 = vmatpush1.msra.mxu0 0.0
        %519 = vmatprep.subr.mxu0 0.0
        %520 = vmatpush1.msra.mxu0 0.0
        %521 = vmatprep.subr.mxu0 0.0
        %522 = vmatpush1.msra.mxu0 0.0
        %523 = vmatprep.subr.mxu0 0.0
        %524 = vmatpush1.msra.mxu0 0.0
        %525 = vmatprep.subr.mxu0 0.0
        %526 = vmatpush1.msra.mxu0 0.0
        %v527 = vand.u32 %v495, 4294901760
        %528 = vmatprep.subr.mxu0 %v527
        %v529 = vand.u32 %v493, 4294901760
        %530 = vmatpush1.msra.mxu0 %v529
        %531 = vmatprep.subr.mxu0 0.0
        %532 = vmatpush2.msra.mxu0 0.0
        %533 = vmatprep.subr.mxu0 0.0
        %534 = vmatpush2.msra.mxu0 0.0
        %535 = vmatprep.subr.mxu0 0.0
        %536 = vmatpush2.msra.mxu0 0.0
        %537 = vmatprep.subr.mxu0 0.0
        %538 = vmatpush2.msra.mxu0 0.0
        %539 = vmatprep.subr.mxu0 0.0
        %540 = vmatpush2.msra.mxu0 0.0
        %541 = vmatprep.subr.mxu0 0.0
        %542 = vmatpush2.msra.mxu0 0.0
        %543 = vmatprep.subr.mxu0 0.0
        %544 = vmatpush2.msra.mxu0 0.0
        %545 = vmatprep.subr.mxu0 0.0
        %546 = vmatpush2.msra.mxu0 0.0
        %547 = vmatprep.subr.mxu0 0.0
        %548 = vmatpush2.msra.mxu0 0.0
        %549 = vmatprep.subr.mxu0 0.0
        %550 = vmatpush2.msra.mxu0 0.0
        %551 = vmatprep.subr.mxu0 0.0
        %552 = vmatpush2.msra.mxu0 0.0
        %553 = vmatprep.subr.mxu0 0.0
        %554 = vmatpush2.msra.mxu0 0.0
        %555 = vmatprep.subr.mxu0 0.0
        %556 = vmatpush2.msra.mxu0 0.0
        %557 = vmatprep.subr.mxu0 0.0
        %558 = vmatpush2.msra.mxu0 0.0
        %559 = vmatprep.subr.mxu0 0.0
        %560 = vmatpush2.msra.mxu0 0.0
        %561 = vmatprep.subr.mxu0 0.0
        %562 = vmatpush2.msra.mxu0 0.0
        %563 = vmatprep.mubr.f32.mxu0 0.0
        %v564 = vand.u32 %v397, 4294901760
        %v565 = vsub.f32 %v397, %v564
        %v566 = vand.u32 %v565, 4294901760
        %v567 = vsub.f32 %v565, %v566
        %v568 = vand.u32 %v567, 4294901760
        %569 = vmatmul.mubr.f32.gmra.mxu0 %v568
        %v570 = vpop.f32.mrf.mxu0
        %v571 = vadd.f32 0.0, %v570
        %v572 = vpop.f32.mrf.mxu0
        %v573 = vadd.f32 0.0, %v572
        %574 = vmatprep.mubr.f32.mxu0 0.0
        %v575 = vand.u32 %v400, 4294901760
        %v576 = vsub.f32 %v400, %v575
        %v577 = vand.u32 %v576, 4294901760
        %v578 = vsub.f32 %v576, %v577
        %v579 = vand.u32 %v578, 4294901760
        %580 = vmatmul.mubr.f32.gmra.mxu0 %v579
        %v581 = vpop.f32.mrf.mxu0
        %v582 = vadd.f32 0.0, %v581
        %v583 = vpop.f32.mrf.mxu0
        %v584 = vadd.f32 0.0, %v583
        %585 = vmatprep.mubr.f32.mxu0 0.0
        %v586 = vand.u32 %v403, 4294901760
        %v587 = vsub.f32 %v403, %v586
        %v588 = vand.u32 %v587, 4294901760
        %v589 = vsub.f32 %v587, %v588
        %v590 = vand.u32 %v589, 4294901760
        %591 = vmatmul.mubr.f32.gmra.mxu0 %v590
        %v592 = vpop.f32.mrf.mxu0
        %v593 = vadd.f32 0.0, %v592
        %v594 = vpop.f32.mrf.mxu0
        %v595 = vadd.f32 0.0, %v594
        %596 = vmatprep.mubr.f32.mxu0 0.0
        %v597 = vand.u32 %v406, 4294901760
        %v598 = vsub.f32 %v406, %v597
        %v599 = vand.u32 %v598, 4294901760
        %v600 = vsub.f32 %v598, %v599
        %v601 = vand.u32 %v600, 4294901760
        %602 = vmatmul.mubr.f32.gmra.mxu0 %v601
        %v603 = vpop.f32.mrf.mxu0
        %v604 = vadd.f32 0.0, %v603
        %v605 = vpop.f32.mrf.mxu0
        %v606 = vadd.f32 0.0, %v605
        %607 = vmatprep.mubr.f32.mxu0 0.0
        %v608 = vand.u32 %v409, 4294901760
        %v609 = vsub.f32 %v409, %v608
        %v610 = vand.u32 %v609, 4294901760
        %v611 = vsub.f32 %v609, %v610
        %v612 = vand.u32 %v611, 4294901760
        %613 = vmatmul.mubr.f32.gmra.mxu0 %v612
        %v614 = vpop.f32.mrf.mxu0
        %v615 = vadd.f32 0.0, %v614
        %v616 = vpop.f32.mrf.mxu0
        %v617 = vadd.f32 0.0, %v616
        %618 = vmatprep.mubr.f32.mxu0 0.0
        %v619 = vand.u32 %v412, 4294901760
        %v620 = vsub.f32 %v412, %v619
        %v621 = vand.u32 %v620, 4294901760
        %v622 = vsub.f32 %v620, %v621
        %v623 = vand.u32 %v622, 4294901760
        %624 = vmatmul.mubr.f32.gmra.mxu0 %v623
        %v625 = vpop.f32.mrf.mxu0
        %v626 = vadd.f32 0.0, %v625
        %v627 = vpop.f32.mrf.mxu0
        %v628 = vadd.f32 0.0, %v627
        %629 = vmatprep.mubr.f32.mxu0 0.0
        %v630 = vand.u32 %v415, 4294901760
        %v631 = vsub.f32 %v415, %v630
        %v632 = vand.u32 %v631, 4294901760
        %v633 = vsub.f32 %v631, %v632
        %v634 = vand.u32 %v633, 4294901760
        %635 = vmatmul.mubr.f32.gmra.mxu0 %v634
        %v636 = vpop.f32.mrf.mxu0
        %v637 = vadd.f32 0.0, %v636
        %v638 = vpop.f32.mrf.mxu0
        %v639 = vadd.f32 0.0, %v638
        %640 = vmatprep.mubr.f32.mxu0 0.0
        %v641 = vand.u32 %v418, 4294901760
        %v642 = vsub.f32 %v418, %v641
        %v643 = vand.u32 %v642, 4294901760
        %v644 = vsub.f32 %v642, %v643
        %v645 = vand.u32 %v644, 4294901760
        %646 = vmatmul.mubr.f32.gmra.mxu0 %v645
        %v647 = vpop.f32.mrf.mxu0
        %v648 = vadd.f32 0.0, %v647
        %v649 = vpop.f32.mrf.mxu0
        %v650 = vadd.f32 0.0, %v649
        %651 = vmatprep.mubr.f32.mxu0 0.0
        %v652 = vand.u32 %v421, 4294901760
        %v653 = vsub.f32 %v421, %v652
        %v654 = vand.u32 %v653, 4294901760
        %v655 = vsub.f32 %v653, %v654
        %v656 = vand.u32 %v655, 4294901760
        %657 = vmatmul.mubr.f32.gmra.mxu0 %v656
        %v658 = vpop.f32.mrf.mxu0
        %v659 = vadd.f32 0.0, %v658
        %v660 = vpop.f32.mrf.mxu0
        %v661 = vadd.f32 0.0, %v660
        %662 = vmatprep.mubr.f32.mxu0 0.0
        %v663 = vand.u32 %v424, 4294901760
        %v664 = vsub.f32 %v424, %v663
        %v665 = vand.u32 %v664, 4294901760
        %v666 = vsub.f32 %v664, %v665
        %v667 = vand.u32 %v666, 4294901760
        %668 = vmatmul.mubr.f32.gmra.mxu0 %v667
        %v669 = vpop.f32.mrf.mxu0
        %v670 = vadd.f32 0.0, %v669
        %v671 = vpop.f32.mrf.mxu0
        %v672 = vadd.f32 0.0, %v671
        %673 = vmatprep.mubr.f32.mxu0 0.0
        %v674 = vand.u32 %v427, 4294901760
        %v675 = vsub.f32 %v427, %v674
        %v676 = vand.u32 %v675, 4294901760
        %v677 = vsub.f32 %v675, %v676
        %v678 = vand.u32 %v677, 4294901760
        %679 = vmatmul.mubr.f32.gmra.mxu0 %v678
        %v680 = vpop.f32.mrf.mxu0
        %v681 = vadd.f32 0.0, %v680
        %v682 = vpop.f32.mrf.mxu0
        %v683 = vadd.f32 0.0, %v682
        %684 = vmatprep.mubr.f32.mxu0 0.0
        %v685 = vand.u32 %v430, 4294901760
        %v686 = vsub.f32 %v430, %v685
        %v687 = vand.u32 %v686, 4294901760
        %v688 = vsub.f32 %v686, %v687
        %v689 = vand.u32 %v688, 4294901760
        %690 = vmatmul.mubr.f32.gmra.mxu0 %v689
        %v691 = vpop.f32.mrf.mxu0
        %v692 = vadd.f32 0.0, %v691
        %v693 = vpop.f32.mrf.mxu0
        %v694 = vadd.f32 0.0, %v693
        %695 = vmatprep.mubr.f32.mxu0 0.0
        %v696 = vand.u32 %v433, 4294901760
        %v697 = vsub.f32 %v433, %v696
        %v698 = vand.u32 %v697, 4294901760
        %v699 = vsub.f32 %v697, %v698
        %v700 = vand.u32 %v699, 4294901760
        %701 = vmatmul.mubr.f32.gmra.mxu0 %v700
        %v702 = vpop.f32.mrf.mxu0
        %v703 = vadd.f32 0.0, %v702
        %v704 = vpop.f32.mrf.mxu0
        %v705 = vadd.f32 0.0, %v704
        %706 = vmatprep.mubr.f32.mxu0 0.0
        %v707 = vand.u32 %v436, 4294901760
        %v708 = vsub.f32 %v436, %v707
        %v709 = vand.u32 %v708, 4294901760
        %v710 = vsub.f32 %v708, %v709
        %v711 = vand.u32 %v710, 4294901760
        %712 = vmatmul.mubr.f32.gmra.mxu0 %v711
        %v713 = vpop.f32.mrf.mxu0
        %v714 = vadd.f32 0.0, %v713
        %v715 = vpop.f32.mrf.mxu0
        %v716 = vadd.f32 0.0, %v715
        %717 = vmatprep.mubr.f32.mxu0 0.0
        %v718 = vand.u32 %v439, 4294901760
        %v719 = vsub.f32 %v439, %v718
        %v720 = vand.u32 %v719, 4294901760
        %v721 = vsub.f32 %v719, %v720
        %v722 = vand.u32 %v721, 4294901760
        %723 = vmatmul.mubr.f32.gmra.mxu0 %v722
        %v724 = vpop.f32.mrf.mxu0
        %v725 = vadd.f32 0.0, %v724
        %v726 = vpop.f32.mrf.mxu0
        %v727 = vadd.f32 0.0, %v726
        %728 = vmatprep.mubr.f32.mxu0 0.0
        %v729 = vand.u32 %v442, 4294901760
        %v730 = vsub.f32 %v442, %v729
        %v731 = vand.u32 %v730, 4294901760
        %v732 = vsub.f32 %v730, %v731
        %v733 = vand.u32 %v732, 4294901760
        %734 = vmatmul.mubr.f32.gmra.mxu0 %v733
        %v735 = vpop.f32.mrf.mxu0
        %v736 = vadd.f32 0.0, %v735
        %v737 = vpop.f32.mrf.mxu0
        %v738 = vadd.f32 0.0, %v737
        %739 = vmatprep.mubr.f32.mxu0 0.0
        %v740 = vand.u32 %v445, 4294901760
        %v741 = vsub.f32 %v445, %v740
        %v742 = vand.u32 %v741, 4294901760
        %v743 = vsub.f32 %v741, %v742
        %v744 = vand.u32 %v743, 4294901760
        %745 = vmatmul.mubr.f32.gmra.mxu0 %v744
        %v746 = vpop.f32.mrf.mxu0
        %v747 = vadd.f32 0.0, %v746
        %v748 = vpop.f32.mrf.mxu0
        %v749 = vadd.f32 0.0, %v748
        %750 = vmatprep.mubr.f32.mxu0 0.0
        %v751 = vand.u32 %v448, 4294901760
        %v752 = vsub.f32 %v448, %v751
        %v753 = vand.u32 %v752, 4294901760
        %v754 = vsub.f32 %v752, %v753
        %v755 = vand.u32 %v754, 4294901760
        %756 = vmatmul.mubr.f32.gmra.mxu0 %v755
        %v757 = vpop.f32.mrf.mxu0
        %v758 = vadd.f32 0.0, %v757
        %v759 = vpop.f32.mrf.mxu0
        %v760 = vadd.f32 0.0, %v759
        %761 = vmatprep.mubr.f32.mxu0 0.0
        %v762 = vand.u32 %v451, 4294901760
        %v763 = vsub.f32 %v451, %v762
        %v764 = vand.u32 %v763, 4294901760
        %v765 = vsub.f32 %v763, %v764
        %v766 = vand.u32 %v765, 4294901760
        %767 = vmatmul.mubr.f32.gmra.mxu0 %v766
        %v768 = vpop.f32.mrf.mxu0
        %v769 = vadd.f32 0.0, %v768
        %v770 = vpop.f32.mrf.mxu0
        %v771 = vadd.f32 0.0, %v770
        %772 = vmatprep.mubr.f32.mxu0 0.0
        %v773 = vand.u32 %v454, 4294901760
        %v774 = vsub.f32 %v454, %v773
        %v775 = vand.u32 %v774, 4294901760
        %v776 = vsub.f32 %v774, %v775
        %v777 = vand.u32 %v776, 4294901760
        %778 = vmatmul.mubr.f32.gmra.mxu0 %v777
        %v779 = vpop.f32.mrf.mxu0
        %v780 = vadd.f32 0.0, %v779
        %v781 = vpop.f32.mrf.mxu0
        %v782 = vadd.f32 0.0, %v781
        %783 = vmatprep.mubr.f32.mxu0 0.0
        %v784 = vand.u32 %v457, 4294901760
        %v785 = vsub.f32 %v457, %v784
        %v786 = vand.u32 %v785, 4294901760
        %v787 = vsub.f32 %v785, %v786
        %v788 = vand.u32 %v787, 4294901760
        %789 = vmatmul.mubr.f32.gmra.mxu0 %v788
        %v790 = vpop.f32.mrf.mxu0
        %v791 = vadd.f32 0.0, %v790
        %v792 = vpop.f32.mrf.mxu0
        %v793 = vadd.f32 0.0, %v792
        %794 = vmatprep.mubr.f32.mxu0 0.0
        %v795 = vand.u32 %v460, 4294901760
        %v796 = vsub.f32 %v460, %v795
        %v797 = vand.u32 %v796, 4294901760
        %v798 = vsub.f32 %v796, %v797
        %v799 = vand.u32 %v798, 4294901760
        %800 = vmatmul.mubr.f32.gmra.mxu0 %v799
        %v801 = vpop.f32.mrf.mxu0
        %v802 = vadd.f32 0.0, %v801
        %v803 = vpop.f32.mrf.mxu0
        %v804 = vadd.f32 0.0, %v803
        %805 = vmatprep.mubr.f32.mxu0 0.0
        %v806 = vand.u32 %v463, 4294901760
        %v807 = vsub.f32 %v463, %v806
        %v808 = vand.u32 %v807, 4294901760
        %v809 = vsub.f32 %v807, %v808
        %v810 = vand.u32 %v809, 4294901760
        %811 = vmatmul.mubr.f32.gmra.mxu0 %v810
        %v812 = vpop.f32.mrf.mxu0
        %v813 = vadd.f32 0.0, %v812
        %v814 = vpop.f32.mrf.mxu0
        %v815 = vadd.f32 0.0, %v814
        %816 = vmatprep.mubr.f32.mxu0 0.0
        %v817 = vand.u32 %v466, 4294901760
        %v818 = vsub.f32 %v466, %v817
        %v819 = vand.u32 %v818, 4294901760
        %v820 = vsub.f32 %v818, %v819
        %v821 = vand.u32 %v820, 4294901760
        %822 = vmatmul.mubr.f32.gmra.mxu0 %v821
        %v823 = vpop.f32.mrf.mxu0
        %v824 = vadd.f32 0.0, %v823
        %v825 = vpop.f32.mrf.mxu0
        %v826 = vadd.f32 0.0, %v825
        %827 = vmatprep.mubr.f32.mxu0 0.0
        %v828 = vand.u32 %v469, 4294901760
        %v829 = vsub.f32 %v469, %v828
        %v830 = vand.u32 %v829, 4294901760
        %v831 = vsub.f32 %v829, %v830
        %v832 = vand.u32 %v831, 4294901760
        %833 = vmatmul.mubr.f32.gmra.mxu0 %v832
        %v834 = vpop.f32.mrf.mxu0
        %v835 = vadd.f32 0.0, %v834
        %v836 = vpop.f32.mrf.mxu0
        %v837 = vadd.f32 0.0, %v836
        %838 = vmatprep.mubr.f32.mxu0 0.0
        %v839 = vand.u32 %v472, 4294901760
        %v840 = vsub.f32 %v472, %v839
        %v841 = vand.u32 %v840, 4294901760
        %v842 = vsub.f32 %v840, %v841
        %v843 = vand.u32 %v842, 4294901760
        %844 = vmatmul.mubr.f32.gmra.mxu0 %v843
        %v845 = vpop.f32.mrf.mxu0
        %v846 = vadd.f32 0.0, %v845
        %v847 = vpop.f32.mrf.mxu0
        %v848 = vadd.f32 0.0, %v847
        %849 = vmatprep.mubr.f32.mxu0 0.0
        %v850 = vand.u32 %v475, 4294901760
        %v851 = vsub.f32 %v475, %v850
        %v852 = vand.u32 %v851, 4294901760
        %v853 = vsub.f32 %v851, %v852
        %v854 = vand.u32 %v853, 4294901760
        %855 = vmatmul.mubr.f32.gmra.mxu0 %v854
        %v856 = vpop.f32.mrf.mxu0
        %v857 = vadd.f32 0.0, %v856
        %v858 = vpop.f32.mrf.mxu0
        %v859 = vadd.f32 0.0, %v858
        %860 = vmatprep.mubr.f32.mxu0 0.0
        %v861 = vand.u32 %v478, 4294901760
        %v862 = vsub.f32 %v478, %v861
        %v863 = vand.u32 %v862, 4294901760
        %v864 = vsub.f32 %v862, %v863
        %v865 = vand.u32 %v864, 4294901760
        %866 = vmatmul.mubr.f32.gmra.mxu0 %v865
        %v867 = vpop.f32.mrf.mxu0
        %v868 = vadd.f32 0.0, %v867
        %v869 = vpop.f32.mrf.mxu0
        %v870 = vadd.f32 0.0, %v869
        %871 = vmatprep.mubr.f32.mxu0 0.0
        %v872 = vand.u32 %v481, 4294901760
        %v873 = vsub.f32 %v481, %v872
        %v874 = vand.u32 %v873, 4294901760
        %v875 = vsub.f32 %v873, %v874
        %v876 = vand.u32 %v875, 4294901760
        %877 = vmatmul.mubr.f32.gmra.mxu0 %v876
        %v878 = vpop.f32.mrf.mxu0
        %v879 = vadd.f32 0.0, %v878
        %v880 = vpop.f32.mrf.mxu0
        %v881 = vadd.f32 0.0, %v880
        %882 = vmatprep.mubr.f32.mxu0 0.0
        %v883 = vand.u32 %v484, 4294901760
        %v884 = vsub.f32 %v484, %v883
        %v885 = vand.u32 %v884, 4294901760
        %v886 = vsub.f32 %v884, %v885
        %v887 = vand.u32 %v886, 4294901760
        %888 = vmatmul.mubr.f32.gmra.mxu0 %v887
        %v889 = vpop.f32.mrf.mxu0
        %v890 = vadd.f32 0.0, %v889
        %v891 = vpop.f32.mrf.mxu0
        %v892 = vadd.f32 0.0, %v891
        %893 = vmatprep.mubr.f32.mxu0 0.0
        %v894 = vand.u32 %v487, 4294901760
        %v895 = vsub.f32 %v487, %v894
        %v896 = vand.u32 %v895, 4294901760
        %v897 = vsub.f32 %v895, %v896
        %v898 = vand.u32 %v897, 4294901760
        %899 = vmatmul.mubr.f32.gmra.mxu0 %v898
        %v900 = vpop.f32.mrf.mxu0
        %v901 = vadd.f32 0.0, %v900
        %v902 = vpop.f32.mrf.mxu0
        %v903 = vadd.f32 0.0, %v902
        %904 = vmatprep.mubr.f32.mxu0 0.0
        %v905 = vand.u32 %v490, 4294901760
        %v906 = vsub.f32 %v490, %v905
        %v907 = vand.u32 %v906, 4294901760
        %v908 = vsub.f32 %v906, %v907
        %v909 = vand.u32 %v908, 4294901760
        %910 = vmatmul.mubr.f32.gmra.mxu0 %v909
        %v911 = vpop.f32.mrf.mxu0
        %v912 = vadd.f32 0.0, %v911
        %v913 = vpop.f32.mrf.mxu0
        %v914 = vadd.f32 0.0, %v913
        %915 = vdwg.mxu0
        %916 = vmatprep.subr.mxu0 0.0
        %917 = vmatpush1.msra.mxu0 0.0
        %918 = vmatprep.subr.mxu0 0.0
        %919 = vmatpush1.msra.mxu0 0.0
        %920 = vmatprep.subr.mxu0 0.0
        %921 = vmatpush1.msra.mxu0 0.0
        %922 = vmatprep.subr.mxu0 0.0
        %923 = vmatpush1.msra.mxu0 0.0
        %924 = vmatprep.subr.mxu0 0.0
        %925 = vmatpush1.msra.mxu0 0.0
        %926 = vmatprep.subr.mxu0 0.0
        %927 = vmatpush1.msra.mxu0 0.0
        %928 = vmatprep.subr.mxu0 0.0
        %929 = vmatpush1.msra.mxu0 0.0
        %930 = vmatprep.subr.mxu0 0.0
        %931 = vmatpush1.msra.mxu0 0.0
        %932 = vmatprep.subr.mxu0 0.0
        %933 = vmatpush1.msra.mxu0 0.0
        %934 = vmatprep.subr.mxu0 0.0
        %935 = vmatpush1.msra.mxu0 0.0
        %936 = vmatprep.subr.mxu0 0.0
        %937 = vmatpush1.msra.mxu0 0.0
        %938 = vmatprep.subr.mxu0 0.0
        %939 = vmatpush1.msra.mxu0 0.0
        %940 = vmatprep.subr.mxu0 0.0
        %941 = vmatpush1.msra.mxu0 0.0
        %942 = vmatprep.subr.mxu0 0.0
        %943 = vmatpush1.msra.mxu0 0.0
        %944 = vmatprep.subr.mxu0 0.0
        %945 = vmatpush1.msra.mxu0 0.0
        %v946 = vand.u32 %v495, 4294901760
        %v947 = vsub.f32 %v495, %v946
        %v948 = vand.u32 %v947, 4294901760
        %v949 = vsub.f32 %v947, %v948
        %v950 = vand.u32 %v949, 4294901760
        %951 = vmatprep.subr.mxu0 %v950
        %v952 = vand.u32 %v493, 4294901760
        %v953 = vsub.f32 %v493, %v952
        %v954 = vand.u32 %v953, 4294901760
        %v955 = vsub.f32 %v953, %v954
        %v956 = vand.u32 %v955, 4294901760
        %957 = vmatpush1.msra.mxu0 %v956
        %958 = vmatprep.subr.mxu0 0.0
        %959 = vmatpush2.msra.mxu0 0.0
        %960 = vmatprep.subr.mxu0 0.0
        %961 = vmatpush2.msra.mxu0 0.0
        %962 = vmatprep.subr.mxu0 0.0
        %963 = vmatpush2.msra.mxu0 0.0
        %964 = vmatprep.subr.mxu0 0.0
        %965 = vmatpush2.msra.mxu0 0.0
        %966 = vmatprep.subr.mxu0 0.0
        %967 = vmatpush2.msra.mxu0 0.0
        %968 = vmatprep.subr.mxu0 0.0
        %969 = vmatpush2.msra.mxu0 0.0
        %970 = vmatprep.subr.mxu0 0.0
        %971 = vmatpush2.msra.mxu0 0.0
        %972 = vmatprep.subr.mxu0 0.0
        %973 = vmatpush2.msra.mxu0 0.0
        %974 = vmatprep.subr.mxu0 0.0
        %975 = vmatpush2.msra.mxu0 0.0
        %976 = vmatprep.subr.mxu0 0.0
        %977 = vmatpush2.msra.mxu0 0.0
        %978 = vmatprep.subr.mxu0 0.0
        %979 = vmatpush2.msra.mxu0 0.0
        %980 = vmatprep.subr.mxu0 0.0
        %981 = vmatpush2.msra.mxu0 0.0
        %982 = vmatprep.subr.mxu0 0.0
        %983 = vmatpush2.msra.mxu0 0.0
        %984 = vmatprep.subr.mxu0 0.0
        %985 = vmatpush2.msra.mxu0 0.0
        %986 = vmatprep.subr.mxu0 0.0
        %987 = vmatpush2.msra.mxu0 0.0
        %988 = vmatprep.subr.mxu0 0.0
        %989 = vmatpush2.msra.mxu0 0.0
        %990 = vmatprep.mubr.f32.mxu0 0.0
        %v991 = vand.u32 %v397, 4294901760
        %992 = vmatmul.mubr.f32.gmra.mxu0 %v991
        %v993 = vpop.f32.mrf.mxu0
        %v994 = vadd.f32 %v571, %v993
        %v995 = vpop.f32.mrf.mxu0
        %v996 = vadd.f32 %v573, %v995
        %997 = vmatprep.mubr.f32.mxu0 0.0
        %v998 = vand.u32 %v400, 4294901760
        %999 = vmatmul.mubr.f32.gmra.mxu0 %v998
        %v1000 = vpop.f32.mrf.mxu0
        %v1001 = vadd.f32 %v582, %v1000
        %v1002 = vpop.f32.mrf.mxu0
        %v1003 = vadd.f32 %v584, %v1002
        %1004 = vmatprep.mubr.f32.mxu0 0.0
        %v1005 = vand.u32 %v403, 4294901760
        %1006 = vmatmul.mubr.f32.gmra.mxu0 %v1005
        %v1007 = vpop.f32.mrf.mxu0
        %v1008 = vadd.f32 %v593, %v1007
        %v1009 = vpop.f32.mrf.mxu0
        %v1010 = vadd.f32 %v595, %v1009
        %1011 = vmatprep.mubr.f32.mxu0 0.0
        %v1012 = vand.u32 %v406, 4294901760
        %1013 = vmatmul.mubr.f32.gmra.mxu0 %v1012
        %v1014 = vpop.f32.mrf.mxu0
        %v1015 = vadd.f32 %v604, %v1014
        %v1016 = vpop.f32.mrf.mxu0
        %v1017 = vadd.f32 %v606, %v1016
        %1018 = vmatprep.mubr.f32.mxu0 0.0
        %v1019 = vand.u32 %v409, 4294901760
        %1020 = vmatmul.mubr.f32.gmra.mxu0 %v1019
        %v1021 = vpop.f32.mrf.mxu0
        %v1022 = vadd.f32 %v615, %v1021
        %v1023 = vpop.f32.mrf.mxu0
        %v1024 = vadd.f32 %v617, %v1023
        %1025 = vmatprep.mubr.f32.mxu0 0.0
        %v1026 = vand.u32 %v412, 4294901760
        %1027 = vmatmul.mubr.f32.gmra.mxu0 %v1026
        %v1028 = vpop.f32.mrf.mxu0
        %v1029 = vadd.f32 %v626, %v1028
        %v1030 = vpop.f32.mrf.mxu0
        %v1031 = vadd.f32 %v628, %v1030
        %1032 = vmatprep.mubr.f32.mxu0 0.0
        %v1033 = vand.u32 %v415, 4294901760
        %1034 = vmatmul.mubr.f32.gmra.mxu0 %v1033
        %v1035 = vpop.f32.mrf.mxu0
        %v1036 = vadd.f32 %v637, %v1035
        %v1037 = vpop.f32.mrf.mxu0
        %v1038 = vadd.f32 %v639, %v1037
        %1039 = vmatprep.mubr.f32.mxu0 0.0
        %v1040 = vand.u32 %v418, 4294901760
        %1041 = vmatmul.mubr.f32.gmra.mxu0 %v1040
        %v1042 = vpop.f32.mrf.mxu0
        %v1043 = vadd.f32 %v648, %v1042
        %v1044 = vpop.f32.mrf.mxu0
        %v1045 = vadd.f32 %v650, %v1044
        %1046 = vmatprep.mubr.f32.mxu0 0.0
        %v1047 = vand.u32 %v421, 4294901760
        %1048 = vmatmul.mubr.f32.gmra.mxu0 %v1047
        %v1049 = vpop.f32.mrf.mxu0
        %v1050 = vadd.f32 %v659, %v1049
        %v1051 = vpop.f32.mrf.mxu0
        %v1052 = vadd.f32 %v661, %v1051
        %1053 = vmatprep.mubr.f32.mxu0 0.0
        %v1054 = vand.u32 %v424, 4294901760
        %1055 = vmatmul.mubr.f32.gmra.mxu0 %v1054
        %v1056 = vpop.f32.mrf.mxu0
        %v1057 = vadd.f32 %v670, %v1056
        %v1058 = vpop.f32.mrf.mxu0
        %v1059 = vadd.f32 %v672, %v1058
        %1060 = vmatprep.mubr.f32.mxu0 0.0
        %v1061 = vand.u32 %v427, 4294901760
        %1062 = vmatmul.mubr.f32.gmra.mxu0 %v1061
        %v1063 = vpop.f32.mrf.mxu0
        %v1064 = vadd.f32 %v681, %v1063
        %v1065 = vpop.f32.mrf.mxu0
        %v1066 = vadd.f32 %v683, %v1065
        %1067 = vmatprep.mubr.f32.mxu0 0.0
        %v1068 = vand.u32 %v430, 4294901760
        %1069 = vmatmul.mubr.f32.gmra.mxu0 %v1068
        %v1070 = vpop.f32.mrf.mxu0
        %v1071 = vadd.f32 %v692, %v1070
        %v1072 = vpop.f32.mrf.mxu0
        %v1073 = vadd.f32 %v694, %v1072
        %1074 = vmatprep.mubr.f32.mxu0 0.0
        %v1075 = vand.u32 %v433, 4294901760
        %1076 = vmatmul.mubr.f32.gmra.mxu0 %v1075
        %v1077 = vpop.f32.mrf.mxu0
        %v1078 = vadd.f32 %v703, %v1077
        %v1079 = vpop.f32.mrf.mxu0
        %v1080 = vadd.f32 %v705, %v1079
        %1081 = vmatprep.mubr.f32.mxu0 0.0
        %v1082 = vand.u32 %v436, 4294901760
        %1083 = vmatmul.mubr.f32.gmra.mxu0 %v1082
        %v1084 = vpop.f32.mrf.mxu0
        %v1085 = vadd.f32 %v714, %v1084
        %v1086 = vpop.f32.mrf.mxu0
        %v1087 = vadd.f32 %v716, %v1086
        %1088 = vmatprep.mubr.f32.mxu0 0.0
        %v1089 = vand.u32 %v439, 4294901760
        %1090 = vmatmul.mubr.f32.gmra.mxu0 %v1089
        %v1091 = vpop.f32.mrf.mxu0
        %v1092 = vadd.f32 %v725, %v1091
        %v1093 = vpop.f32.mrf.mxu0
        %v1094 = vadd.f32 %v727, %v1093
        %1095 = vmatprep.mubr.f32.mxu0 0.0
        %v1096 = vand.u32 %v442, 4294901760
        %1097 = vmatmul.mubr.f32.gmra.mxu0 %v1096
        %v1098 = vpop.f32.mrf.mxu0
        %v1099 = vadd.f32 %v736, %v1098
        %v1100 = vpop.f32.mrf.mxu0
        %v1101 = vadd.f32 %v738, %v1100
        %1102 = vmatprep.mubr.f32.mxu0 0.0
        %v1103 = vand.u32 %v445, 4294901760
        %1104 = vmatmul.mubr.f32.gmra.mxu0 %v1103
        %v1105 = vpop.f32.mrf.mxu0
        %v1106 = vadd.f32 %v747, %v1105
        %v1107 = vpop.f32.mrf.mxu0
        %v1108 = vadd.f32 %v749, %v1107
        %1109 = vmatprep.mubr.f32.mxu0 0.0
        %v1110 = vand.u32 %v448, 4294901760
        %1111 = vmatmul.mubr.f32.gmra.mxu0 %v1110
        %v1112 = vpop.f32.mrf.mxu0
        %v1113 = vadd.f32 %v758, %v1112
        %v1114 = vpop.f32.mrf.mxu0
        %v1115 = vadd.f32 %v760, %v1114
        %1116 = vmatprep.mubr.f32.mxu0 0.0
        %v1117 = vand.u32 %v451, 4294901760
        %1118 = vmatmul.mubr.f32.gmra.mxu0 %v1117
        %v1119 = vpop.f32.mrf.mxu0
        %v1120 = vadd.f32 %v769, %v1119
        %v1121 = vpop.f32.mrf.mxu0
        %v1122 = vadd.f32 %v771, %v1121
        %1123 = vmatprep.mubr.f32.mxu0 0.0
        %v1124 = vand.u32 %v454, 4294901760
        %1125 = vmatmul.mubr.f32.gmra.mxu0 %v1124
        %v1126 = vpop.f32.mrf.mxu0
        %v1127 = vadd.f32 %v780, %v1126
        %v1128 = vpop.f32.mrf.mxu0
        %v1129 = vadd.f32 %v782, %v1128
        %1130 = vmatprep.mubr.f32.mxu0 0.0
        %v1131 = vand.u32 %v457, 4294901760
        %1132 = vmatmul.mubr.f32.gmra.mxu0 %v1131
        %v1133 = vpop.f32.mrf.mxu0
        %v1134 = vadd.f32 %v791, %v1133
        %v1135 = vpop.f32.mrf.mxu0
        %v1136 = vadd.f32 %v793, %v1135
        %1137 = vmatprep.mubr.f32.mxu0 0.0
        %v1138 = vand.u32 %v460, 4294901760
        %1139 = vmatmul.mubr.f32.gmra.mxu0 %v1138
        %v1140 = vpop.f32.mrf.mxu0
        %v1141 = vadd.f32 %v802, %v1140
        %v1142 = vpop.f32.mrf.mxu0
        %v1143 = vadd.f32 %v804, %v1142
        %1144 = vmatprep.mubr.f32.mxu0 0.0
        %v1145 = vand.u32 %v463, 4294901760
        %1146 = vmatmul.mubr.f32.gmra.mxu0 %v1145
        %v1147 = vpop.f32.mrf.mxu0
        %v1148 = vadd.f32 %v813, %v1147
        %v1149 = vpop.f32.mrf.mxu0
        %v1150 = vadd.f32 %v815, %v1149
        %1151 = vmatprep.mubr.f32.mxu0 0.0
        %v1152 = vand.u32 %v466, 4294901760
        %1153 = vmatmul.mubr.f32.gmra.mxu0 %v1152
        %v1154 = vpop.f32.mrf.mxu0
        %v1155 = vadd.f32 %v824, %v1154
        %v1156 = vpop.f32.mrf.mxu0
        %v1157 = vadd.f32 %v826, %v1156
        %1158 = vmatprep.mubr.f32.mxu0 0.0
        %v1159 = vand.u32 %v469, 4294901760
        %1160 = vmatmul.mubr.f32.gmra.mxu0 %v1159
        %v1161 = vpop.f32.mrf.mxu0
        %v1162 = vadd.f32 %v835, %v1161
        %v1163 = vpop.f32.mrf.mxu0
        %v1164 = vadd.f32 %v837, %v1163
        %1165 = vmatprep.mubr.f32.mxu0 0.0
        %v1166 = vand.u32 %v472, 4294901760
        %1167 = vmatmul.mubr.f32.gmra.mxu0 %v1166
        %v1168 = vpop.f32.mrf.mxu0
        %v1169 = vadd.f32 %v846, %v1168
        %v1170 = vpop.f32.mrf.mxu0
        %v1171 = vadd.f32 %v848, %v1170
        %1172 = vmatprep.mubr.f32.mxu0 0.0
        %v1173 = vand.u32 %v475, 4294901760
        %1174 = vmatmul.mubr.f32.gmra.mxu0 %v1173
        %v1175 = vpop.f32.mrf.mxu0
        %v1176 = vadd.f32 %v857, %v1175
        %v1177 = vpop.f32.mrf.mxu0
        %v1178 = vadd.f32 %v859, %v1177
        %1179 = vmatprep.mubr.f32.mxu0 0.0
        %v1180 = vand.u32 %v478, 4294901760
        %1181 = vmatmul.mubr.f32.gmra.mxu0 %v1180
        %v1182 = vpop.f32.mrf.mxu0
        %v1183 = vadd.f32 %v868, %v1182
        %v1184 = vpop.f32.mrf.mxu0
        %v1185 = vadd.f32 %v870, %v1184
        %1186 = vmatprep.mubr.f32.mxu0 0.0
        %v1187 = vand.u32 %v481, 4294901760
        %1188 = vmatmul.mubr.f32.gmra.mxu0 %v1187
        %v1189 = vpop.f32.mrf.mxu0
        %v1190 = vadd.f32 %v879, %v1189
        %v1191 = vpop.f32.mrf.mxu0
        %v1192 = vadd.f32 %v881, %v1191
        %1193 = vmatprep.mubr.f32.mxu0 0.0
        %v1194 = vand.u32 %v484, 4294901760
        %1195 = vmatmul.mubr.f32.gmra.mxu0 %v1194
        %v1196 = vpop.f32.mrf.mxu0
        %v1197 = vadd.f32 %v890, %v1196
        %v1198 = vpop.f32.mrf.mxu0
        %v1199 = vadd.f32 %v892, %v1198
        %1200 = vmatprep.mubr.f32.mxu0 0.0
        %v1201 = vand.u32 %v487, 4294901760
        %1202 = vmatmul.mubr.f32.gmra.mxu0 %v1201
        %v1203 = vpop.f32.mrf.mxu0
        %v1204 = vadd.f32 %v901, %v1203
        %v1205 = vpop.f32.mrf.mxu0
        %v1206 = vadd.f32 %v903, %v1205
        %1207 = vmatprep.mubr.f32.mxu0 0.0
        %v1208 = vand.u32 %v490, 4294901760
        %1209 = vmatmul.mubr.f32.gmra.mxu0 %v1208
        %v1210 = vpop.f32.mrf.mxu0
        %v1211 = vadd.f32 %v912, %v1210
        %v1212 = vpop.f32.mrf.mxu0
        %v1213 = vadd.f32 %v914, %v1212
        %1214 = vdwg.mxu0
        %1215 = vmatprep.subr.mxu0 0.0
        %1216 = vmatpush1.msra.mxu0 0.0
        %1217 = vmatprep.subr.mxu0 0.0
        %1218 = vmatpush1.msra.mxu0 0.0
        %1219 = vmatprep.subr.mxu0 0.0
        %1220 = vmatpush1.msra.mxu0 0.0
        %1221 = vmatprep.subr.mxu0 0.0
        %1222 = vmatpush1.msra.mxu0 0.0
        %1223 = vmatprep.subr.mxu0 0.0
        %1224 = vmatpush1.msra.mxu0 0.0
        %1225 = vmatprep.subr.mxu0 0.0
        %1226 = vmatpush1.msra.mxu0 0.0
        %1227 = vmatprep.subr.mxu0 0.0
        %1228 = vmatpush1.msra.mxu0 0.0
        %1229 = vmatprep.subr.mxu0 0.0
        %1230 = vmatpush1.msra.mxu0 0.0
        %1231 = vmatprep.subr.mxu0 0.0
        %1232 = vmatpush1.msra.mxu0 0.0
        %1233 = vmatprep.subr.mxu0 0.0
        %1234 = vmatpush1.msra.mxu0 0.0
        %1235 = vmatprep.subr.mxu0 0.0
        %1236 = vmatpush1.msra.mxu0 0.0
        %1237 = vmatprep.subr.mxu0 0.0
        %1238 = vmatpush1.msra.mxu0 0.0
        %1239 = vmatprep.subr.mxu0 0.0
        %1240 = vmatpush1.msra.mxu0 0.0
        %1241 = vmatprep.subr.mxu0 0.0
        %1242 = vmatpush1.msra.mxu0 0.0
        %1243 = vmatprep.subr.mxu0 0.0
        %1244 = vmatpush1.msra.mxu0 0.0
        %v1245 = vand.u32 %v495, 4294901760
        %v1246 = vsub.f32 %v495, %v1245
        %1247 = vmatprep.subr.mxu0 %v1246
        %v1248 = vand.u32 %v493, 4294901760
        %v1249 = vsub.f32 %v493, %v1248
        %1250 = vmatpush1.msra.mxu0 %v1249
        %1251 = vmatprep.subr.mxu0 0.0
        %1252 = vmatpush2.msra.mxu0 0.0
        %1253 = vmatprep.subr.mxu0 0.0
        %1254 = vmatpush2.msra.mxu0 0.0
        %1255 = vmatprep.subr.mxu0 0.0
        %1256 = vmatpush2.msra.mxu0 0.0
        %1257 = vmatprep.subr.mxu0 0.0
        %1258 = vmatpush2.msra.mxu0 0.0
        %1259 = vmatprep.subr.mxu0 0.0
        %1260 = vmatpush2.msra.mxu0 0.0
        %1261 = vmatprep.subr.mxu0 0.0
        %1262 = vmatpush2.msra.mxu0 0.0
        %1263 = vmatprep.subr.mxu0 0.0
        %1264 = vmatpush2.msra.mxu0 0.0
        %1265 = vmatprep.subr.mxu0 0.0
        %1266 = vmatpush2.msra.mxu0 0.0
        %1267 = vmatprep.subr.mxu0 0.0
        %1268 = vmatpush2.msra.mxu0 0.0
        %1269 = vmatprep.subr.mxu0 0.0
        %1270 = vmatpush2.msra.mxu0 0.0
        %1271 = vmatprep.subr.mxu0 0.0
        %1272 = vmatpush2.msra.mxu0 0.0
        %1273 = vmatprep.subr.mxu0 0.0
        %1274 = vmatpush2.msra.mxu0 0.0
        %1275 = vmatprep.subr.mxu0 0.0
        %1276 = vmatpush2.msra.mxu0 0.0
        %1277 = vmatprep.subr.mxu0 0.0
        %1278 = vmatpush2.msra.mxu0 0.0
        %1279 = vmatprep.subr.mxu0 0.0
        %1280 = vmatpush2.msra.mxu0 0.0
        %1281 = vmatprep.subr.mxu0 0.0
        %1282 = vmatpush2.msra.mxu0 0.0
        %1283 = vmatprep.mubr.f32.mxu0 0.0
        %v1284 = vand.u32 %v397, 4294901760
        %v1285 = vsub.f32 %v397, %v1284
        %1286 = vmatmul.mubr.f32.gmra.mxu0 %v1285
        %v1287 = vpop.f32.mrf.mxu0
        %v1288 = vadd.f32 %v994, %v1287
        %v1289 = vpop.f32.mrf.mxu0
        %v1290 = vadd.f32 %v996, %v1289
        %1291 = vmatprep.mubr.f32.mxu0 0.0
        %v1292 = vand.u32 %v400, 4294901760
        %v1293 = vsub.f32 %v400, %v1292
        %1294 = vmatmul.mubr.f32.gmra.mxu0 %v1293
        %v1295 = vpop.f32.mrf.mxu0
        %v1296 = vadd.f32 %v1001, %v1295
        %v1297 = vpop.f32.mrf.mxu0
        %v1298 = vadd.f32 %v1003, %v1297
        %1299 = vmatprep.mubr.f32.mxu0 0.0
        %v1300 = vand.u32 %v403, 4294901760
        %v1301 = vsub.f32 %v403, %v1300
        %1302 = vmatmul.mubr.f32.gmra.mxu0 %v1301
        %v1303 = vpop.f32.mrf.mxu0
        %v1304 = vadd.f32 %v1008, %v1303
        %v1305 = vpop.f32.mrf.mxu0
        %v1306 = vadd.f32 %v1010, %v1305
        %1307 = vmatprep.mubr.f32.mxu0 0.0
        %v1308 = vand.u32 %v406, 4294901760
        %v1309 = vsub.f32 %v406, %v1308
        %1310 = vmatmul.mubr.f32.gmra.mxu0 %v1309
        %v1311 = vpop.f32.mrf.mxu0
        %v1312 = vadd.f32 %v1015, %v1311
        %v1313 = vpop.f32.mrf.mxu0
        %v1314 = vadd.f32 %v1017, %v1313
        %1315 = vmatprep.mubr.f32.mxu0 0.0
        %v1316 = vand.u32 %v409, 4294901760
        %v1317 = vsub.f32 %v409, %v1316
        %1318 = vmatmul.mubr.f32.gmra.mxu0 %v1317
        %v1319 = vpop.f32.mrf.mxu0
        %v1320 = vadd.f32 %v1022, %v1319
        %v1321 = vpop.f32.mrf.mxu0
        %v1322 = vadd.f32 %v1024, %v1321
        %1323 = vmatprep.mubr.f32.mxu0 0.0
        %v1324 = vand.u32 %v412, 4294901760
        %v1325 = vsub.f32 %v412, %v1324
        %1326 = vmatmul.mubr.f32.gmra.mxu0 %v1325
        %v1327 = vpop.f32.mrf.mxu0
        %v1328 = vadd.f32 %v1029, %v1327
        %v1329 = vpop.f32.mrf.mxu0
        %v1330 = vadd.f32 %v1031, %v1329
        %1331 = vmatprep.mubr.f32.mxu0 0.0
        %v1332 = vand.u32 %v415, 4294901760
        %v1333 = vsub.f32 %v415, %v1332
        %1334 = vmatmul.mubr.f32.gmra.mxu0 %v1333
        %v1335 = vpop.f32.mrf.mxu0
        %v1336 = vadd.f32 %v1036, %v1335
        %v1337 = vpop.f32.mrf.mxu0
        %v1338 = vadd.f32 %v1038, %v1337
        %1339 = vmatprep.mubr.f32.mxu0 0.0
        %v1340 = vand.u32 %v418, 4294901760
        %v1341 = vsub.f32 %v418, %v1340
        %1342 = vmatmul.mubr.f32.gmra.mxu0 %v1341
        %v1343 = vpop.f32.mrf.mxu0
        %v1344 = vadd.f32 %v1043, %v1343
        %v1345 = vpop.f32.mrf.mxu0
        %v1346 = vadd.f32 %v1045, %v1345
        %1347 = vmatprep.mubr.f32.mxu0 0.0
        %v1348 = vand.u32 %v421, 4294901760
        %v1349 = vsub.f32 %v421, %v1348
        %1350 = vmatmul.mubr.f32.gmra.mxu0 %v1349
        %v1351 = vpop.f32.mrf.mxu0
        %v1352 = vadd.f32 %v1050, %v1351
        %v1353 = vpop.f32.mrf.mxu0
        %v1354 = vadd.f32 %v1052, %v1353
        %1355 = vmatprep.mubr.f32.mxu0 0.0
        %v1356 = vand.u32 %v424, 4294901760
        %v1357 = vsub.f32 %v424, %v1356
        %1358 = vmatmul.mubr.f32.gmra.mxu0 %v1357
        %v1359 = vpop.f32.mrf.mxu0
        %v1360 = vadd.f32 %v1057, %v1359
        %v1361 = vpop.f32.mrf.mxu0
        %v1362 = vadd.f32 %v1059, %v1361
        %1363 = vmatprep.mubr.f32.mxu0 0.0
        %v1364 = vand.u32 %v427, 4294901760
        %v1365 = vsub.f32 %v427, %v1364
        %1366 = vmatmul.mubr.f32.gmra.mxu0 %v1365
        %v1367 = vpop.f32.mrf.mxu0
        %v1368 = vadd.f32 %v1064, %v1367
        %v1369 = vpop.f32.mrf.mxu0
        %v1370 = vadd.f32 %v1066, %v1369
        %1371 = vmatprep.mubr.f32.mxu0 0.0
        %v1372 = vand.u32 %v430, 4294901760
        %v1373 = vsub.f32 %v430, %v1372
        %1374 = vmatmul.mubr.f32.gmra.mxu0 %v1373
        %v1375 = vpop.f32.mrf.mxu0
        %v1376 = vadd.f32 %v1071, %v1375
        %v1377 = vpop.f32.mrf.mxu0
        %v1378 = vadd.f32 %v1073, %v1377
        %1379 = vmatprep.mubr.f32.mxu0 0.0
        %v1380 = vand.u32 %v433, 4294901760
        %v1381 = vsub.f32 %v433, %v1380
        %1382 = vmatmul.mubr.f32.gmra.mxu0 %v1381
        %v1383 = vpop.f32.mrf.mxu0
        %v1384 = vadd.f32 %v1078, %v1383
        %v1385 = vpop.f32.mrf.mxu0
        %v1386 = vadd.f32 %v1080, %v1385
        %1387 = vmatprep.mubr.f32.mxu0 0.0
        %v1388 = vand.u32 %v436, 4294901760
        %v1389 = vsub.f32 %v436, %v1388
        %1390 = vmatmul.mubr.f32.gmra.mxu0 %v1389
        %v1391 = vpop.f32.mrf.mxu0
        %v1392 = vadd.f32 %v1085, %v1391
        %v1393 = vpop.f32.mrf.mxu0
        %v1394 = vadd.f32 %v1087, %v1393
        %1395 = vmatprep.mubr.f32.mxu0 0.0
        %v1396 = vand.u32 %v439, 4294901760
        %v1397 = vsub.f32 %v439, %v1396
        %1398 = vmatmul.mubr.f32.gmra.mxu0 %v1397
        %v1399 = vpop.f32.mrf.mxu0
        %v1400 = vadd.f32 %v1092, %v1399
        %v1401 = vpop.f32.mrf.mxu0
        %v1402 = vadd.f32 %v1094, %v1401
        %1403 = vmatprep.mubr.f32.mxu0 0.0
        %v1404 = vand.u32 %v442, 4294901760
        %v1405 = vsub.f32 %v442, %v1404
        %1406 = vmatmul.mubr.f32.gmra.mxu0 %v1405
        %v1407 = vpop.f32.mrf.mxu0
        %v1408 = vadd.f32 %v1099, %v1407
        %v1409 = vpop.f32.mrf.mxu0
        %v1410 = vadd.f32 %v1101, %v1409
        %1411 = vmatprep.mubr.f32.mxu0 0.0
        %v1412 = vand.u32 %v445, 4294901760
        %v1413 = vsub.f32 %v445, %v1412
        %1414 = vmatmul.mubr.f32.gmra.mxu0 %v1413
        %v1415 = vpop.f32.mrf.mxu0
        %v1416 = vadd.f32 %v1106, %v1415
        %v1417 = vpop.f32.mrf.mxu0
        %v1418 = vadd.f32 %v1108, %v1417
        %1419 = vmatprep.mubr.f32.mxu0 0.0
        %v1420 = vand.u32 %v448, 4294901760
        %v1421 = vsub.f32 %v448, %v1420
        %1422 = vmatmul.mubr.f32.gmra.mxu0 %v1421
        %v1423 = vpop.f32.mrf.mxu0
        %v1424 = vadd.f32 %v1113, %v1423
        %v1425 = vpop.f32.mrf.mxu0
        %v1426 = vadd.f32 %v1115, %v1425
        %1427 = vmatprep.mubr.f32.mxu0 0.0
        %v1428 = vand.u32 %v451, 4294901760
        %v1429 = vsub.f32 %v451, %v1428
        %1430 = vmatmul.mubr.f32.gmra.mxu0 %v1429
        %v1431 = vpop.f32.mrf.mxu0
        %v1432 = vadd.f32 %v1120, %v1431
        %v1433 = vpop.f32.mrf.mxu0
        %v1434 = vadd.f32 %v1122, %v1433
        %1435 = vmatprep.mubr.f32.mxu0 0.0
        %v1436 = vand.u32 %v454, 4294901760
        %v1437 = vsub.f32 %v454, %v1436
        %1438 = vmatmul.mubr.f32.gmra.mxu0 %v1437
        %v1439 = vpop.f32.mrf.mxu0
        %v1440 = vadd.f32 %v1127, %v1439
        %v1441 = vpop.f32.mrf.mxu0
        %v1442 = vadd.f32 %v1129, %v1441
        %1443 = vmatprep.mubr.f32.mxu0 0.0
        %v1444 = vand.u32 %v457, 4294901760
        %v1445 = vsub.f32 %v457, %v1444
        %1446 = vmatmul.mubr.f32.gmra.mxu0 %v1445
        %v1447 = vpop.f32.mrf.mxu0
        %v1448 = vadd.f32 %v1134, %v1447
        %v1449 = vpop.f32.mrf.mxu0
        %v1450 = vadd.f32 %v1136, %v1449
        %1451 = vmatprep.mubr.f32.mxu0 0.0
        %v1452 = vand.u32 %v460, 4294901760
        %v1453 = vsub.f32 %v460, %v1452
        %1454 = vmatmul.mubr.f32.gmra.mxu0 %v1453
        %v1455 = vpop.f32.mrf.mxu0
        %v1456 = vadd.f32 %v1141, %v1455
        %v1457 = vpop.f32.mrf.mxu0
        %v1458 = vadd.f32 %v1143, %v1457
        %1459 = vmatprep.mubr.f32.mxu0 0.0
        %v1460 = vand.u32 %v463, 4294901760
        %v1461 = vsub.f32 %v463, %v1460
        %1462 = vmatmul.mubr.f32.gmra.mxu0 %v1461
        %v1463 = vpop.f32.mrf.mxu0
        %v1464 = vadd.f32 %v1148, %v1463
        %v1465 = vpop.f32.mrf.mxu0
        %v1466 = vadd.f32 %v1150, %v1465
        %1467 = vmatprep.mubr.f32.mxu0 0.0
        %v1468 = vand.u32 %v466, 4294901760
        %v1469 = vsub.f32 %v466, %v1468
        %1470 = vmatmul.mubr.f32.gmra.mxu0 %v1469
        %v1471 = vpop.f32.mrf.mxu0
        %v1472 = vadd.f32 %v1155, %v1471
        %v1473 = vpop.f32.mrf.mxu0
        %v1474 = vadd.f32 %v1157, %v1473
        %1475 = vmatprep.mubr.f32.mxu0 0.0
        %v1476 = vand.u32 %v469, 4294901760
        %v1477 = vsub.f32 %v469, %v1476
        %1478 = vmatmul.mubr.f32.gmra.mxu0 %v1477
        %v1479 = vpop.f32.mrf.mxu0
        %v1480 = vadd.f32 %v1162, %v1479
        %v1481 = vpop.f32.mrf.mxu0
        %v1482 = vadd.f32 %v1164, %v1481
        %1483 = vmatprep.mubr.f32.mxu0 0.0
        %v1484 = vand.u32 %v472, 4294901760
        %v1485 = vsub.f32 %v472, %v1484
        %1486 = vmatmul.mubr.f32.gmra.mxu0 %v1485
        %v1487 = vpop.f32.mrf.mxu0
        %v1488 = vadd.f32 %v1169, %v1487
        %v1489 = vpop.f32.mrf.mxu0
        %v1490 = vadd.f32 %v1171, %v1489
        %1491 = vmatprep.mubr.f32.mxu0 0.0
        %v1492 = vand.u32 %v475, 4294901760
        %v1493 = vsub.f32 %v475, %v1492
        %1494 = vmatmul.mubr.f32.gmra.mxu0 %v1493
        %v1495 = vpop.f32.mrf.mxu0
        %v1496 = vadd.f32 %v1176, %v1495
        %v1497 = vpop.f32.mrf.mxu0
        %v1498 = vadd.f32 %v1178, %v1497
        %1499 = vmatprep.mubr.f32.mxu0 0.0
        %v1500 = vand.u32 %v478, 4294901760
        %v1501 = vsub.f32 %v478, %v1500
        %1502 = vmatmul.mubr.f32.gmra.mxu0 %v1501
        %v1503 = vpop.f32.mrf.mxu0
        %v1504 = vadd.f32 %v1183, %v1503
        %v1505 = vpop.f32.mrf.mxu0
        %v1506 = vadd.f32 %v1185, %v1505
        %1507 = vmatprep.mubr.f32.mxu0 0.0
        %v1508 = vand.u32 %v481, 4294901760
        %v1509 = vsub.f32 %v481, %v1508
        %1510 = vmatmul.mubr.f32.gmra.mxu0 %v1509
        %v1511 = vpop.f32.mrf.mxu0
        %v1512 = vadd.f32 %v1190, %v1511
        %v1513 = vpop.f32.mrf.mxu0
        %v1514 = vadd.f32 %v1192, %v1513
        %1515 = vmatprep.mubr.f32.mxu0 0.0
        %v1516 = vand.u32 %v484, 4294901760
        %v1517 = vsub.f32 %v484, %v1516
        %1518 = vmatmul.mubr.f32.gmra.mxu0 %v1517
        %v1519 = vpop.f32.mrf.mxu0
        %v1520 = vadd.f32 %v1197, %v1519
        %v1521 = vpop.f32.mrf.mxu0
        %v1522 = vadd.f32 %v1199, %v1521
        %1523 = vmatprep.mubr.f32.mxu0 0.0
        %v1524 = vand.u32 %v487, 4294901760
        %v1525 = vsub.f32 %v487, %v1524
        %1526 = vmatmul.mubr.f32.gmra.mxu0 %v1525
        %v1527 = vpop.f32.mrf.mxu0
        %v1528 = vadd.f32 %v1204, %v1527
        %v1529 = vpop.f32.mrf.mxu0
        %v1530 = vadd.f32 %v1206, %v1529
        %1531 = vmatprep.mubr.f32.mxu0 0.0
        %v1532 = vand.u32 %v490, 4294901760
        %v1533 = vsub.f32 %v490, %v1532
        %1534 = vmatmul.mubr.f32.gmra.mxu0 %v1533
        %v1535 = vpop.f32.mrf.mxu0
        %v1536 = vadd.f32 %v1211, %v1535
        %v1537 = vpop.f32.mrf.mxu0
        %v1538 = vadd.f32 %v1213, %v1537
        %1539 = vdwg.mxu0
        %1540 = vmatprep.subr.mxu0 0.0
        %1541 = vmatpush1.msra.mxu0 0.0
        %1542 = vmatprep.subr.mxu0 0.0
        %1543 = vmatpush1.msra.mxu0 0.0
        %1544 = vmatprep.subr.mxu0 0.0
        %1545 = vmatpush1.msra.mxu0 0.0
        %1546 = vmatprep.subr.mxu0 0.0
        %1547 = vmatpush1.msra.mxu0 0.0
        %1548 = vmatprep.subr.mxu0 0.0
        %1549 = vmatpush1.msra.mxu0 0.0
        %1550 = vmatprep.subr.mxu0 0.0
        %1551 = vmatpush1.msra.mxu0 0.0
        %1552 = vmatprep.subr.mxu0 0.0
        %1553 = vmatpush1.msra.mxu0 0.0
        %1554 = vmatprep.subr.mxu0 0.0
        %1555 = vmatpush1.msra.mxu0 0.0
        %1556 = vmatprep.subr.mxu0 0.0
        %1557 = vmatpush1.msra.mxu0 0.0
        %1558 = vmatprep.subr.mxu0 0.0
        %1559 = vmatpush1.msra.mxu0 0.0
        %1560 = vmatprep.subr.mxu0 0.0
        %1561 = vmatpush1.msra.mxu0 0.0
        %1562 = vmatprep.subr.mxu0 0.0
        %1563 = vmatpush1.msra.mxu0 0.0
        %1564 = vmatprep.subr.mxu0 0.0
        %1565 = vmatpush1.msra.mxu0 0.0
        %1566 = vmatprep.subr.mxu0 0.0
        %1567 = vmatpush1.msra.mxu0 0.0
        %1568 = vmatprep.subr.mxu0 0.0
        %1569 = vmatpush1.msra.mxu0 0.0
        %v1570 = vand.u32 %v495, 4294901760
        %1571 = vmatprep.subr.mxu0 %v1570
        %v1572 = vand.u32 %v493, 4294901760
        %1573 = vmatpush1.msra.mxu0 %v1572
        %1574 = vmatprep.subr.mxu0 0.0
        %1575 = vmatpush2.msra.mxu0 0.0
        %1576 = vmatprep.subr.mxu0 0.0
        %1577 = vmatpush2.msra.mxu0 0.0
        %1578 = vmatprep.subr.mxu0 0.0
        %1579 = vmatpush2.msra.mxu0 0.0
        %1580 = vmatprep.subr.mxu0 0.0
        %1581 = vmatpush2.msra.mxu0 0.0
        %1582 = vmatprep.subr.mxu0 0.0
        %1583 = vmatpush2.msra.mxu0 0.0
        %1584 = vmatprep.subr.mxu0 0.0
        %1585 = vmatpush2.msra.mxu0 0.0
        %1586 = vmatprep.subr.mxu0 0.0
        %1587 = vmatpush2.msra.mxu0 0.0
        %1588 = vmatprep.subr.mxu0 0.0
        %1589 = vmatpush2.msra.mxu0 0.0
        %1590 = vmatprep.subr.mxu0 0.0
        %1591 = vmatpush2.msra.mxu0 0.0
        %1592 = vmatprep.subr.mxu0 0.0
        %1593 = vmatpush2.msra.mxu0 0.0
        %1594 = vmatprep.subr.mxu0 0.0
        %1595 = vmatpush2.msra.mxu0 0.0
        %1596 = vmatprep.subr.mxu0 0.0
        %1597 = vmatpush2.msra.mxu0 0.0
        %1598 = vmatprep.subr.mxu0 0.0
        %1599 = vmatpush2.msra.mxu0 0.0
        %1600 = vmatprep.subr.mxu0 0.0
        %1601 = vmatpush2.msra.mxu0 0.0
        %1602 = vmatprep.subr.mxu0 0.0
        %1603 = vmatpush2.msra.mxu0 0.0
        %1604 = vmatprep.subr.mxu0 0.0
        %1605 = vmatpush2.msra.mxu0 0.0
        %1606 = vmatprep.mubr.f32.mxu0 0.0
        %v1607 = vand.u32 %v397, 4294901760
        %v1608 = vsub.f32 %v397, %v1607
        %v1609 = vand.u32 %v1608, 4294901760
        %1610 = vmatmul.mubr.f32.gmra.mxu0 %v1609
        %v1611 = vpop.f32.mrf.mxu0
        %v1612 = vadd.f32 %v1288, %v1611
        %v1613 = vpop.f32.mrf.mxu0
        %v1614 = vadd.f32 %v1290, %v1613
        %1615 = vmatprep.mubr.f32.mxu0 0.0
        %v1616 = vand.u32 %v400, 4294901760
        %v1617 = vsub.f32 %v400, %v1616
        %v1618 = vand.u32 %v1617, 4294901760
        %1619 = vmatmul.mubr.f32.gmra.mxu0 %v1618
        %v1620 = vpop.f32.mrf.mxu0
        %v1621 = vadd.f32 %v1296, %v1620
        %v1622 = vpop.f32.mrf.mxu0
        %v1623 = vadd.f32 %v1298, %v1622
        %1624 = vmatprep.mubr.f32.mxu0 0.0
        %v1625 = vand.u32 %v403, 4294901760
        %v1626 = vsub.f32 %v403, %v1625
        %v1627 = vand.u32 %v1626, 4294901760
        %1628 = vmatmul.mubr.f32.gmra.mxu0 %v1627
        %v1629 = vpop.f32.mrf.mxu0
        %v1630 = vadd.f32 %v1304, %v1629
        %v1631 = vpop.f32.mrf.mxu0
        %v1632 = vadd.f32 %v1306, %v1631
        %1633 = vmatprep.mubr.f32.mxu0 0.0
        %v1634 = vand.u32 %v406, 4294901760
        %v1635 = vsub.f32 %v406, %v1634
        %v1636 = vand.u32 %v1635, 4294901760
        %1637 = vmatmul.mubr.f32.gmra.mxu0 %v1636
        %v1638 = vpop.f32.mrf.mxu0
        %v1639 = vadd.f32 %v1312, %v1638
        %v1640 = vpop.f32.mrf.mxu0
        %v1641 = vadd.f32 %v1314, %v1640
        %1642 = vmatprep.mubr.f32.mxu0 0.0
        %v1643 = vand.u32 %v409, 4294901760
        %v1644 = vsub.f32 %v409, %v1643
        %v1645 = vand.u32 %v1644, 4294901760
        %1646 = vmatmul.mubr.f32.gmra.mxu0 %v1645
        %v1647 = vpop.f32.mrf.mxu0
        %v1648 = vadd.f32 %v1320, %v1647
        %v1649 = vpop.f32.mrf.mxu0
        %v1650 = vadd.f32 %v1322, %v1649
        %1651 = vmatprep.mubr.f32.mxu0 0.0
        %v1652 = vand.u32 %v412, 4294901760
        %v1653 = vsub.f32 %v412, %v1652
        %v1654 = vand.u32 %v1653, 4294901760
        %1655 = vmatmul.mubr.f32.gmra.mxu0 %v1654
        %v1656 = vpop.f32.mrf.mxu0
        %v1657 = vadd.f32 %v1328, %v1656
        %v1658 = vpop.f32.mrf.mxu0
        %v1659 = vadd.f32 %v1330, %v1658
        %1660 = vmatprep.mubr.f32.mxu0 0.0
        %v1661 = vand.u32 %v415, 4294901760
        %v1662 = vsub.f32 %v415, %v1661
        %v1663 = vand.u32 %v1662, 4294901760
        %1664 = vmatmul.mubr.f32.gmra.mxu0 %v1663
        %v1665 = vpop.f32.mrf.mxu0
        %v1666 = vadd.f32 %v1336, %v1665
        %v1667 = vpop.f32.mrf.mxu0
        %v1668 = vadd.f32 %v1338, %v1667
        %1669 = vmatprep.mubr.f32.mxu0 0.0
        %v1670 = vand.u32 %v418, 4294901760
        %v1671 = vsub.f32 %v418, %v1670
        %v1672 = vand.u32 %v1671, 4294901760
        %1673 = vmatmul.mubr.f32.gmra.mxu0 %v1672
        %v1674 = vpop.f32.mrf.mxu0
        %v1675 = vadd.f32 %v1344, %v1674
        %v1676 = vpop.f32.mrf.mxu0
        %v1677 = vadd.f32 %v1346, %v1676
        %1678 = vmatprep.mubr.f32.mxu0 0.0
        %v1679 = vand.u32 %v421, 4294901760
        %v1680 = vsub.f32 %v421, %v1679
        %v1681 = vand.u32 %v1680, 4294901760
        %1682 = vmatmul.mubr.f32.gmra.mxu0 %v1681
        %v1683 = vpop.f32.mrf.mxu0
        %v1684 = vadd.f32 %v1352, %v1683
        %v1685 = vpop.f32.mrf.mxu0
        %v1686 = vadd.f32 %v1354, %v1685
        %1687 = vmatprep.mubr.f32.mxu0 0.0
        %v1688 = vand.u32 %v424, 4294901760
        %v1689 = vsub.f32 %v424, %v1688
        %v1690 = vand.u32 %v1689, 4294901760
        %1691 = vmatmul.mubr.f32.gmra.mxu0 %v1690
        %v1692 = vpop.f32.mrf.mxu0
        %v1693 = vadd.f32 %v1360, %v1692
        %v1694 = vpop.f32.mrf.mxu0
        %v1695 = vadd.f32 %v1362, %v1694
        %1696 = vmatprep.mubr.f32.mxu0 0.0
        %v1697 = vand.u32 %v427, 4294901760
        %v1698 = vsub.f32 %v427, %v1697
        %v1699 = vand.u32 %v1698, 4294901760
        %1700 = vmatmul.mubr.f32.gmra.mxu0 %v1699
        %v1701 = vpop.f32.mrf.mxu0
        %v1702 = vadd.f32 %v1368, %v1701
        %v1703 = vpop.f32.mrf.mxu0
        %v1704 = vadd.f32 %v1370, %v1703
        %1705 = vmatprep.mubr.f32.mxu0 0.0
        %v1706 = vand.u32 %v430, 4294901760
        %v1707 = vsub.f32 %v430, %v1706
        %v1708 = vand.u32 %v1707, 4294901760
        %1709 = vmatmul.mubr.f32.gmra.mxu0 %v1708
        %v1710 = vpop.f32.mrf.mxu0
        %v1711 = vadd.f32 %v1376, %v1710
        %v1712 = vpop.f32.mrf.mxu0
        %v1713 = vadd.f32 %v1378, %v1712
        %1714 = vmatprep.mubr.f32.mxu0 0.0
        %v1715 = vand.u32 %v433, 4294901760
        %v1716 = vsub.f32 %v433, %v1715
        %v1717 = vand.u32 %v1716, 4294901760
        %1718 = vmatmul.mubr.f32.gmra.mxu0 %v1717
        %v1719 = vpop.f32.mrf.mxu0
        %v1720 = vadd.f32 %v1384, %v1719
        %v1721 = vpop.f32.mrf.mxu0
        %v1722 = vadd.f32 %v1386, %v1721
        %1723 = vmatprep.mubr.f32.mxu0 0.0
        %v1724 = vand.u32 %v436, 4294901760
        %v1725 = vsub.f32 %v436, %v1724
        %v1726 = vand.u32 %v1725, 4294901760
        %1727 = vmatmul.mubr.f32.gmra.mxu0 %v1726
        %v1728 = vpop.f32.mrf.mxu0
        %v1729 = vadd.f32 %v1392, %v1728
        %v1730 = vpop.f32.mrf.mxu0
        %v1731 = vadd.f32 %v1394, %v1730
        %1732 = vmatprep.mubr.f32.mxu0 0.0
        %v1733 = vand.u32 %v439, 4294901760
        %v1734 = vsub.f32 %v439, %v1733
        %v1735 = vand.u32 %v1734, 4294901760
        %1736 = vmatmul.mubr.f32.gmra.mxu0 %v1735
        %v1737 = vpop.f32.mrf.mxu0
        %v1738 = vadd.f32 %v1400, %v1737
        %v1739 = vpop.f32.mrf.mxu0
        %v1740 = vadd.f32 %v1402, %v1739
        %1741 = vmatprep.mubr.f32.mxu0 0.0
        %v1742 = vand.u32 %v442, 4294901760
        %v1743 = vsub.f32 %v442, %v1742
        %v1744 = vand.u32 %v1743, 4294901760
        %1745 = vmatmul.mubr.f32.gmra.mxu0 %v1744
        %v1746 = vpop.f32.mrf.mxu0
        %v1747 = vadd.f32 %v1408, %v1746
        %v1748 = vpop.f32.mrf.mxu0
        %v1749 = vadd.f32 %v1410, %v1748
        %1750 = vmatprep.mubr.f32.mxu0 0.0
        %v1751 = vand.u32 %v445, 4294901760
        %v1752 = vsub.f32 %v445, %v1751
        %v1753 = vand.u32 %v1752, 4294901760
        %1754 = vmatmul.mubr.f32.gmra.mxu0 %v1753
        %v1755 = vpop.f32.mrf.mxu0
        %v1756 = vadd.f32 %v1416, %v1755
        %v1757 = vpop.f32.mrf.mxu0
        %v1758 = vadd.f32 %v1418, %v1757
        %1759 = vmatprep.mubr.f32.mxu0 0.0
        %v1760 = vand.u32 %v448, 4294901760
        %v1761 = vsub.f32 %v448, %v1760
        %v1762 = vand.u32 %v1761, 4294901760
        %1763 = vmatmul.mubr.f32.gmra.mxu0 %v1762
        %v1764 = vpop.f32.mrf.mxu0
        %v1765 = vadd.f32 %v1424, %v1764
        %v1766 = vpop.f32.mrf.mxu0
        %v1767 = vadd.f32 %v1426, %v1766
        %1768 = vmatprep.mubr.f32.mxu0 0.0
        %v1769 = vand.u32 %v451, 4294901760
        %v1770 = vsub.f32 %v451, %v1769
        %v1771 = vand.u32 %v1770, 4294901760
        %1772 = vmatmul.mubr.f32.gmra.mxu0 %v1771
        %v1773 = vpop.f32.mrf.mxu0
        %v1774 = vadd.f32 %v1432, %v1773
        %v1775 = vpop.f32.mrf.mxu0
        %v1776 = vadd.f32 %v1434, %v1775
        %1777 = vmatprep.mubr.f32.mxu0 0.0
        %v1778 = vand.u32 %v454, 4294901760
        %v1779 = vsub.f32 %v454, %v1778
        %v1780 = vand.u32 %v1779, 4294901760
        %1781 = vmatmul.mubr.f32.gmra.mxu0 %v1780
        %v1782 = vpop.f32.mrf.mxu0
        %v1783 = vadd.f32 %v1440, %v1782
        %v1784 = vpop.f32.mrf.mxu0
        %v1785 = vadd.f32 %v1442, %v1784
        %1786 = vmatprep.mubr.f32.mxu0 0.0
        %v1787 = vand.u32 %v457, 4294901760
        %v1788 = vsub.f32 %v457, %v1787
        %v1789 = vand.u32 %v1788, 4294901760
        %1790 = vmatmul.mubr.f32.gmra.mxu0 %v1789
        %v1791 = vpop.f32.mrf.mxu0
        %v1792 = vadd.f32 %v1448, %v1791
        %v1793 = vpop.f32.mrf.mxu0
        %v1794 = vadd.f32 %v1450, %v1793
        %1795 = vmatprep.mubr.f32.mxu0 0.0
        %v1796 = vand.u32 %v460, 4294901760
        %v1797 = vsub.f32 %v460, %v1796
        %v1798 = vand.u32 %v1797, 4294901760
        %1799 = vmatmul.mubr.f32.gmra.mxu0 %v1798
        %v1800 = vpop.f32.mrf.mxu0
        %v1801 = vadd.f32 %v1456, %v1800
        %v1802 = vpop.f32.mrf.mxu0
        %v1803 = vadd.f32 %v1458, %v1802
        %1804 = vmatprep.mubr.f32.mxu0 0.0
        %v1805 = vand.u32 %v463, 4294901760
        %v1806 = vsub.f32 %v463, %v1805
        %v1807 = vand.u32 %v1806, 4294901760
        %1808 = vmatmul.mubr.f32.gmra.mxu0 %v1807
        %v1809 = vpop.f32.mrf.mxu0
        %v1810 = vadd.f32 %v1464, %v1809
        %v1811 = vpop.f32.mrf.mxu0
        %v1812 = vadd.f32 %v1466, %v1811
        %1813 = vmatprep.mubr.f32.mxu0 0.0
        %v1814 = vand.u32 %v466, 4294901760
        %v1815 = vsub.f32 %v466, %v1814
        %v1816 = vand.u32 %v1815, 4294901760
        %1817 = vmatmul.mubr.f32.gmra.mxu0 %v1816
        %v1818 = vpop.f32.mrf.mxu0
        %v1819 = vadd.f32 %v1472, %v1818
        %v1820 = vpop.f32.mrf.mxu0
        %v1821 = vadd.f32 %v1474, %v1820
        %1822 = vmatprep.mubr.f32.mxu0 0.0
        %v1823 = vand.u32 %v469, 4294901760
        %v1824 = vsub.f32 %v469, %v1823
        %v1825 = vand.u32 %v1824, 4294901760
        %1826 = vmatmul.mubr.f32.gmra.mxu0 %v1825
        %v1827 = vpop.f32.mrf.mxu0
        %v1828 = vadd.f32 %v1480, %v1827
        %v1829 = vpop.f32.mrf.mxu0
        %v1830 = vadd.f32 %v1482, %v1829
        %1831 = vmatprep.mubr.f32.mxu0 0.0
        %v1832 = vand.u32 %v472, 4294901760
        %v1833 = vsub.f32 %v472, %v1832
        %v1834 = vand.u32 %v1833, 4294901760
        %1835 = vmatmul.mubr.f32.gmra.mxu0 %v1834
        %v1836 = vpop.f32.mrf.mxu0
        %v1837 = vadd.f32 %v1488, %v1836
        %v1838 = vpop.f32.mrf.mxu0
        %v1839 = vadd.f32 %v1490, %v1838
        %1840 = vmatprep.mubr.f32.mxu0 0.0
        %v1841 = vand.u32 %v475, 4294901760
        %v1842 = vsub.f32 %v475, %v1841
        %v1843 = vand.u32 %v1842, 4294901760
        %1844 = vmatmul.mubr.f32.gmra.mxu0 %v1843
        %v1845 = vpop.f32.mrf.mxu0
        %v1846 = vadd.f32 %v1496, %v1845
        %v1847 = vpop.f32.mrf.mxu0
        %v1848 = vadd.f32 %v1498, %v1847
        %1849 = vmatprep.mubr.f32.mxu0 0.0
        %v1850 = vand.u32 %v478, 4294901760
        %v1851 = vsub.f32 %v478, %v1850
        %v1852 = vand.u32 %v1851, 4294901760
        %1853 = vmatmul.mubr.f32.gmra.mxu0 %v1852
        %v1854 = vpop.f32.mrf.mxu0
        %v1855 = vadd.f32 %v1504, %v1854
        %v1856 = vpop.f32.mrf.mxu0
        %v1857 = vadd.f32 %v1506, %v1856
        %1858 = vmatprep.mubr.f32.mxu0 0.0
        %v1859 = vand.u32 %v481, 4294901760
        %v1860 = vsub.f32 %v481, %v1859
        %v1861 = vand.u32 %v1860, 4294901760
        %1862 = vmatmul.mubr.f32.gmra.mxu0 %v1861
        %v1863 = vpop.f32.mrf.mxu0
        %v1864 = vadd.f32 %v1512, %v1863
        %v1865 = vpop.f32.mrf.mxu0
        %v1866 = vadd.f32 %v1514, %v1865
        %1867 = vmatprep.mubr.f32.mxu0 0.0
        %v1868 = vand.u32 %v484, 4294901760
        %v1869 = vsub.f32 %v484, %v1868
        %v1870 = vand.u32 %v1869, 4294901760
        %1871 = vmatmul.mubr.f32.gmra.mxu0 %v1870
        %v1872 = vpop.f32.mrf.mxu0
        %v1873 = vadd.f32 %v1520, %v1872
        %v1874 = vpop.f32.mrf.mxu0
        %v1875 = vadd.f32 %v1522, %v1874
        %1876 = vmatprep.mubr.f32.mxu0 0.0
        %v1877 = vand.u32 %v487, 4294901760
        %v1878 = vsub.f32 %v487, %v1877
        %v1879 = vand.u32 %v1878, 4294901760
        %1880 = vmatmul.mubr.f32.gmra.mxu0 %v1879
        %v1881 = vpop.f32.mrf.mxu0
        %v1882 = vadd.f32 %v1528, %v1881
        %v1883 = vpop.f32.mrf.mxu0
        %v1884 = vadd.f32 %v1530, %v1883
        %1885 = vmatprep.mubr.f32.mxu0 0.0
        %v1886 = vand.u32 %v490, 4294901760
        %v1887 = vsub.f32 %v490, %v1886
        %v1888 = vand.u32 %v1887, 4294901760
        %1889 = vmatmul.mubr.f32.gmra.mxu0 %v1888
        %v1890 = vpop.f32.mrf.mxu0
        %v1891 = vadd.f32 %v1536, %v1890
        %v1892 = vpop.f32.mrf.mxu0
        %v1893 = vadd.f32 %v1538, %v1892
        %1894 = vdwg.mxu0
        %1895 = vmatprep.subr.mxu0 0.0
        %1896 = vmatpush1.msra.mxu0 0.0
        %1897 = vmatprep.subr.mxu0 0.0
        %1898 = vmatpush1.msra.mxu0 0.0
        %1899 = vmatprep.subr.mxu0 0.0
        %1900 = vmatpush1.msra.mxu0 0.0
        %1901 = vmatprep.subr.mxu0 0.0
        %1902 = vmatpush1.msra.mxu0 0.0
        %1903 = vmatprep.subr.mxu0 0.0
        %1904 = vmatpush1.msra.mxu0 0.0
        %1905 = vmatprep.subr.mxu0 0.0
        %1906 = vmatpush1.msra.mxu0 0.0
        %1907 = vmatprep.subr.mxu0 0.0
        %1908 = vmatpush1.msra.mxu0 0.0
        %1909 = vmatprep.subr.mxu0 0.0
        %1910 = vmatpush1.msra.mxu0 0.0
        %1911 = vmatprep.subr.mxu0 0.0
        %1912 = vmatpush1.msra.mxu0 0.0
        %1913 = vmatprep.subr.mxu0 0.0
        %1914 = vmatpush1.msra.mxu0 0.0
        %1915 = vmatprep.subr.mxu0 0.0
        %1916 = vmatpush1.msra.mxu0 0.0
        %1917 = vmatprep.subr.mxu0 0.0
        %1918 = vmatpush1.msra.mxu0 0.0
        %1919 = vmatprep.subr.mxu0 0.0
        %1920 = vmatpush1.msra.mxu0 0.0
        %1921 = vmatprep.subr.mxu0 0.0
        %1922 = vmatpush1.msra.mxu0 0.0
        %1923 = vmatprep.subr.mxu0 0.0
        %1924 = vmatpush1.msra.mxu0 0.0
        %v1925 = vand.u32 %v495, 4294901760
        %v1926 = vsub.f32 %v495, %v1925
        %v1927 = vand.u32 %v1926, 4294901760
        %1928 = vmatprep.subr.mxu0 %v1927
        %v1929 = vand.u32 %v493, 4294901760
        %v1930 = vsub.f32 %v493, %v1929
        %v1931 = vand.u32 %v1930, 4294901760
        %1932 = vmatpush1.msra.mxu0 %v1931
        %1933 = vmatprep.subr.mxu0 0.0
        %1934 = vmatpush2.msra.mxu0 0.0
        %1935 = vmatprep.subr.mxu0 0.0
        %1936 = vmatpush2.msra.mxu0 0.0
        %1937 = vmatprep.subr.mxu0 0.0
        %1938 = vmatpush2.msra.mxu0 0.0
        %1939 = vmatprep.subr.mxu0 0.0
        %1940 = vmatpush2.msra.mxu0 0.0
        %1941 = vmatprep.subr.mxu0 0.0
        %1942 = vmatpush2.msra.mxu0 0.0
        %1943 = vmatprep.subr.mxu0 0.0
        %1944 = vmatpush2.msra.mxu0 0.0
        %1945 = vmatprep.subr.mxu0 0.0
        %1946 = vmatpush2.msra.mxu0 0.0
        %1947 = vmatprep.subr.mxu0 0.0
        %1948 = vmatpush2.msra.mxu0 0.0
        %1949 = vmatprep.subr.mxu0 0.0
        %1950 = vmatpush2.msra.mxu0 0.0
        %1951 = vmatprep.subr.mxu0 0.0
        %1952 = vmatpush2.msra.mxu0 0.0
        %1953 = vmatprep.subr.mxu0 0.0
        %1954 = vmatpush2.msra.mxu0 0.0
        %1955 = vmatprep.subr.mxu0 0.0
        %1956 = vmatpush2.msra.mxu0 0.0
        %1957 = vmatprep.subr.mxu0 0.0
        %1958 = vmatpush2.msra.mxu0 0.0
        %1959 = vmatprep.subr.mxu0 0.0
        %1960 = vmatpush2.msra.mxu0 0.0
        %1961 = vmatprep.subr.mxu0 0.0
        %1962 = vmatpush2.msra.mxu0 0.0
        %1963 = vmatprep.subr.mxu0 0.0
        %1964 = vmatpush2.msra.mxu0 0.0
        %1965 = vmatprep.mubr.f32.mxu0 0.0
        %v1966 = vand.u32 %v397, 4294901760
        %1967 = vmatmul.mubr.f32.gmra.mxu0 %v1966
        %v1968 = vpop.f32.mrf.mxu0
        %v1969 = vadd.f32 %v1612, %v1968
        %v1970 = vpop.f32.mrf.mxu0
        %v1971 = vadd.f32 %v1614, %v1970
        %1972 = vmatprep.mubr.f32.mxu0 0.0
        %v1973 = vand.u32 %v400, 4294901760
        %1974 = vmatmul.mubr.f32.gmra.mxu0 %v1973
        %v1975 = vpop.f32.mrf.mxu0
        %v1976 = vadd.f32 %v1621, %v1975
        %v1977 = vpop.f32.mrf.mxu0
        %v1978 = vadd.f32 %v1623, %v1977
        %1979 = vmatprep.mubr.f32.mxu0 0.0
        %v1980 = vand.u32 %v403, 4294901760
        %1981 = vmatmul.mubr.f32.gmra.mxu0 %v1980
        %v1982 = vpop.f32.mrf.mxu0
        %v1983 = vadd.f32 %v1630, %v1982
        %v1984 = vpop.f32.mrf.mxu0
        %v1985 = vadd.f32 %v1632, %v1984
        %1986 = vmatprep.mubr.f32.mxu0 0.0
        %v1987 = vand.u32 %v406, 4294901760
        %1988 = vmatmul.mubr.f32.gmra.mxu0 %v1987
        %v1989 = vpop.f32.mrf.mxu0
        %v1990 = vadd.f32 %v1639, %v1989
        %v1991 = vpop.f32.mrf.mxu0
        %v1992 = vadd.f32 %v1641, %v1991
        %1993 = vmatprep.mubr.f32.mxu0 0.0
        %v1994 = vand.u32 %v409, 4294901760
        %1995 = vmatmul.mubr.f32.gmra.mxu0 %v1994
        %v1996 = vpop.f32.mrf.mxu0
        %v1997 = vadd.f32 %v1648, %v1996
        %v1998 = vpop.f32.mrf.mxu0
        %v1999 = vadd.f32 %v1650, %v1998
        %2000 = vmatprep.mubr.f32.mxu0 0.0
        %v2001 = vand.u32 %v412, 4294901760
        %2002 = vmatmul.mubr.f32.gmra.mxu0 %v2001
        %v2003 = vpop.f32.mrf.mxu0
        %v2004 = vadd.f32 %v1657, %v2003
        %v2005 = vpop.f32.mrf.mxu0
        %v2006 = vadd.f32 %v1659, %v2005
        %2007 = vmatprep.mubr.f32.mxu0 0.0
        %v2008 = vand.u32 %v415, 4294901760
        %2009 = vmatmul.mubr.f32.gmra.mxu0 %v2008
        %v2010 = vpop.f32.mrf.mxu0
        %v2011 = vadd.f32 %v1666, %v2010
        %v2012 = vpop.f32.mrf.mxu0
        %v2013 = vadd.f32 %v1668, %v2012
        %2014 = vmatprep.mubr.f32.mxu0 0.0
        %v2015 = vand.u32 %v418, 4294901760
        %2016 = vmatmul.mubr.f32.gmra.mxu0 %v2015
        %v2017 = vpop.f32.mrf.mxu0
        %v2018 = vadd.f32 %v1675, %v2017
        %v2019 = vpop.f32.mrf.mxu0
        %v2020 = vadd.f32 %v1677, %v2019
        %2021 = vmatprep.mubr.f32.mxu0 0.0
        %v2022 = vand.u32 %v421, 4294901760
        %2023 = vmatmul.mubr.f32.gmra.mxu0 %v2022
        %v2024 = vpop.f32.mrf.mxu0
        %v2025 = vadd.f32 %v1684, %v2024
        %v2026 = vpop.f32.mrf.mxu0
        %v2027 = vadd.f32 %v1686, %v2026
        %2028 = vmatprep.mubr.f32.mxu0 0.0
        %v2029 = vand.u32 %v424, 4294901760
        %2030 = vmatmul.mubr.f32.gmra.mxu0 %v2029
        %v2031 = vpop.f32.mrf.mxu0
        %v2032 = vadd.f32 %v1693, %v2031
        %v2033 = vpop.f32.mrf.mxu0
        %v2034 = vadd.f32 %v1695, %v2033
        %2035 = vmatprep.mubr.f32.mxu0 0.0
        %v2036 = vand.u32 %v427, 4294901760
        %2037 = vmatmul.mubr.f32.gmra.mxu0 %v2036
        %v2038 = vpop.f32.mrf.mxu0
        %v2039 = vadd.f32 %v1702, %v2038
        %v2040 = vpop.f32.mrf.mxu0
        %v2041 = vadd.f32 %v1704, %v2040
        %2042 = vmatprep.mubr.f32.mxu0 0.0
        %v2043 = vand.u32 %v430, 4294901760
        %2044 = vmatmul.mubr.f32.gmra.mxu0 %v2043
        %v2045 = vpop.f32.mrf.mxu0
        %v2046 = vadd.f32 %v1711, %v2045
        %v2047 = vpop.f32.mrf.mxu0
        %v2048 = vadd.f32 %v1713, %v2047
        %2049 = vmatprep.mubr.f32.mxu0 0.0
        %v2050 = vand.u32 %v433, 4294901760
        %2051 = vmatmul.mubr.f32.gmra.mxu0 %v2050
        %v2052 = vpop.f32.mrf.mxu0
        %v2053 = vadd.f32 %v1720, %v2052
        %v2054 = vpop.f32.mrf.mxu0
        %v2055 = vadd.f32 %v1722, %v2054
        %2056 = vmatprep.mubr.f32.mxu0 0.0
        %v2057 = vand.u32 %v436, 4294901760
        %2058 = vmatmul.mubr.f32.gmra.mxu0 %v2057
        %v2059 = vpop.f32.mrf.mxu0
        %v2060 = vadd.f32 %v1729, %v2059
        %v2061 = vpop.f32.mrf.mxu0
        %v2062 = vadd.f32 %v1731, %v2061
        %2063 = vmatprep.mubr.f32.mxu0 0.0
        %v2064 = vand.u32 %v439, 4294901760
        %2065 = vmatmul.mubr.f32.gmra.mxu0 %v2064
        %v2066 = vpop.f32.mrf.mxu0
        %v2067 = vadd.f32 %v1738, %v2066
        %v2068 = vpop.f32.mrf.mxu0
        %v2069 = vadd.f32 %v1740, %v2068
        %2070 = vmatprep.mubr.f32.mxu0 0.0
        %v2071 = vand.u32 %v442, 4294901760
        %2072 = vmatmul.mubr.f32.gmra.mxu0 %v2071
        %v2073 = vpop.f32.mrf.mxu0
        %v2074 = vadd.f32 %v1747, %v2073
        %v2075 = vpop.f32.mrf.mxu0
        %v2076 = vadd.f32 %v1749, %v2075
        %2077 = vmatprep.mubr.f32.mxu0 0.0
        %v2078 = vand.u32 %v445, 4294901760
        %2079 = vmatmul.mubr.f32.gmra.mxu0 %v2078
        %v2080 = vpop.f32.mrf.mxu0
        %v2081 = vadd.f32 %v1756, %v2080
        %v2082 = vpop.f32.mrf.mxu0
        %v2083 = vadd.f32 %v1758, %v2082
        %2084 = vmatprep.mubr.f32.mxu0 0.0
        %v2085 = vand.u32 %v448, 4294901760
        %2086 = vmatmul.mubr.f32.gmra.mxu0 %v2085
        %v2087 = vpop.f32.mrf.mxu0
        %v2088 = vadd.f32 %v1765, %v2087
        %v2089 = vpop.f32.mrf.mxu0
        %v2090 = vadd.f32 %v1767, %v2089
        %2091 = vmatprep.mubr.f32.mxu0 0.0
        %v2092 = vand.u32 %v451, 4294901760
        %2093 = vmatmul.mubr.f32.gmra.mxu0 %v2092
        %v2094 = vpop.f32.mrf.mxu0
        %v2095 = vadd.f32 %v1774, %v2094
        %v2096 = vpop.f32.mrf.mxu0
        %v2097 = vadd.f32 %v1776, %v2096
        %2098 = vmatprep.mubr.f32.mxu0 0.0
        %v2099 = vand.u32 %v454, 4294901760
        %2100 = vmatmul.mubr.f32.gmra.mxu0 %v2099
        %v2101 = vpop.f32.mrf.mxu0
        %v2102 = vadd.f32 %v1783, %v2101
        %v2103 = vpop.f32.mrf.mxu0
        %v2104 = vadd.f32 %v1785, %v2103
        %2105 = vmatprep.mubr.f32.mxu0 0.0
        %v2106 = vand.u32 %v457, 4294901760
        %2107 = vmatmul.mubr.f32.gmra.mxu0 %v2106
        %v2108 = vpop.f32.mrf.mxu0
        %v2109 = vadd.f32 %v1792, %v2108
        %v2110 = vpop.f32.mrf.mxu0
        %v2111 = vadd.f32 %v1794, %v2110
        %2112 = vmatprep.mubr.f32.mxu0 0.0
        %v2113 = vand.u32 %v460, 4294901760
        %2114 = vmatmul.mubr.f32.gmra.mxu0 %v2113
        %v2115 = vpop.f32.mrf.mxu0
        %v2116 = vadd.f32 %v1801, %v2115
        %v2117 = vpop.f32.mrf.mxu0
        %v2118 = vadd.f32 %v1803, %v2117
        %2119 = vmatprep.mubr.f32.mxu0 0.0
        %v2120 = vand.u32 %v463, 4294901760
        %2121 = vmatmul.mubr.f32.gmra.mxu0 %v2120
        %v2122 = vpop.f32.mrf.mxu0
        %v2123 = vadd.f32 %v1810, %v2122
        %v2124 = vpop.f32.mrf.mxu0
        %v2125 = vadd.f32 %v1812, %v2124
        %2126 = vmatprep.mubr.f32.mxu0 0.0
        %v2127 = vand.u32 %v466, 4294901760
        %2128 = vmatmul.mubr.f32.gmra.mxu0 %v2127
        %v2129 = vpop.f32.mrf.mxu0
        %v2130 = vadd.f32 %v1819, %v2129
        %v2131 = vpop.f32.mrf.mxu0
        %v2132 = vadd.f32 %v1821, %v2131
        %2133 = vmatprep.mubr.f32.mxu0 0.0
        %v2134 = vand.u32 %v469, 4294901760
        %2135 = vmatmul.mubr.f32.gmra.mxu0 %v2134
        %v2136 = vpop.f32.mrf.mxu0
        %v2137 = vadd.f32 %v1828, %v2136
        %v2138 = vpop.f32.mrf.mxu0
        %v2139 = vadd.f32 %v1830, %v2138
        %2140 = vmatprep.mubr.f32.mxu0 0.0
        %v2141 = vand.u32 %v472, 4294901760
        %2142 = vmatmul.mubr.f32.gmra.mxu0 %v2141
        %v2143 = vpop.f32.mrf.mxu0
        %v2144 = vadd.f32 %v1837, %v2143
        %v2145 = vpop.f32.mrf.mxu0
        %v2146 = vadd.f32 %v1839, %v2145
        %2147 = vmatprep.mubr.f32.mxu0 0.0
        %v2148 = vand.u32 %v475, 4294901760
        %2149 = vmatmul.mubr.f32.gmra.mxu0 %v2148
        %v2150 = vpop.f32.mrf.mxu0
        %v2151 = vadd.f32 %v1846, %v2150
        %v2152 = vpop.f32.mrf.mxu0
        %v2153 = vadd.f32 %v1848, %v2152
        %2154 = vmatprep.mubr.f32.mxu0 0.0
        %v2155 = vand.u32 %v478, 4294901760
        %2156 = vmatmul.mubr.f32.gmra.mxu0 %v2155
        %v2157 = vpop.f32.mrf.mxu0
        %v2158 = vadd.f32 %v1855, %v2157
        %v2159 = vpop.f32.mrf.mxu0
        %v2160 = vadd.f32 %v1857, %v2159
        %2161 = vmatprep.mubr.f32.mxu0 0.0
        %v2162 = vand.u32 %v481, 4294901760
        %2163 = vmatmul.mubr.f32.gmra.mxu0 %v2162
        %v2164 = vpop.f32.mrf.mxu0
        %v2165 = vadd.f32 %v1864, %v2164
        %v2166 = vpop.f32.mrf.mxu0
        %v2167 = vadd.f32 %v1866, %v2166
        %2168 = vmatprep.mubr.f32.mxu0 0.0
        %v2169 = vand.u32 %v484, 4294901760
        %2170 = vmatmul.mubr.f32.gmra.mxu0 %v2169
        %v2171 = vpop.f32.mrf.mxu0
        %v2172 = vadd.f32 %v1873, %v2171
        %v2173 = vpop.f32.mrf.mxu0
        %v2174 = vadd.f32 %v1875, %v2173
        %2175 = vmatprep.mubr.f32.mxu0 0.0
        %v2176 = vand.u32 %v487, 4294901760
        %2177 = vmatmul.mubr.f32.gmra.mxu0 %v2176
        %v2178 = vpop.f32.mrf.mxu0
        %v2179 = vadd.f32 %v1882, %v2178
        %v2180 = vpop.f32.mrf.mxu0
        %v2181 = vadd.f32 %v1884, %v2180
        %2182 = vmatprep.mubr.f32.mxu0 0.0
        %v2183 = vand.u32 %v490, 4294901760
        %2184 = vmatmul.mubr.f32.gmra.mxu0 %v2183
        %v2185 = vpop.f32.mrf.mxu0
        %v2186 = vadd.f32 %v1891, %v2185
        %v2187 = vpop.f32.mrf.mxu0
        %v2188 = vadd.f32 %v1893, %v2187
        %2189 = vdwg.mxu0
        %2190 = vmatprep.subr.mxu0 0.0
        %2191 = vmatpush1.msra.mxu0 0.0
        %2192 = vmatprep.subr.mxu0 0.0
        %2193 = vmatpush1.msra.mxu0 0.0
        %2194 = vmatprep.subr.mxu0 0.0
        %2195 = vmatpush1.msra.mxu0 0.0
        %2196 = vmatprep.subr.mxu0 0.0
        %2197 = vmatpush1.msra.mxu0 0.0
        %2198 = vmatprep.subr.mxu0 0.0
        %2199 = vmatpush1.msra.mxu0 0.0
        %2200 = vmatprep.subr.mxu0 0.0
        %2201 = vmatpush1.msra.mxu0 0.0
        %2202 = vmatprep.subr.mxu0 0.0
        %2203 = vmatpush1.msra.mxu0 0.0
        %2204 = vmatprep.subr.mxu0 0.0
        %2205 = vmatpush1.msra.mxu0 0.0
        %2206 = vmatprep.subr.mxu0 0.0
        %2207 = vmatpush1.msra.mxu0 0.0
        %2208 = vmatprep.subr.mxu0 0.0
        %2209 = vmatpush1.msra.mxu0 0.0
        %2210 = vmatprep.subr.mxu0 0.0
        %2211 = vmatpush1.msra.mxu0 0.0
        %2212 = vmatprep.subr.mxu0 0.0
        %2213 = vmatpush1.msra.mxu0 0.0
        %2214 = vmatprep.subr.mxu0 0.0
        %2215 = vmatpush1.msra.mxu0 0.0
        %2216 = vmatprep.subr.mxu0 0.0
        %2217 = vmatpush1.msra.mxu0 0.0
        %2218 = vmatprep.subr.mxu0 0.0
        %2219 = vmatpush1.msra.mxu0 0.0
        %v2220 = vand.u32 %v495, 4294901760
        %2221 = vmatprep.subr.mxu0 %v2220
        %v2222 = vand.u32 %v493, 4294901760
        %2223 = vmatpush1.msra.mxu0 %v2222
        %2224 = vmatprep.subr.mxu0 0.0
        %2225 = vmatpush2.msra.mxu0 0.0
        %2226 = vmatprep.subr.mxu0 0.0
        %2227 = vmatpush2.msra.mxu0 0.0
        %2228 = vmatprep.subr.mxu0 0.0
        %2229 = vmatpush2.msra.mxu0 0.0
        %2230 = vmatprep.subr.mxu0 0.0
        %2231 = vmatpush2.msra.mxu0 0.0
        %2232 = vmatprep.subr.mxu0 0.0
        %2233 = vmatpush2.msra.mxu0 0.0
        %2234 = vmatprep.subr.mxu0 0.0
        %2235 = vmatpush2.msra.mxu0 0.0
        %2236 = vmatprep.subr.mxu0 0.0
        %2237 = vmatpush2.msra.mxu0 0.0
        %2238 = vmatprep.subr.mxu0 0.0
        %2239 = vmatpush2.msra.mxu0 0.0
        %2240 = vmatprep.subr.mxu0 0.0
        %2241 = vmatpush2.msra.mxu0 0.0
        %2242 = vmatprep.subr.mxu0 0.0
        %2243 = vmatpush2.msra.mxu0 0.0
        %2244 = vmatprep.subr.mxu0 0.0
        %2245 = vmatpush2.msra.mxu0 0.0
        %2246 = vmatprep.subr.mxu0 0.0
        %2247 = vmatpush2.msra.mxu0 0.0
        %2248 = vmatprep.subr.mxu0 0.0
        %2249 = vmatpush2.msra.mxu0 0.0
        %2250 = vmatprep.subr.mxu0 0.0
        %2251 = vmatpush2.msra.mxu0 0.0
        %2252 = vmatprep.subr.mxu0 0.0
        %2253 = vmatpush2.msra.mxu0 0.0
        %2254 = vmatprep.subr.mxu0 0.0
        %2255 = vmatpush2.msra.mxu0 0.0
        %2256 = vmatprep.mubr.f32.mxu0 0.0
        %v2257 = vand.u32 %v397, 4294901760
        %2258 = vmatmul.mubr.f32.gmra.mxu0 %v2257
        %v2259 = vpop.f32.mrf.mxu0
        %v2260 = vadd.f32 %v1969, %v2259
        %v2261 = vpop.f32.mrf.mxu0
        %v2262 = vadd.f32 %v1971, %v2261
        %2263 = vmatprep.mubr.f32.mxu0 0.0
        %v2264 = vand.u32 %v400, 4294901760
        %2265 = vmatmul.mubr.f32.gmra.mxu0 %v2264
        %v2266 = vpop.f32.mrf.mxu0
        %v2267 = vadd.f32 %v1976, %v2266
        %v2268 = vpop.f32.mrf.mxu0
        %v2269 = vadd.f32 %v1978, %v2268
        %2270 = vmatprep.mubr.f32.mxu0 0.0
        %v2271 = vand.u32 %v403, 4294901760
        %2272 = vmatmul.mubr.f32.gmra.mxu0 %v2271
        %v2273 = vpop.f32.mrf.mxu0
        %v2274 = vadd.f32 %v1983, %v2273
        %v2275 = vpop.f32.mrf.mxu0
        %v2276 = vadd.f32 %v1985, %v2275
        %2277 = vmatprep.mubr.f32.mxu0 0.0
        %v2278 = vand.u32 %v406, 4294901760
        %2279 = vmatmul.mubr.f32.gmra.mxu0 %v2278
        %v2280 = vpop.f32.mrf.mxu0
        %v2281 = vadd.f32 %v1990, %v2280
        %v2282 = vpop.f32.mrf.mxu0
        %v2283 = vadd.f32 %v1992, %v2282
        %2284 = vmatprep.mubr.f32.mxu0 0.0
        %v2285 = vand.u32 %v409, 4294901760
        %2286 = vmatmul.mubr.f32.gmra.mxu0 %v2285
        %v2287 = vpop.f32.mrf.mxu0
        %v2288 = vadd.f32 %v1997, %v2287
        %v2289 = vpop.f32.mrf.mxu0
        %v2290 = vadd.f32 %v1999, %v2289
        %2291 = vmatprep.mubr.f32.mxu0 0.0
        %v2292 = vand.u32 %v412, 4294901760
        %2293 = vmatmul.mubr.f32.gmra.mxu0 %v2292
        %v2294 = vpop.f32.mrf.mxu0
        %v2295 = vadd.f32 %v2004, %v2294
        %v2296 = vpop.f32.mrf.mxu0
        %v2297 = vadd.f32 %v2006, %v2296
        %2298 = vmatprep.mubr.f32.mxu0 0.0
        %v2299 = vand.u32 %v415, 4294901760
        %2300 = vmatmul.mubr.f32.gmra.mxu0 %v2299
        %v2301 = vpop.f32.mrf.mxu0
        %v2302 = vadd.f32 %v2011, %v2301
        %v2303 = vpop.f32.mrf.mxu0
        %v2304 = vadd.f32 %v2013, %v2303
        %2305 = vmatprep.mubr.f32.mxu0 0.0
        %v2306 = vand.u32 %v418, 4294901760
        %2307 = vmatmul.mubr.f32.gmra.mxu0 %v2306
        %v2308 = vpop.f32.mrf.mxu0
        %v2309 = vadd.f32 %v2018, %v2308
        %v2310 = vpop.f32.mrf.mxu0
        %v2311 = vadd.f32 %v2020, %v2310
        %2312 = vmatprep.mubr.f32.mxu0 0.0
        %v2313 = vand.u32 %v421, 4294901760
        %2314 = vmatmul.mubr.f32.gmra.mxu0 %v2313
        %v2315 = vpop.f32.mrf.mxu0
        %v2316 = vadd.f32 %v2025, %v2315
        %v2317 = vpop.f32.mrf.mxu0
        %v2318 = vadd.f32 %v2027, %v2317
        %2319 = vmatprep.mubr.f32.mxu0 0.0
        %v2320 = vand.u32 %v424, 4294901760
        %2321 = vmatmul.mubr.f32.gmra.mxu0 %v2320
        %v2322 = vpop.f32.mrf.mxu0
        %v2323 = vadd.f32 %v2032, %v2322
        %v2324 = vpop.f32.mrf.mxu0
        %v2325 = vadd.f32 %v2034, %v2324
        %2326 = vmatprep.mubr.f32.mxu0 0.0
        %v2327 = vand.u32 %v427, 4294901760
        %2328 = vmatmul.mubr.f32.gmra.mxu0 %v2327
        %v2329 = vpop.f32.mrf.mxu0
        %v2330 = vadd.f32 %v2039, %v2329
        %v2331 = vpop.f32.mrf.mxu0
        %v2332 = vadd.f32 %v2041, %v2331
        %2333 = vmatprep.mubr.f32.mxu0 0.0
        %v2334 = vand.u32 %v430, 4294901760
        %2335 = vmatmul.mubr.f32.gmra.mxu0 %v2334
        %v2336 = vpop.f32.mrf.mxu0
        %v2337 = vadd.f32 %v2046, %v2336
        %v2338 = vpop.f32.mrf.mxu0
        %v2339 = vadd.f32 %v2048, %v2338
        %2340 = vmatprep.mubr.f32.mxu0 0.0
        %v2341 = vand.u32 %v433, 4294901760
        %2342 = vmatmul.mubr.f32.gmra.mxu0 %v2341
        %v2343 = vpop.f32.mrf.mxu0
        %v2344 = vadd.f32 %v2053, %v2343
        %v2345 = vpop.f32.mrf.mxu0
        %v2346 = vadd.f32 %v2055, %v2345
        %2347 = vmatprep.mubr.f32.mxu0 0.0
        %v2348 = vand.u32 %v436, 4294901760
        %2349 = vmatmul.mubr.f32.gmra.mxu0 %v2348
        %v2350 = vpop.f32.mrf.mxu0
        %v2351 = vadd.f32 %v2060, %v2350
        %v2352 = vpop.f32.mrf.mxu0
        %v2353 = vadd.f32 %v2062, %v2352
        %2354 = vmatprep.mubr.f32.mxu0 0.0
        %v2355 = vand.u32 %v439, 4294901760
        %2356 = vmatmul.mubr.f32.gmra.mxu0 %v2355
        %v2357 = vpop.f32.mrf.mxu0
        %v2358 = vadd.f32 %v2067, %v2357
        %v2359 = vpop.f32.mrf.mxu0
        %v2360 = vadd.f32 %v2069, %v2359
        %2361 = vmatprep.mubr.f32.mxu0 0.0
        %v2362 = vand.u32 %v442, 4294901760
        %2363 = vmatmul.mubr.f32.gmra.mxu0 %v2362
        %v2364 = vpop.f32.mrf.mxu0
        %v2365 = vadd.f32 %v2074, %v2364
        %v2366 = vpop.f32.mrf.mxu0
        %v2367 = vadd.f32 %v2076, %v2366
        %2368 = vmatprep.mubr.f32.mxu0 0.0
        %v2369 = vand.u32 %v445, 4294901760
        %2370 = vmatmul.mubr.f32.gmra.mxu0 %v2369
        %v2371 = vpop.f32.mrf.mxu0
        %v2372 = vadd.f32 %v2081, %v2371
        %v2373 = vpop.f32.mrf.mxu0
        %v2374 = vadd.f32 %v2083, %v2373
        %2375 = vmatprep.mubr.f32.mxu0 0.0
        %v2376 = vand.u32 %v448, 4294901760
        %2377 = vmatmul.mubr.f32.gmra.mxu0 %v2376
        %v2378 = vpop.f32.mrf.mxu0
        %v2379 = vadd.f32 %v2088, %v2378
        %v2380 = vpop.f32.mrf.mxu0
        %v2381 = vadd.f32 %v2090, %v2380
        %2382 = vmatprep.mubr.f32.mxu0 0.0
        %v2383 = vand.u32 %v451, 4294901760
        %2384 = vmatmul.mubr.f32.gmra.mxu0 %v2383
        %v2385 = vpop.f32.mrf.mxu0
        %v2386 = vadd.f32 %v2095, %v2385
        %v2387 = vpop.f32.mrf.mxu0
        %v2388 = vadd.f32 %v2097, %v2387
        %2389 = vmatprep.mubr.f32.mxu0 0.0
        %v2390 = vand.u32 %v454, 4294901760
        %2391 = vmatmul.mubr.f32.gmra.mxu0 %v2390
        %v2392 = vpop.f32.mrf.mxu0
        %v2393 = vadd.f32 %v2102, %v2392
        %v2394 = vpop.f32.mrf.mxu0
        %v2395 = vadd.f32 %v2104, %v2394
        %2396 = vmatprep.mubr.f32.mxu0 0.0
        %v2397 = vand.u32 %v457, 4294901760
        %2398 = vmatmul.mubr.f32.gmra.mxu0 %v2397
        %v2399 = vpop.f32.mrf.mxu0
        %v2400 = vadd.f32 %v2109, %v2399
        %v2401 = vpop.f32.mrf.mxu0
        %v2402 = vadd.f32 %v2111, %v2401
        %2403 = vmatprep.mubr.f32.mxu0 0.0
        %v2404 = vand.u32 %v460, 4294901760
        %2405 = vmatmul.mubr.f32.gmra.mxu0 %v2404
        %v2406 = vpop.f32.mrf.mxu0
        %v2407 = vadd.f32 %v2116, %v2406
        %v2408 = vpop.f32.mrf.mxu0
        %v2409 = vadd.f32 %v2118, %v2408
        %2410 = vmatprep.mubr.f32.mxu0 0.0
        %v2411 = vand.u32 %v463, 4294901760
        %2412 = vmatmul.mubr.f32.gmra.mxu0 %v2411
        %v2413 = vpop.f32.mrf.mxu0
        %v2414 = vadd.f32 %v2123, %v2413
        %v2415 = vpop.f32.mrf.mxu0
        %v2416 = vadd.f32 %v2125, %v2415
        %2417 = vmatprep.mubr.f32.mxu0 0.0
        %v2418 = vand.u32 %v466, 4294901760
        %2419 = vmatmul.mubr.f32.gmra.mxu0 %v2418
        %v2420 = vpop.f32.mrf.mxu0
        %v2421 = vadd.f32 %v2130, %v2420
        %v2422 = vpop.f32.mrf.mxu0
        %v2423 = vadd.f32 %v2132, %v2422
        %2424 = vmatprep.mubr.f32.mxu0 0.0
        %v2425 = vand.u32 %v469, 4294901760
        %2426 = vmatmul.mubr.f32.gmra.mxu0 %v2425
        %v2427 = vpop.f32.mrf.mxu0
        %v2428 = vadd.f32 %v2137, %v2427
        %v2429 = vpop.f32.mrf.mxu0
        %v2430 = vadd.f32 %v2139, %v2429
        %2431 = vmatprep.mubr.f32.mxu0 0.0
        %v2432 = vand.u32 %v472, 4294901760
        %2433 = vmatmul.mubr.f32.gmra.mxu0 %v2432
        %v2434 = vpop.f32.mrf.mxu0
        %v2435 = vadd.f32 %v2144, %v2434
        %v2436 = vpop.f32.mrf.mxu0
        %v2437 = vadd.f32 %v2146, %v2436
        %2438 = vmatprep.mubr.f32.mxu0 0.0
        %v2439 = vand.u32 %v475, 4294901760
        %2440 = vmatmul.mubr.f32.gmra.mxu0 %v2439
        %v2441 = vpop.f32.mrf.mxu0
        %v2442 = vadd.f32 %v2151, %v2441
        %v2443 = vpop.f32.mrf.mxu0
        %v2444 = vadd.f32 %v2153, %v2443
        %2445 = vmatprep.mubr.f32.mxu0 0.0
        %v2446 = vand.u32 %v478, 4294901760
        %2447 = vmatmul.mubr.f32.gmra.mxu0 %v2446
        %v2448 = vpop.f32.mrf.mxu0
        %v2449 = vadd.f32 %v2158, %v2448
        %v2450 = vpop.f32.mrf.mxu0
        %v2451 = vadd.f32 %v2160, %v2450
        %2452 = vmatprep.mubr.f32.mxu0 0.0
        %v2453 = vand.u32 %v481, 4294901760
        %2454 = vmatmul.mubr.f32.gmra.mxu0 %v2453
        %v2455 = vpop.f32.mrf.mxu0
        %v2456 = vadd.f32 %v2165, %v2455
        %v2457 = vpop.f32.mrf.mxu0
        %v2458 = vadd.f32 %v2167, %v2457
        %2459 = vmatprep.mubr.f32.mxu0 0.0
        %v2460 = vand.u32 %v484, 4294901760
        %2461 = vmatmul.mubr.f32.gmra.mxu0 %v2460
        %v2462 = vpop.f32.mrf.mxu0
        %v2463 = vadd.f32 %v2172, %v2462
        %v2464 = vpop.f32.mrf.mxu0
        %v2465 = vadd.f32 %v2174, %v2464
        %2466 = vmatprep.mubr.f32.mxu0 0.0
        %v2467 = vand.u32 %v487, 4294901760
        %2468 = vmatmul.mubr.f32.gmra.mxu0 %v2467
        %v2469 = vpop.f32.mrf.mxu0
        %v2470 = vadd.f32 %v2179, %v2469
        %v2471 = vpop.f32.mrf.mxu0
        %v2472 = vadd.f32 %v2181, %v2471
        %2473 = vmatprep.mubr.f32.mxu0 0.0
        %v2474 = vand.u32 %v490, 4294901760
        %2475 = vmatmul.mubr.f32.gmra.mxu0 %v2474
        %v2476 = vpop.f32.mrf.mxu0
        %v2477 = vadd.f32 %v2186, %v2476
        %v2478 = vpop.f32.mrf.mxu0
        %v2479 = vadd.f32 %v2188, %v2478
        %2480 = vdwg.mxu0
        %v2481 = vld [vmem:[%s3] sm:$0xff]
        %v2482 = vld [vmem:[%s3 + $0x8] sm:$0xff]
        %v2483 = vld [vmem:[%s3 + $0x10] sm:$0xff]
        %v2484 = vld [vmem:[%s3 + $0x18] sm:$0xff]
        %v2485 = vld [vmem:[%s3 + $0x20] sm:$0xff]
        %v2486 = vld [vmem:[%s3 + $0x28] sm:$0xff]
        %v2487 = vld [vmem:[%s3 + $0x30] sm:$0xff]
        %v2488 = vld [vmem:[%s3 + $0x38] sm:$0xff]
        %v2489 = vld [vmem:[%s3 + $0x40] sm:$0xff]
        %v2490 = vld [vmem:[%s3 + $0x48] sm:$0xff]
        %v2491 = vld [vmem:[%s3 + $0x50] sm:$0xff]
        %v2492 = vld [vmem:[%s3 + $0x58] sm:$0xff]
        %v2493 = vld [vmem:[%s3 + $0x60] sm:$0xff]
        %v2494 = vld [vmem:[%s3 + $0x68] sm:$0xff]
        %v2495 = vld [vmem:[%s3 + $0x70] sm:$0xff]
        %v2496 = vld [vmem:[%s3 + $0x78] sm:$0xff]
        %v2497 = vld [vmem:[%s3 + $0x80] sm:$0xff]
        %v2498 = vld [vmem:[%s3 + $0x88] sm:$0xff]
        %v2499 = vld [vmem:[%s3 + $0x90] sm:$0xff]
        %v2500 = vld [vmem:[%s3 + $0x98] sm:$0xff]
        %v2501 = vld [vmem:[%s3 + $0xa0] sm:$0xff]
        %v2502 = vld [vmem:[%s3 + $0xa8] sm:$0xff]
        %v2503 = vld [vmem:[%s3 + $0xb0] sm:$0xff]
        %v2504 = vld [vmem:[%s3 + $0xb8] sm:$0xff]
        %v2505 = vld [vmem:[%s3 + $0xc0] sm:$0xff]
        %v2506 = vld [vmem:[%s3 + $0xc8] sm:$0xff]
        %v2507 = vld [vmem:[%s3 + $0xd0] sm:$0xff]
        %v2508 = vld [vmem:[%s3 + $0xd8] sm:$0xff]
        %v2509 = vld [vmem:[%s3 + $0xe0] sm:$0xff]
        %v2510 = vld [vmem:[%s3 + $0xe8] sm:$0xff]
        %v2511 = vld [vmem:[%s3 + $0xf0] sm:$0xff]
        %v2512 = vld [vmem:[%s3 + $0xf8] sm:$0xff]
        %2514 = vset.pattern.permute.xlu0 0
        %2515 = vperm.xlu0 %2514, %v2481
        %v2516 = vpop.permute.xlu0 %2515
        %2519 = vset.pattern.permute.xlu0 0
        %2520 = vperm.xlu0 %2519, %v2482
        %v2521 = vpop.permute.xlu0 %2520
        %2524 = vset.pattern.permute.xlu0 0
        %2525 = vperm.xlu0 %2524, %v2483
        %v2526 = vpop.permute.xlu0 %2525
        %2529 = vset.pattern.permute.xlu0 0
        %2530 = vperm.xlu0 %2529, %v2484
        %v2531 = vpop.permute.xlu0 %2530
        %2534 = vset.pattern.permute.xlu0 0
        %2535 = vperm.xlu0 %2534, %v2485
        %v2536 = vpop.permute.xlu0 %2535
        %2539 = vset.pattern.permute.xlu0 0
        %2540 = vperm.xlu0 %2539, %v2486
        %v2541 = vpop.permute.xlu0 %2540
        %2544 = vset.pattern.permute.xlu0 0
        %2545 = vperm.xlu0 %2544, %v2487
        %v2546 = vpop.permute.xlu0 %2545
        %2549 = vset.pattern.permute.xlu0 0
        %2550 = vperm.xlu0 %2549, %v2488
        %v2551 = vpop.permute.xlu0 %2550
        %2554 = vset.pattern.permute.xlu0 0
        %2555 = vperm.xlu0 %2554, %v2489
        %v2556 = vpop.permute.xlu0 %2555
        %2559 = vset.pattern.permute.xlu0 0
        %2560 = vperm.xlu0 %2559, %v2490
        %v2561 = vpop.permute.xlu0 %2560
        %2564 = vset.pattern.permute.xlu0 0
        %2565 = vperm.xlu0 %2564, %v2491
        %v2566 = vpop.permute.xlu0 %2565
        %2569 = vset.pattern.permute.xlu0 0
        %2570 = vperm.xlu0 %2569, %v2492
        %v2571 = vpop.permute.xlu0 %2570
        %2574 = vset.pattern.permute.xlu0 0
        %2575 = vperm.xlu0 %2574, %v2493
        %v2576 = vpop.permute.xlu0 %2575
        %2579 = vset.pattern.permute.xlu0 0
        %2580 = vperm.xlu0 %2579, %v2494
        %v2581 = vpop.permute.xlu0 %2580
        %2584 = vset.pattern.permute.xlu0 0
        %2585 = vperm.xlu0 %2584, %v2495
        %v2586 = vpop.permute.xlu0 %2585
        %2589 = vset.pattern.permute.xlu0 0
        %2590 = vperm.xlu0 %2589, %v2496
        %v2591 = vpop.permute.xlu0 %2590
        %2594 = vset.pattern.permute.xlu0 0
        %2595 = vperm.xlu0 %2594, %v2497
        %v2596 = vpop.permute.xlu0 %2595
        %2599 = vset.pattern.permute.xlu0 0
        %2600 = vperm.xlu0 %2599, %v2498
        %v2601 = vpop.permute.xlu0 %2600
        %2604 = vset.pattern.permute.xlu0 0
        %2605 = vperm.xlu0 %2604, %v2499
        %v2606 = vpop.permute.xlu0 %2605
        %2609 = vset.pattern.permute.xlu0 0
        %2610 = vperm.xlu0 %2609, %v2500
        %v2611 = vpop.permute.xlu0 %2610
        %2614 = vset.pattern.permute.xlu0 0
        %2615 = vperm.xlu0 %2614, %v2501
        %v2616 = vpop.permute.xlu0 %2615
        %2619 = vset.pattern.permute.xlu0 0
        %2620 = vperm.xlu0 %2619, %v2502
        %v2621 = vpop.permute.xlu0 %2620
        %2624 = vset.pattern.permute.xlu0 0
        %2625 = vperm.xlu0 %2624, %v2503
        %v2626 = vpop.permute.xlu0 %2625
        %2629 = vset.pattern.permute.xlu0 0
        %2630 = vperm.xlu0 %2629, %v2504
        %v2631 = vpop.permute.xlu0 %2630
        %2634 = vset.pattern.permute.xlu0 0
        %2635 = vperm.xlu0 %2634, %v2505
        %v2636 = vpop.permute.xlu0 %2635
        %2639 = vset.pattern.permute.xlu0 0
        %2640 = vperm.xlu0 %2639, %v2506
        %v2641 = vpop.permute.xlu0 %2640
        %2644 = vset.pattern.permute.xlu0 0
        %2645 = vperm.xlu0 %2644, %v2507
        %v2646 = vpop.permute.xlu0 %2645
        %2649 = vset.pattern.permute.xlu0 0
        %2650 = vperm.xlu0 %2649, %v2508
        %v2651 = vpop.permute.xlu0 %2650
        %2654 = vset.pattern.permute.xlu0 0
        %2655 = vperm.xlu0 %2654, %v2509
        %v2656 = vpop.permute.xlu0 %2655
        %2659 = vset.pattern.permute.xlu0 0
        %2660 = vperm.xlu0 %2659, %v2510
        %v2661 = vpop.permute.xlu0 %2660
        %2664 = vset.pattern.permute.xlu0 0
        %2665 = vperm.xlu0 %2664, %v2511
        %v2666 = vpop.permute.xlu0 %2665
        %2669 = vset.pattern.permute.xlu0 0
        %2670 = vperm.xlu0 %2669, %v2512
        %v2671 = vpop.permute.xlu0 %2670
        %v2673 = vsub.f32 %v2516, %v2260
        %v2674 = vsub.f32 %v2516, %v2262
        %v2675 = vsub.f32 %v2521, %v2267
        %v2676 = vsub.f32 %v2521, %v2269
        %v2677 = vsub.f32 %v2526, %v2274
        %v2678 = vsub.f32 %v2526, %v2276
        %v2679 = vsub.f32 %v2531, %v2281
        %v2680 = vsub.f32 %v2531, %v2283
        %v2681 = vsub.f32 %v2536, %v2288
        %v2682 = vsub.f32 %v2536, %v2290
        %v2683 = vsub.f32 %v2541, %v2295
        %v2684 = vsub.f32 %v2541, %v2297
        %v2685 = vsub.f32 %v2546, %v2302
        %v2686 = vsub.f32 %v2546, %v2304
        %v2687 = vsub.f32 %v2551, %v2309
        %v2688 = vsub.f32 %v2551, %v2311
        %v2689 = vsub.f32 %v2556, %v2316
        %v2690 = vsub.f32 %v2556, %v2318
        %v2691 = vsub.f32 %v2561, %v2323
        %v2692 = vsub.f32 %v2561, %v2325
        %v2693 = vsub.f32 %v2566, %v2330
        %v2694 = vsub.f32 %v2566, %v2332
        %v2695 = vsub.f32 %v2571, %v2337
        %v2696 = vsub.f32 %v2571, %v2339
        %v2697 = vsub.f32 %v2576, %v2344
        %v2698 = vsub.f32 %v2576, %v2346
        %v2699 = vsub.f32 %v2581, %v2351
        %v2700 = vsub.f32 %v2581, %v2353
        %v2701 = vsub.f32 %v2586, %v2358
        %v2702 = vsub.f32 %v2586, %v2360
        %v2703 = vsub.f32 %v2591, %v2365
        %v2704 = vsub.f32 %v2591, %v2367
        %v2705 = vsub.f32 %v2596, %v2372
        %v2706 = vsub.f32 %v2596, %v2374
        %v2707 = vsub.f32 %v2601, %v2379
        %v2708 = vsub.f32 %v2601, %v2381
        %v2709 = vsub.f32 %v2606, %v2386
        %v2710 = vsub.f32 %v2606, %v2388
        %v2711 = vsub.f32 %v2611, %v2393
        %v2712 = vsub.f32 %v2611, %v2395
        %v2713 = vsub.f32 %v2616, %v2400
        %v2714 = vsub.f32 %v2616, %v2402
        %v2715 = vsub.f32 %v2621, %v2407
        %v2716 = vsub.f32 %v2621, %v2409
        %v2717 = vsub.f32 %v2626, %v2414
        %v2718 = vsub.f32 %v2626, %v2416
        %v2719 = vsub.f32 %v2631, %v2421
        %v2720 = vsub.f32 %v2631, %v2423
        %v2721 = vsub.f32 %v2636, %v2428
        %v2722 = vsub.f32 %v2636, %v2430
        %v2723 = vsub.f32 %v2641, %v2435
        %v2724 = vsub.f32 %v2641, %v2437
        %v2725 = vsub.f32 %v2646, %v2442
        %v2726 = vsub.f32 %v2646, %v2444
        %v2727 = vsub.f32 %v2651, %v2449
        %v2728 = vsub.f32 %v2651, %v2451
        %v2729 = vsub.f32 %v2656, %v2456
        %v2730 = vsub.f32 %v2656, %v2458
        %v2731 = vsub.f32 %v2661, %v2463
        %v2732 = vsub.f32 %v2661, %v2465
        %v2733 = vsub.f32 %v2666, %v2470
        %v2734 = vsub.f32 %v2666, %v2472
        %v2735 = vsub.f32 %v2671, %v2477
        %v2736 = vsub.f32 %v2671, %v2479
        %v2737 = vmin.f32 %v2673, %v2677
        %v2738 = vmin.f32 %v2675, %v2679
        %v2739 = vmin.f32 %v2737, %v2681
        %v2740 = vmin.f32 %v2738, %v2683
        %v2741 = vmin.f32 %v2739, %v2685
        %v2742 = vmin.f32 %v2740, %v2687
        %v2743 = vmin.f32 %v2741, %v2689
        %v2744 = vmin.f32 %v2742, %v2691
        %v2745 = vmin.f32 %v2743, %v2693
        %v2746 = vmin.f32 %v2744, %v2695
        %v2747 = vmin.f32 %v2745, %v2697
        %v2748 = vmin.f32 %v2746, %v2699
        %v2749 = vmin.f32 %v2747, %v2701
        %v2750 = vmin.f32 %v2748, %v2703
        %v2751 = vmin.f32 %v2749, %v2705
        %v2752 = vmin.f32 %v2750, %v2707
        %v2753 = vmin.f32 %v2751, %v2709
        %v2754 = vmin.f32 %v2752, %v2711
        %v2755 = vmin.f32 %v2753, %v2713
        %v2756 = vmin.f32 %v2754, %v2715
        %v2757 = vmin.f32 %v2755, %v2717
        %v2758 = vmin.f32 %v2756, %v2719
        %v2759 = vmin.f32 %v2757, %v2721
        %v2760 = vmin.f32 %v2758, %v2723
        %v2761 = vmin.f32 %v2759, %v2725
        %v2762 = vmin.f32 %v2760, %v2727
        %v2763 = vmin.f32 %v2761, %v2729
        %v2764 = vmin.f32 %v2762, %v2731
        %v2765 = vmin.f32 %v2763, %v2733
        %v2766 = vmin.f32 %v2764, %v2735
        %v2767 = vmin.f32 %v2765, %v2766
        %v2768 = vrot.slane %v2767, 4
        %v2769 = vmin.f32 %v2767, %v2768
        %v2770 = vrot.slane %v2769, 2
        %v2771 = vmin.f32 %v2769, %v2770
        %v2772 = vrot.slane %v2771, 1
        %v2773 = vmin.f32 %v2771, %v2772
        %v2774 = vmin.f32 %v2674, %v2678
        %v2775 = vmin.f32 %v2676, %v2680
        %v2776 = vmin.f32 %v2774, %v2682
        %v2777 = vmin.f32 %v2775, %v2684
        %v2778 = vmin.f32 %v2776, %v2686
        %v2779 = vmin.f32 %v2777, %v2688
        %v2780 = vmin.f32 %v2778, %v2690
        %v2781 = vmin.f32 %v2779, %v2692
        %v2782 = vmin.f32 %v2780, %v2694
        %v2783 = vmin.f32 %v2781, %v2696
        %v2784 = vmin.f32 %v2782, %v2698
        %v2785 = vmin.f32 %v2783, %v2700
        %v2786 = vmin.f32 %v2784, %v2702
        %v2787 = vmin.f32 %v2785, %v2704
        %v2788 = vmin.f32 %v2786, %v2706
        %v2789 = vmin.f32 %v2787, %v2708
        %v2790 = vmin.f32 %v2788, %v2710
        %v2791 = vmin.f32 %v2789, %v2712
        %v2792 = vmin.f32 %v2790, %v2714
        %v2793 = vmin.f32 %v2791, %v2716
        %v2794 = vmin.f32 %v2792, %v2718
        %v2795 = vmin.f32 %v2793, %v2720
        %v2796 = vmin.f32 %v2794, %v2722
        %v2797 = vmin.f32 %v2795, %v2724
        %v2798 = vmin.f32 %v2796, %v2726
        %v2799 = vmin.f32 %v2797, %v2728
        %v2800 = vmin.f32 %v2798, %v2730
        %v2801 = vmin.f32 %v2799, %v2732
        %v2802 = vmin.f32 %v2800, %v2734
        %v2803 = vmin.f32 %v2801, %v2736
        %v2804 = vmin.f32 %v2802, %v2803
        %v2805 = vrot.slane %v2804, 4
        %v2806 = vmin.f32 %v2804, %v2805
        %v2807 = vrot.slane %v2806, 2
        %v2808 = vmin.f32 %v2806, %v2807
        %v2809 = vrot.slane %v2808, 1
        %v2810 = vmin.f32 %v2808, %v2809
        %v2811 = vlaneseq
        %v2812 = vshrl.u32 %v2811, 7
        %v2813 = vadd.s32 %v2812, 8
        %v2814 = vadd.s32 %v2812, 16
        %v2815 = vadd.s32 %v2812, 24
        %v2816 = vadd.s32 %v2812, 32
        %v2817 = vadd.s32 %v2812, 40
        %v2818 = vadd.s32 %v2812, 48
        %v2819 = vadd.s32 %v2812, 56
        %v2820 = vadd.s32 %v2812, 64
        %v2821 = vadd.s32 %v2812, 72
        %v2822 = vadd.s32 %v2812, 80
        %v2823 = vadd.s32 %v2812, 88
        %v2824 = vadd.s32 %v2812, 96
        %v2825 = vadd.s32 %v2812, 104
        %v2826 = vadd.s32 %v2812, 112
        %v2827 = vadd.s32 %v2812, 120
        %v2828 = vadd.s32 %v2812, 128
        %v2829 = vadd.s32 %v2812, 136
        %v2830 = vadd.s32 %v2812, 144
        %v2831 = vadd.s32 %v2812, 152
        %v2832 = vadd.s32 %v2812, 160
        %v2833 = vadd.s32 %v2812, 168
        %v2834 = vadd.s32 %v2812, 176
        %v2835 = vadd.s32 %v2812, 184
        %v2836 = vadd.s32 %v2812, 192
        %v2837 = vadd.s32 %v2812, 200
        %v2838 = vadd.s32 %v2812, 208
        %v2839 = vadd.s32 %v2812, 216
        %v2840 = vadd.s32 %v2812, 224
        %v2841 = vadd.s32 %v2812, 232
        %v2842 = vadd.s32 %v2812, 240
        %v2843 = vadd.s32 %v2812, 248
        %vm2844 = vcmp.eq.f32.partialorder %v2673, %v2773
        %vm2845 = vcmp.eq.f32.partialorder %v2674, %v2810
        %vm2846 = vcmp.eq.f32.partialorder %v2675, %v2773
        %vm2847 = vcmp.eq.f32.partialorder %v2676, %v2810
        %vm2848 = vcmp.eq.f32.partialorder %v2677, %v2773
        %vm2849 = vcmp.eq.f32.partialorder %v2678, %v2810
        %vm2850 = vcmp.eq.f32.partialorder %v2679, %v2773
        %vm2851 = vcmp.eq.f32.partialorder %v2680, %v2810
        %vm2852 = vcmp.eq.f32.partialorder %v2681, %v2773
        %vm2853 = vcmp.eq.f32.partialorder %v2682, %v2810
        %vm2854 = vcmp.eq.f32.partialorder %v2683, %v2773
        %vm2855 = vcmp.eq.f32.partialorder %v2684, %v2810
        %vm2856 = vcmp.eq.f32.partialorder %v2685, %v2773
        %vm2857 = vcmp.eq.f32.partialorder %v2686, %v2810
        %vm2858 = vcmp.eq.f32.partialorder %v2687, %v2773
        %vm2859 = vcmp.eq.f32.partialorder %v2688, %v2810
        %vm2860 = vcmp.eq.f32.partialorder %v2689, %v2773
        %vm2861 = vcmp.eq.f32.partialorder %v2690, %v2810
        %vm2862 = vcmp.eq.f32.partialorder %v2691, %v2773
        %vm2863 = vcmp.eq.f32.partialorder %v2692, %v2810
        %vm2864 = vcmp.eq.f32.partialorder %v2693, %v2773
        %vm2865 = vcmp.eq.f32.partialorder %v2694, %v2810
        %vm2866 = vcmp.eq.f32.partialorder %v2695, %v2773
        %vm2867 = vcmp.eq.f32.partialorder %v2696, %v2810
        %vm2868 = vcmp.eq.f32.partialorder %v2697, %v2773
        %vm2869 = vcmp.eq.f32.partialorder %v2698, %v2810
        %vm2870 = vcmp.eq.f32.partialorder %v2699, %v2773
        %vm2871 = vcmp.eq.f32.partialorder %v2700, %v2810
        %vm2872 = vcmp.eq.f32.partialorder %v2701, %v2773
        %vm2873 = vcmp.eq.f32.partialorder %v2702, %v2810
        %vm2874 = vcmp.eq.f32.partialorder %v2703, %v2773
        %vm2875 = vcmp.eq.f32.partialorder %v2704, %v2810
        %vm2876 = vcmp.eq.f32.partialorder %v2705, %v2773
        %vm2877 = vcmp.eq.f32.partialorder %v2706, %v2810
        %vm2878 = vcmp.eq.f32.partialorder %v2707, %v2773
        %vm2879 = vcmp.eq.f32.partialorder %v2708, %v2810
        %vm2880 = vcmp.eq.f32.partialorder %v2709, %v2773
        %vm2881 = vcmp.eq.f32.partialorder %v2710, %v2810
        %vm2882 = vcmp.eq.f32.partialorder %v2711, %v2773
        %vm2883 = vcmp.eq.f32.partialorder %v2712, %v2810
        %vm2884 = vcmp.eq.f32.partialorder %v2713, %v2773
        %vm2885 = vcmp.eq.f32.partialorder %v2714, %v2810
        %vm2886 = vcmp.eq.f32.partialorder %v2715, %v2773
        %vm2887 = vcmp.eq.f32.partialorder %v2716, %v2810
        %vm2888 = vcmp.eq.f32.partialorder %v2717, %v2773
        %vm2889 = vcmp.eq.f32.partialorder %v2718, %v2810
        %vm2890 = vcmp.eq.f32.partialorder %v2719, %v2773
        %vm2891 = vcmp.eq.f32.partialorder %v2720, %v2810
        %vm2892 = vcmp.eq.f32.partialorder %v2721, %v2773
        %vm2893 = vcmp.eq.f32.partialorder %v2722, %v2810
        %vm2894 = vcmp.eq.f32.partialorder %v2723, %v2773
        %vm2895 = vcmp.eq.f32.partialorder %v2724, %v2810
        %vm2896 = vcmp.eq.f32.partialorder %v2725, %v2773
        %vm2897 = vcmp.eq.f32.partialorder %v2726, %v2810
        %vm2898 = vcmp.eq.f32.partialorder %v2727, %v2773
        %vm2899 = vcmp.eq.f32.partialorder %v2728, %v2810
        %vm2900 = vcmp.eq.f32.partialorder %v2729, %v2773
        %vm2901 = vcmp.eq.f32.partialorder %v2730, %v2810
        %vm2902 = vcmp.eq.f32.partialorder %v2731, %v2773
        %vm2903 = vcmp.eq.f32.partialorder %v2732, %v2810
        %vm2904 = vcmp.eq.f32.partialorder %v2733, %v2773
        %vm2905 = vcmp.eq.f32.partialorder %v2734, %v2810
        %vm2906 = vcmp.eq.f32.partialorder %v2735, %v2773
        %vm2907 = vcmp.eq.f32.partialorder %v2736, %v2810
        %v2908 = vsel %vm2844, %v2812, 256
        %v2909 = vsel %vm2845, %v2812, 256
        %v2910 = vsel %vm2846, %v2813, 256
        %v2911 = vsel %vm2847, %v2813, 256
        %v2912 = vsel %vm2848, %v2814, 256
        %v2913 = vsel %vm2849, %v2814, 256
        %v2914 = vsel %vm2850, %v2815, 256
        %v2915 = vsel %vm2851, %v2815, 256
        %v2916 = vsel %vm2852, %v2816, 256
        %v2917 = vsel %vm2853, %v2816, 256
        %v2918 = vsel %vm2854, %v2817, 256
        %v2919 = vsel %vm2855, %v2817, 256
        %v2920 = vsel %vm2856, %v2818, 256
        %v2921 = vsel %vm2857, %v2818, 256
        %v2922 = vsel %vm2858, %v2819, 256
        %v2923 = vsel %vm2859, %v2819, 256
        %v2924 = vsel %vm2860, %v2820, 256
        %v2925 = vsel %vm2861, %v2820, 256
        %v2926 = vsel %vm2862, %v2821, 256
        %v2927 = vsel %vm2863, %v2821, 256
        %v2928 = vsel %vm2864, %v2822, 256
        %v2929 = vsel %vm2865, %v2822, 256
        %v2930 = vsel %vm2866, %v2823, 256
        %v2931 = vsel %vm2867, %v2823, 256
        %v2932 = vsel %vm2868, %v2824, 256
        %v2933 = vsel %vm2869, %v2824, 256
        %v2934 = vsel %vm2870, %v2825, 256
        %v2935 = vsel %vm2871, %v2825, 256
        %v2936 = vsel %vm2872, %v2826, 256
        %v2937 = vsel %vm2873, %v2826, 256
        %v2938 = vsel %vm2874, %v2827, 256
        %v2939 = vsel %vm2875, %v2827, 256
        %v2940 = vsel %vm2876, %v2828, 256
        %v2941 = vsel %vm2877, %v2828, 256
        %v2942 = vsel %vm2878, %v2829, 256
        %v2943 = vsel %vm2879, %v2829, 256
        %v2944 = vsel %vm2880, %v2830, 256
        %v2945 = vsel %vm2881, %v2830, 256
        %v2946 = vsel %vm2882, %v2831, 256
        %v2947 = vsel %vm2883, %v2831, 256
        %v2948 = vsel %vm2884, %v2832, 256
        %v2949 = vsel %vm2885, %v2832, 256
        %v2950 = vsel %vm2886, %v2833, 256
        %v2951 = vsel %vm2887, %v2833, 256
        %v2952 = vsel %vm2888, %v2834, 256
        %v2953 = vsel %vm2889, %v2834, 256
        %v2954 = vsel %vm2890, %v2835, 256
        %v2955 = vsel %vm2891, %v2835, 256
        %v2956 = vsel %vm2892, %v2836, 256
        %v2957 = vsel %vm2893, %v2836, 256
        %v2958 = vsel %vm2894, %v2837, 256
        %v2959 = vsel %vm2895, %v2837, 256
        %v2960 = vsel %vm2896, %v2838, 256
        %v2961 = vsel %vm2897, %v2838, 256
        %v2962 = vsel %vm2898, %v2839, 256
        %v2963 = vsel %vm2899, %v2839, 256
        %v2964 = vsel %vm2900, %v2840, 256
        %v2965 = vsel %vm2901, %v2840, 256
        %v2966 = vsel %vm2902, %v2841, 256
        %v2967 = vsel %vm2903, %v2841, 256
        %v2968 = vsel %vm2904, %v2842, 256
        %v2969 = vsel %vm2905, %v2842, 256
        %v2970 = vsel %vm2906, %v2843, 256
        %v2971 = vsel %vm2907, %v2843, 256
        %vm2972 = vcmp.lt.s32.totalorder %v2908, %v2912
        %v2973 = vsel %vm2972, %v2908, %v2912
        %vm2974 = vcmp.lt.s32.totalorder %v2910, %v2914
        %v2975 = vsel %vm2974, %v2910, %v2914
        %vm2976 = vcmp.lt.s32.totalorder %v2973, %v2916
        %v2977 = vsel %vm2976, %v2973, %v2916
        %vm2978 = vcmp.lt.s32.totalorder %v2975, %v2918
        %v2979 = vsel %vm2978, %v2975, %v2918
        %vm2980 = vcmp.lt.s32.totalorder %v2977, %v2920
        %v2981 = vsel %vm2980, %v2977, %v2920
        %vm2982 = vcmp.lt.s32.totalorder %v2979, %v2922
        %v2983 = vsel %vm2982, %v2979, %v2922
        %vm2984 = vcmp.lt.s32.totalorder %v2981, %v2924
        %v2985 = vsel %vm2984, %v2981, %v2924
        %vm2986 = vcmp.lt.s32.totalorder %v2983, %v2926
        %v2987 = vsel %vm2986, %v2983, %v2926
        %vm2988 = vcmp.lt.s32.totalorder %v2985, %v2928
        %v2989 = vsel %vm2988, %v2985, %v2928
        %vm2990 = vcmp.lt.s32.totalorder %v2987, %v2930
        %v2991 = vsel %vm2990, %v2987, %v2930
        %vm2992 = vcmp.lt.s32.totalorder %v2989, %v2932
        %v2993 = vsel %vm2992, %v2989, %v2932
        %vm2994 = vcmp.lt.s32.totalorder %v2991, %v2934
        %v2995 = vsel %vm2994, %v2991, %v2934
        %vm2996 = vcmp.lt.s32.totalorder %v2993, %v2936
        %v2997 = vsel %vm2996, %v2993, %v2936
        %vm2998 = vcmp.lt.s32.totalorder %v2995, %v2938
        %v2999 = vsel %vm2998, %v2995, %v2938
        %vm3000 = vcmp.lt.s32.totalorder %v2997, %v2940
        %v3001 = vsel %vm3000, %v2997, %v2940
        %vm3002 = vcmp.lt.s32.totalorder %v2999, %v2942
        %v3003 = vsel %vm3002, %v2999, %v2942
        %vm3004 = vcmp.lt.s32.totalorder %v3001, %v2944
        %v3005 = vsel %vm3004, %v3001, %v2944
        %vm3006 = vcmp.lt.s32.totalorder %v3003, %v2946
        %v3007 = vsel %vm3006, %v3003, %v2946
        %vm3008 = vcmp.lt.s32.totalorder %v3005, %v2948
        %v3009 = vsel %vm3008, %v3005, %v2948
        %vm3010 = vcmp.lt.s32.totalorder %v3007, %v2950
        %v3011 = vsel %vm3010, %v3007, %v2950
        %vm3012 = vcmp.lt.s32.totalorder %v3009, %v2952
        %v3013 = vsel %vm3012, %v3009, %v2952
        %vm3014 = vcmp.lt.s32.totalorder %v3011, %v2954
        %v3015 = vsel %vm3014, %v3011, %v2954
        %vm3016 = vcmp.lt.s32.totalorder %v3013, %v2956
        %v3017 = vsel %vm3016, %v3013, %v2956
        %vm3018 = vcmp.lt.s32.totalorder %v3015, %v2958
        %v3019 = vsel %vm3018, %v3015, %v2958
        %vm3020 = vcmp.lt.s32.totalorder %v3017, %v2960
        %v3021 = vsel %vm3020, %v3017, %v2960
        %vm3022 = vcmp.lt.s32.totalorder %v3019, %v2962
        %v3023 = vsel %vm3022, %v3019, %v2962
        %vm3024 = vcmp.lt.s32.totalorder %v3021, %v2964
        %v3025 = vsel %vm3024, %v3021, %v2964
        %vm3026 = vcmp.lt.s32.totalorder %v3023, %v2966
        %v3027 = vsel %vm3026, %v3023, %v2966
        %vm3028 = vcmp.lt.s32.totalorder %v3025, %v2968
        %v3029 = vsel %vm3028, %v3025, %v2968
        %vm3030 = vcmp.lt.s32.totalorder %v3027, %v2970
        %v3031 = vsel %vm3030, %v3027, %v2970
        %vm3032 = vcmp.lt.s32.totalorder %v3029, %v3031
        %v3033 = vsel %vm3032, %v3029, %v3031
        %v3034 = vrot.slane %v3033, 4
        %vm3035 = vcmp.lt.s32.totalorder %v3033, %v3034
        %v3036 = vsel %vm3035, %v3033, %v3034
        %v3037 = vrot.slane %v3036, 2
        %vm3038 = vcmp.lt.s32.totalorder %v3036, %v3037
        %v3039 = vsel %vm3038, %v3036, %v3037
        %v3040 = vrot.slane %v3039, 1
        %vm3041 = vcmp.lt.s32.totalorder %v3039, %v3040
        %v3042 = vsel %vm3041, %v3039, %v3040
        %vm3043 = vcmp.lt.s32.totalorder %v2909, %v2913
        %v3044 = vsel %vm3043, %v2909, %v2913
        %vm3045 = vcmp.lt.s32.totalorder %v2911, %v2915
        %v3046 = vsel %vm3045, %v2911, %v2915
        %vm3047 = vcmp.lt.s32.totalorder %v3044, %v2917
        %v3048 = vsel %vm3047, %v3044, %v2917
        %vm3049 = vcmp.lt.s32.totalorder %v3046, %v2919
        %v3050 = vsel %vm3049, %v3046, %v2919
        %vm3051 = vcmp.lt.s32.totalorder %v3048, %v2921
        %v3052 = vsel %vm3051, %v3048, %v2921
        %vm3053 = vcmp.lt.s32.totalorder %v3050, %v2923
        %v3054 = vsel %vm3053, %v3050, %v2923
        %vm3055 = vcmp.lt.s32.totalorder %v3052, %v2925
        %v3056 = vsel %vm3055, %v3052, %v2925
        %vm3057 = vcmp.lt.s32.totalorder %v3054, %v2927
        %v3058 = vsel %vm3057, %v3054, %v2927
        %vm3059 = vcmp.lt.s32.totalorder %v3056, %v2929
        %v3060 = vsel %vm3059, %v3056, %v2929
        %vm3061 = vcmp.lt.s32.totalorder %v3058, %v2931
        %v3062 = vsel %vm3061, %v3058, %v2931
        %vm3063 = vcmp.lt.s32.totalorder %v3060, %v2933
        %v3064 = vsel %vm3063, %v3060, %v2933
        %vm3065 = vcmp.lt.s32.totalorder %v3062, %v2935
        %v3066 = vsel %vm3065, %v3062, %v2935
        %vm3067 = vcmp.lt.s32.totalorder %v3064, %v2937
        %v3068 = vsel %vm3067, %v3064, %v2937
        %vm3069 = vcmp.lt.s32.totalorder %v3066, %v2939
        %v3070 = vsel %vm3069, %v3066, %v2939
        %vm3071 = vcmp.lt.s32.totalorder %v3068, %v2941
        %v3072 = vsel %vm3071, %v3068, %v2941
        %vm3073 = vcmp.lt.s32.totalorder %v3070, %v2943
        %v3074 = vsel %vm3073, %v3070, %v2943
        %vm3075 = vcmp.lt.s32.totalorder %v3072, %v2945
        %v3076 = vsel %vm3075, %v3072, %v2945
        %vm3077 = vcmp.lt.s32.totalorder %v3074, %v2947
        %v3078 = vsel %vm3077, %v3074, %v2947
        %vm3079 = vcmp.lt.s32.totalorder %v3076, %v2949
        %v3080 = vsel %vm3079, %v3076, %v2949
        %vm3081 = vcmp.lt.s32.totalorder %v3078, %v2951
        %v3082 = vsel %vm3081, %v3078, %v2951
        %vm3083 = vcmp.lt.s32.totalorder %v3080, %v2953
        %v3084 = vsel %vm3083, %v3080, %v2953
        %vm3085 = vcmp.lt.s32.totalorder %v3082, %v2955
        %v3086 = vsel %vm3085, %v3082, %v2955
        %vm3087 = vcmp.lt.s32.totalorder %v3084, %v2957
        %v3088 = vsel %vm3087, %v3084, %v2957
        %vm3089 = vcmp.lt.s32.totalorder %v3086, %v2959
        %v3090 = vsel %vm3089, %v3086, %v2959
        %vm3091 = vcmp.lt.s32.totalorder %v3088, %v2961
        %v3092 = vsel %vm3091, %v3088, %v2961
        %vm3093 = vcmp.lt.s32.totalorder %v3090, %v2963
        %v3094 = vsel %vm3093, %v3090, %v2963
        %vm3095 = vcmp.lt.s32.totalorder %v3092, %v2965
        %v3096 = vsel %vm3095, %v3092, %v2965
        %vm3097 = vcmp.lt.s32.totalorder %v3094, %v2967
        %v3098 = vsel %vm3097, %v3094, %v2967
        %vm3099 = vcmp.lt.s32.totalorder %v3096, %v2969
        %v3100 = vsel %vm3099, %v3096, %v2969
        %vm3101 = vcmp.lt.s32.totalorder %v3098, %v2971
        %v3102 = vsel %vm3101, %v3098, %v2971
        %vm3103 = vcmp.lt.s32.totalorder %v3100, %v3102
        %v3104 = vsel %vm3103, %v3100, %v3102
        %v3105 = vrot.slane %v3104, 4
        %vm3106 = vcmp.lt.s32.totalorder %v3104, %v3105
        %v3107 = vsel %vm3106, %v3104, %v3105
        %v3108 = vrot.slane %v3107, 2
        %vm3109 = vcmp.lt.s32.totalorder %v3107, %v3108
        %v3110 = vsel %vm3109, %v3107, %v3108
        %v3111 = vrot.slane %v3110, 1
        %vm3112 = vcmp.lt.s32.totalorder %v3110, %v3111
        %v3113 = vsel %vm3112, %v3110, %v3111
        %vm3114 = vcmp.eq.s32.totalorder %v2812, %v3042
        %vm3115 = vcmp.eq.s32.totalorder %v2812, %v3113
        %vm3116 = vcmp.eq.s32.totalorder %v2813, %v3042
        %vm3117 = vcmp.eq.s32.totalorder %v2813, %v3113
        %vm3118 = vcmp.eq.s32.totalorder %v2814, %v3042
        %vm3119 = vcmp.eq.s32.totalorder %v2814, %v3113
        %vm3120 = vcmp.eq.s32.totalorder %v2815, %v3042
        %vm3121 = vcmp.eq.s32.totalorder %v2815, %v3113
        %vm3122 = vcmp.eq.s32.totalorder %v2816, %v3042
        %vm3123 = vcmp.eq.s32.totalorder %v2816, %v3113
        %vm3124 = vcmp.eq.s32.totalorder %v2817, %v3042
        %vm3125 = vcmp.eq.s32.totalorder %v2817, %v3113
        %vm3126 = vcmp.eq.s32.totalorder %v2818, %v3042
        %vm3127 = vcmp.eq.s32.totalorder %v2818, %v3113
        %vm3128 = vcmp.eq.s32.totalorder %v2819, %v3042
        %vm3129 = vcmp.eq.s32.totalorder %v2819, %v3113
        %vm3130 = vcmp.eq.s32.totalorder %v2820, %v3042
        %vm3131 = vcmp.eq.s32.totalorder %v2820, %v3113
        %vm3132 = vcmp.eq.s32.totalorder %v2821, %v3042
        %vm3133 = vcmp.eq.s32.totalorder %v2821, %v3113
        %vm3134 = vcmp.eq.s32.totalorder %v2822, %v3042
        %vm3135 = vcmp.eq.s32.totalorder %v2822, %v3113
        %vm3136 = vcmp.eq.s32.totalorder %v2823, %v3042
        %vm3137 = vcmp.eq.s32.totalorder %v2823, %v3113
        %vm3138 = vcmp.eq.s32.totalorder %v2824, %v3042
        %vm3139 = vcmp.eq.s32.totalorder %v2824, %v3113
        %vm3140 = vcmp.eq.s32.totalorder %v2825, %v3042
        %vm3141 = vcmp.eq.s32.totalorder %v2825, %v3113
        %vm3142 = vcmp.eq.s32.totalorder %v2826, %v3042
        %vm3143 = vcmp.eq.s32.totalorder %v2826, %v3113
        %vm3144 = vcmp.eq.s32.totalorder %v2827, %v3042
        %vm3145 = vcmp.eq.s32.totalorder %v2827, %v3113
        %vm3146 = vcmp.eq.s32.totalorder %v2828, %v3042
        %vm3147 = vcmp.eq.s32.totalorder %v2828, %v3113
        %vm3148 = vcmp.eq.s32.totalorder %v2829, %v3042
        %vm3149 = vcmp.eq.s32.totalorder %v2829, %v3113
        %vm3150 = vcmp.eq.s32.totalorder %v2830, %v3042
        %vm3151 = vcmp.eq.s32.totalorder %v2830, %v3113
        %vm3152 = vcmp.eq.s32.totalorder %v2831, %v3042
        %vm3153 = vcmp.eq.s32.totalorder %v2831, %v3113
        %vm3154 = vcmp.eq.s32.totalorder %v2832, %v3042
        %vm3155 = vcmp.eq.s32.totalorder %v2832, %v3113
        %vm3156 = vcmp.eq.s32.totalorder %v2833, %v3042
        %vm3157 = vcmp.eq.s32.totalorder %v2833, %v3113
        %vm3158 = vcmp.eq.s32.totalorder %v2834, %v3042
        %vm3159 = vcmp.eq.s32.totalorder %v2834, %v3113
        %vm3160 = vcmp.eq.s32.totalorder %v2835, %v3042
        %vm3161 = vcmp.eq.s32.totalorder %v2835, %v3113
        %vm3162 = vcmp.eq.s32.totalorder %v2836, %v3042
        %vm3163 = vcmp.eq.s32.totalorder %v2836, %v3113
        %vm3164 = vcmp.eq.s32.totalorder %v2837, %v3042
        %vm3165 = vcmp.eq.s32.totalorder %v2837, %v3113
        %vm3166 = vcmp.eq.s32.totalorder %v2838, %v3042
        %vm3167 = vcmp.eq.s32.totalorder %v2838, %v3113
        %vm3168 = vcmp.eq.s32.totalorder %v2839, %v3042
        %vm3169 = vcmp.eq.s32.totalorder %v2839, %v3113
        %vm3170 = vcmp.eq.s32.totalorder %v2840, %v3042
        %vm3171 = vcmp.eq.s32.totalorder %v2840, %v3113
        %vm3172 = vcmp.eq.s32.totalorder %v2841, %v3042
        %vm3173 = vcmp.eq.s32.totalorder %v2841, %v3113
        %vm3174 = vcmp.eq.s32.totalorder %v2842, %v3042
        %vm3175 = vcmp.eq.s32.totalorder %v2842, %v3113
        %vm3176 = vcmp.eq.s32.totalorder %v2843, %v3042
        %vm3177 = vcmp.eq.s32.totalorder %v2843, %v3113
        %v3178 = vsel %vm3114, 1, 0
        %v3179 = vsel %vm3115, 1, 0
        %v3180 = vsel %vm3116, 1, 0
        %v3181 = vsel %vm3117, 1, 0
        %v3182 = vsel %vm3118, 1, 0
        %v3183 = vsel %vm3119, 1, 0
        %v3184 = vsel %vm3120, 1, 0
        %v3185 = vsel %vm3121, 1, 0
        %v3186 = vsel %vm3122, 1, 0
        %v3187 = vsel %vm3123, 1, 0
        %v3188 = vsel %vm3124, 1, 0
        %v3189 = vsel %vm3125, 1, 0
        %v3190 = vsel %vm3126, 1, 0
        %v3191 = vsel %vm3127, 1, 0
        %v3192 = vsel %vm3128, 1, 0
        %v3193 = vsel %vm3129, 1, 0
        %v3194 = vsel %vm3130, 1, 0
        %v3195 = vsel %vm3131, 1, 0
        %v3196 = vsel %vm3132, 1, 0
        %v3197 = vsel %vm3133, 1, 0
        %v3198 = vsel %vm3134, 1, 0
        %v3199 = vsel %vm3135, 1, 0
        %v3200 = vsel %vm3136, 1, 0
        %v3201 = vsel %vm3137, 1, 0
        %v3202 = vsel %vm3138, 1, 0
        %v3203 = vsel %vm3139, 1, 0
        %v3204 = vsel %vm3140, 1, 0
        %v3205 = vsel %vm3141, 1, 0
        %v3206 = vsel %vm3142, 1, 0
        %v3207 = vsel %vm3143, 1, 0
        %v3208 = vsel %vm3144, 1, 0
        %v3209 = vsel %vm3145, 1, 0
        %v3210 = vsel %vm3146, 1, 0
        %v3211 = vsel %vm3147, 1, 0
        %v3212 = vsel %vm3148, 1, 0
        %v3213 = vsel %vm3149, 1, 0
        %v3214 = vsel %vm3150, 1, 0
        %v3215 = vsel %vm3151, 1, 0
        %v3216 = vsel %vm3152, 1, 0
        %v3217 = vsel %vm3153, 1, 0
        %v3218 = vsel %vm3154, 1, 0
        %v3219 = vsel %vm3155, 1, 0
        %v3220 = vsel %vm3156, 1, 0
        %v3221 = vsel %vm3157, 1, 0
        %v3222 = vsel %vm3158, 1, 0
        %v3223 = vsel %vm3159, 1, 0
        %v3224 = vsel %vm3160, 1, 0
        %v3225 = vsel %vm3161, 1, 0
        %v3226 = vsel %vm3162, 1, 0
        %v3227 = vsel %vm3163, 1, 0
        %v3228 = vsel %vm3164, 1, 0
        %v3229 = vsel %vm3165, 1, 0
        %v3230 = vsel %vm3166, 1, 0
        %v3231 = vsel %vm3167, 1, 0
        %v3232 = vsel %vm3168, 1, 0
        %v3233 = vsel %vm3169, 1, 0
        %v3234 = vsel %vm3170, 1, 0
        %v3235 = vsel %vm3171, 1, 0
        %v3236 = vsel %vm3172, 1, 0
        %v3237 = vsel %vm3173, 1, 0
        %v3238 = vsel %vm3174, 1, 0
        %v3239 = vsel %vm3175, 1, 0
        %v3240 = vsel %vm3176, 1, 0
        %v3241 = vsel %vm3177, 1, 0
        %v3242 = vcvt.s32.f32 %v3178
        %v3243 = vcvt.s32.f32 %v3179
        %v3244 = vcvt.s32.f32 %v3180
        %v3245 = vcvt.s32.f32 %v3181
        %v3246 = vcvt.s32.f32 %v3182
        %v3247 = vcvt.s32.f32 %v3183
        %v3248 = vcvt.s32.f32 %v3184
        %v3249 = vcvt.s32.f32 %v3185
        %v3250 = vcvt.s32.f32 %v3186
        %v3251 = vcvt.s32.f32 %v3187
        %v3252 = vcvt.s32.f32 %v3188
        %v3253 = vcvt.s32.f32 %v3189
        %v3254 = vcvt.s32.f32 %v3190
        %v3255 = vcvt.s32.f32 %v3191
        %v3256 = vcvt.s32.f32 %v3192
        %v3257 = vcvt.s32.f32 %v3193
        %v3258 = vcvt.s32.f32 %v3194
        %v3259 = vcvt.s32.f32 %v3195
        %v3260 = vcvt.s32.f32 %v3196
        %v3261 = vcvt.s32.f32 %v3197
        %v3262 = vcvt.s32.f32 %v3198
        %v3263 = vcvt.s32.f32 %v3199
        %v3264 = vcvt.s32.f32 %v3200
        %v3265 = vcvt.s32.f32 %v3201
        %v3266 = vcvt.s32.f32 %v3202
        %v3267 = vcvt.s32.f32 %v3203
        %v3268 = vcvt.s32.f32 %v3204
        %v3269 = vcvt.s32.f32 %v3205
        %v3270 = vcvt.s32.f32 %v3206
        %v3271 = vcvt.s32.f32 %v3207
        %v3272 = vcvt.s32.f32 %v3208
        %v3273 = vcvt.s32.f32 %v3209
        %v3274 = vcvt.s32.f32 %v3210
        %v3275 = vcvt.s32.f32 %v3211
        %v3276 = vcvt.s32.f32 %v3212
        %v3277 = vcvt.s32.f32 %v3213
        %v3278 = vcvt.s32.f32 %v3214
        %v3279 = vcvt.s32.f32 %v3215
        %v3280 = vcvt.s32.f32 %v3216
        %v3281 = vcvt.s32.f32 %v3217
        %v3282 = vcvt.s32.f32 %v3218
        %v3283 = vcvt.s32.f32 %v3219
        %v3284 = vcvt.s32.f32 %v3220
        %v3285 = vcvt.s32.f32 %v3221
        %v3286 = vcvt.s32.f32 %v3222
        %v3287 = vcvt.s32.f32 %v3223
        %v3288 = vcvt.s32.f32 %v3224
        %v3289 = vcvt.s32.f32 %v3225
        %v3290 = vcvt.s32.f32 %v3226
        %v3291 = vcvt.s32.f32 %v3227
        %v3292 = vcvt.s32.f32 %v3228
        %v3293 = vcvt.s32.f32 %v3229
        %v3294 = vcvt.s32.f32 %v3230
        %v3295 = vcvt.s32.f32 %v3231
        %v3296 = vcvt.s32.f32 %v3232
        %v3297 = vcvt.s32.f32 %v3233
        %v3298 = vcvt.s32.f32 %v3234
        %v3299 = vcvt.s32.f32 %v3235
        %v3300 = vcvt.s32.f32 %v3236
        %v3301 = vcvt.s32.f32 %v3237
        %v3302 = vcvt.s32.f32 %v3238
        %v3303 = vcvt.s32.f32 %v3239
        %v3304 = vcvt.s32.f32 %v3240
        %v3305 = vcvt.s32.f32 %v3241
        %v3307 = vcombine.high %v392, %v392
        %v3309 = vand.u32 %v3273, 4294901760
        %3310 = vmatprep.subr.mxu0 %v3309
        %v3311 = vand.u32 %v3272, 4294901760
        %3312 = vmatpush1.msra.mxu0 %v3311
        %v3313 = vand.u32 %v3271, 4294901760
        %3314 = vmatprep.subr.mxu0 %v3313
        %v3315 = vand.u32 %v3270, 4294901760
        %3316 = vmatpush1.msra.mxu0 %v3315
        %v3317 = vand.u32 %v3269, 4294901760
        %3318 = vmatprep.subr.mxu0 %v3317
        %v3319 = vand.u32 %v3268, 4294901760
        %3320 = vmatpush1.msra.mxu0 %v3319
        %v3321 = vand.u32 %v3267, 4294901760
        %3322 = vmatprep.subr.mxu0 %v3321
        %v3323 = vand.u32 %v3266, 4294901760
        %3324 = vmatpush1.msra.mxu0 %v3323
        %v3325 = vand.u32 %v3265, 4294901760
        %3326 = vmatprep.subr.mxu0 %v3325
        %v3327 = vand.u32 %v3264, 4294901760
        %3328 = vmatpush1.msra.mxu0 %v3327
        %v3329 = vand.u32 %v3263, 4294901760
        %3330 = vmatprep.subr.mxu0 %v3329
        %v3331 = vand.u32 %v3262, 4294901760
        %3332 = vmatpush1.msra.mxu0 %v3331
        %v3333 = vand.u32 %v3261, 4294901760
        %3334 = vmatprep.subr.mxu0 %v3333
        %v3335 = vand.u32 %v3260, 4294901760
        %3336 = vmatpush1.msra.mxu0 %v3335
        %v3337 = vand.u32 %v3259, 4294901760
        %3338 = vmatprep.subr.mxu0 %v3337
        %v3339 = vand.u32 %v3258, 4294901760
        %3340 = vmatpush1.msra.mxu0 %v3339
        %v3341 = vand.u32 %v3257, 4294901760
        %3342 = vmatprep.subr.mxu0 %v3341
        %v3343 = vand.u32 %v3256, 4294901760
        %3344 = vmatpush1.msra.mxu0 %v3343
        %v3345 = vand.u32 %v3255, 4294901760
        %3346 = vmatprep.subr.mxu0 %v3345
        %v3347 = vand.u32 %v3254, 4294901760
        %3348 = vmatpush1.msra.mxu0 %v3347
        %v3349 = vand.u32 %v3253, 4294901760
        %3350 = vmatprep.subr.mxu0 %v3349
        %v3351 = vand.u32 %v3252, 4294901760
        %3352 = vmatpush1.msra.mxu0 %v3351
        %v3353 = vand.u32 %v3251, 4294901760
        %3354 = vmatprep.subr.mxu0 %v3353
        %v3355 = vand.u32 %v3250, 4294901760
        %3356 = vmatpush1.msra.mxu0 %v3355
        %v3357 = vand.u32 %v3249, 4294901760
        %3358 = vmatprep.subr.mxu0 %v3357
        %v3359 = vand.u32 %v3248, 4294901760
        %3360 = vmatpush1.msra.mxu0 %v3359
        %v3361 = vand.u32 %v3247, 4294901760
        %3362 = vmatprep.subr.mxu0 %v3361
        %v3363 = vand.u32 %v3246, 4294901760
        %3364 = vmatpush1.msra.mxu0 %v3363
        %v3365 = vand.u32 %v3245, 4294901760
        %3366 = vmatprep.subr.mxu0 %v3365
        %v3367 = vand.u32 %v3244, 4294901760
        %3368 = vmatpush1.msra.mxu0 %v3367
        %v3369 = vand.u32 %v3243, 4294901760
        %3370 = vmatprep.subr.mxu0 %v3369
        %v3371 = vand.u32 %v3242, 4294901760
        %3372 = vmatpush1.msra.mxu0 %v3371
        %v3373 = vand.u32 %v3305, 4294901760
        %3374 = vmatprep.subr.mxu0 %v3373
        %v3375 = vand.u32 %v3304, 4294901760
        %3376 = vmatpush2.msra.mxu0 %v3375
        %v3377 = vand.u32 %v3303, 4294901760
        %3378 = vmatprep.subr.mxu0 %v3377
        %v3379 = vand.u32 %v3302, 4294901760
        %3380 = vmatpush2.msra.mxu0 %v3379
        %v3381 = vand.u32 %v3301, 4294901760
        %3382 = vmatprep.subr.mxu0 %v3381
        %v3383 = vand.u32 %v3300, 4294901760
        %3384 = vmatpush2.msra.mxu0 %v3383
        %v3385 = vand.u32 %v3299, 4294901760
        %3386 = vmatprep.subr.mxu0 %v3385
        %v3387 = vand.u32 %v3298, 4294901760
        %3388 = vmatpush2.msra.mxu0 %v3387
        %v3389 = vand.u32 %v3297, 4294901760
        %3390 = vmatprep.subr.mxu0 %v3389
        %v3391 = vand.u32 %v3296, 4294901760
        %3392 = vmatpush2.msra.mxu0 %v3391
        %v3393 = vand.u32 %v3295, 4294901760
        %3394 = vmatprep.subr.mxu0 %v3393
        %v3395 = vand.u32 %v3294, 4294901760
        %3396 = vmatpush2.msra.mxu0 %v3395
        %v3397 = vand.u32 %v3293, 4294901760
        %3398 = vmatprep.subr.mxu0 %v3397
        %v3399 = vand.u32 %v3292, 4294901760
        %3400 = vmatpush2.msra.mxu0 %v3399
        %v3401 = vand.u32 %v3291, 4294901760
        %3402 = vmatprep.subr.mxu0 %v3401
        %v3403 = vand.u32 %v3290, 4294901760
        %3404 = vmatpush2.msra.mxu0 %v3403
        %v3405 = vand.u32 %v3289, 4294901760
        %3406 = vmatprep.subr.mxu0 %v3405
        %v3407 = vand.u32 %v3288, 4294901760
        %3408 = vmatpush2.msra.mxu0 %v3407
        %v3409 = vand.u32 %v3287, 4294901760
        %3410 = vmatprep.subr.mxu0 %v3409
        %v3411 = vand.u32 %v3286, 4294901760
        %3412 = vmatpush2.msra.mxu0 %v3411
        %v3413 = vand.u32 %v3285, 4294901760
        %3414 = vmatprep.subr.mxu0 %v3413
        %v3415 = vand.u32 %v3284, 4294901760
        %3416 = vmatpush2.msra.mxu0 %v3415
        %v3417 = vand.u32 %v3283, 4294901760
        %3418 = vmatprep.subr.mxu0 %v3417
        %v3419 = vand.u32 %v3282, 4294901760
        %3420 = vmatpush2.msra.mxu0 %v3419
        %v3421 = vand.u32 %v3281, 4294901760
        %3422 = vmatprep.subr.mxu0 %v3421
        %v3423 = vand.u32 %v3280, 4294901760
        %3424 = vmatpush2.msra.mxu0 %v3423
        %v3425 = vand.u32 %v3279, 4294901760
        %3426 = vmatprep.subr.mxu0 %v3425
        %v3427 = vand.u32 %v3278, 4294901760
        %3428 = vmatpush2.msra.mxu0 %v3427
        %v3429 = vand.u32 %v3277, 4294901760
        %3430 = vmatprep.subr.mxu0 %v3429
        %v3431 = vand.u32 %v3276, 4294901760
        %3432 = vmatpush2.msra.mxu0 %v3431
        %v3433 = vand.u32 %v3275, 4294901760
        %3434 = vmatprep.subr.mxu0 %v3433
        %v3435 = vand.u32 %v3274, 4294901760
        %3436 = vmatpush2.msra.mxu0 %v3435
        %v3437 = vand.u32 %v3307, 4294901760
        %v3438 = vsub.f32 %v3307, %v3437
        %v3439 = vand.u32 %v3438, 4294901760
        %v3440 = vsub.f32 %v3438, %v3439
        %v3441 = vand.u32 %v3440, 4294901760
        %3442 = vmatprep.mubr.f32.mxu0 %v3441
        %v3443 = vand.u32 %v392, 4294901760
        %v3444 = vsub.f32 %v392, %v3443
        %v3445 = vand.u32 %v3444, 4294901760
        %v3446 = vsub.f32 %v3444, %v3445
        %v3447 = vand.u32 %v3446, 4294901760
        %3448 = vmatmul.mubr.f32.gmra.mxu0 %v3447
        %v3449 = vpop.f32.mrf.mxu0
        %v3450 = vadd.f32 0.0, %v3449
        %v3451 = vpop.f32.mrf.mxu0
        %v3452 = vadd.f32 0.0, %v3451
        %3453 = vdwg.mxu0
        %v3454 = vand.u32 %v3273, 4294901760
        %v3455 = vsub.f32 %v3273, %v3454
        %v3456 = vand.u32 %v3455, 4294901760
        %v3457 = vsub.f32 %v3455, %v3456
        %v3458 = vand.u32 %v3457, 4294901760
        %3459 = vmatprep.subr.mxu0 %v3458
        %v3460 = vand.u32 %v3272, 4294901760
        %v3461 = vsub.f32 %v3272, %v3460
        %v3462 = vand.u32 %v3461, 4294901760
        %v3463 = vsub.f32 %v3461, %v3462
        %v3464 = vand.u32 %v3463, 4294901760
        %3465 = vmatpush1.msra.mxu0 %v3464
        %v3466 = vand.u32 %v3271, 4294901760
        %v3467 = vsub.f32 %v3271, %v3466
        %v3468 = vand.u32 %v3467, 4294901760
        %v3469 = vsub.f32 %v3467, %v3468
        %v3470 = vand.u32 %v3469, 4294901760
        %3471 = vmatprep.subr.mxu0 %v3470
        %v3472 = vand.u32 %v3270, 4294901760
        %v3473 = vsub.f32 %v3270, %v3472
        %v3474 = vand.u32 %v3473, 4294901760
        %v3475 = vsub.f32 %v3473, %v3474
        %v3476 = vand.u32 %v3475, 4294901760
        %3477 = vmatpush1.msra.mxu0 %v3476
        %v3478 = vand.u32 %v3269, 4294901760
        %v3479 = vsub.f32 %v3269, %v3478
        %v3480 = vand.u32 %v3479, 4294901760
        %v3481 = vsub.f32 %v3479, %v3480
        %v3482 = vand.u32 %v3481, 4294901760
        %3483 = vmatprep.subr.mxu0 %v3482
        %v3484 = vand.u32 %v3268, 4294901760
        %v3485 = vsub.f32 %v3268, %v3484
        %v3486 = vand.u32 %v3485, 4294901760
        %v3487 = vsub.f32 %v3485, %v3486
        %v3488 = vand.u32 %v3487, 4294901760
        %3489 = vmatpush1.msra.mxu0 %v3488
        %v3490 = vand.u32 %v3267, 4294901760
        %v3491 = vsub.f32 %v3267, %v3490
        %v3492 = vand.u32 %v3491, 4294901760
        %v3493 = vsub.f32 %v3491, %v3492
        %v3494 = vand.u32 %v3493, 4294901760
        %3495 = vmatprep.subr.mxu0 %v3494
        %v3496 = vand.u32 %v3266, 4294901760
        %v3497 = vsub.f32 %v3266, %v3496
        %v3498 = vand.u32 %v3497, 4294901760
        %v3499 = vsub.f32 %v3497, %v3498
        %v3500 = vand.u32 %v3499, 4294901760
        %3501 = vmatpush1.msra.mxu0 %v3500
        %v3502 = vand.u32 %v3265, 4294901760
        %v3503 = vsub.f32 %v3265, %v3502
        %v3504 = vand.u32 %v3503, 4294901760
        %v3505 = vsub.f32 %v3503, %v3504
        %v3506 = vand.u32 %v3505, 4294901760
        %3507 = vmatprep.subr.mxu0 %v3506
        %v3508 = vand.u32 %v3264, 4294901760
        %v3509 = vsub.f32 %v3264, %v3508
        %v3510 = vand.u32 %v3509, 4294901760
        %v3511 = vsub.f32 %v3509, %v3510
        %v3512 = vand.u32 %v3511, 4294901760
        %3513 = vmatpush1.msra.mxu0 %v3512
        %v3514 = vand.u32 %v3263, 4294901760
        %v3515 = vsub.f32 %v3263, %v3514
        %v3516 = vand.u32 %v3515, 4294901760
        %v3517 = vsub.f32 %v3515, %v3516
        %v3518 = vand.u32 %v3517, 4294901760
        %3519 = vmatprep.subr.mxu0 %v3518
        %v3520 = vand.u32 %v3262, 4294901760
        %v3521 = vsub.f32 %v3262, %v3520
        %v3522 = vand.u32 %v3521, 4294901760
        %v3523 = vsub.f32 %v3521, %v3522
        %v3524 = vand.u32 %v3523, 4294901760
        %3525 = vmatpush1.msra.mxu0 %v3524
        %v3526 = vand.u32 %v3261, 4294901760
        %v3527 = vsub.f32 %v3261, %v3526
        %v3528 = vand.u32 %v3527, 4294901760
        %v3529 = vsub.f32 %v3527, %v3528
        %v3530 = vand.u32 %v3529, 4294901760
        %3531 = vmatprep.subr.mxu0 %v3530
        %v3532 = vand.u32 %v3260, 4294901760
        %v3533 = vsub.f32 %v3260, %v3532
        %v3534 = vand.u32 %v3533, 4294901760
        %v3535 = vsub.f32 %v3533, %v3534
        %v3536 = vand.u32 %v3535, 4294901760
        %3537 = vmatpush1.msra.mxu0 %v3536
        %v3538 = vand.u32 %v3259, 4294901760
        %v3539 = vsub.f32 %v3259, %v3538
        %v3540 = vand.u32 %v3539, 4294901760
        %v3541 = vsub.f32 %v3539, %v3540
        %v3542 = vand.u32 %v3541, 4294901760
        %3543 = vmatprep.subr.mxu0 %v3542
        %v3544 = vand.u32 %v3258, 4294901760
        %v3545 = vsub.f32 %v3258, %v3544
        %v3546 = vand.u32 %v3545, 4294901760
        %v3547 = vsub.f32 %v3545, %v3546
        %v3548 = vand.u32 %v3547, 4294901760
        %3549 = vmatpush1.msra.mxu0 %v3548
        %v3550 = vand.u32 %v3257, 4294901760
        %v3551 = vsub.f32 %v3257, %v3550
        %v3552 = vand.u32 %v3551, 4294901760
        %v3553 = vsub.f32 %v3551, %v3552
        %v3554 = vand.u32 %v3553, 4294901760
        %3555 = vmatprep.subr.mxu0 %v3554
        %v3556 = vand.u32 %v3256, 4294901760
        %v3557 = vsub.f32 %v3256, %v3556
        %v3558 = vand.u32 %v3557, 4294901760
        %v3559 = vsub.f32 %v3557, %v3558
        %v3560 = vand.u32 %v3559, 4294901760
        %3561 = vmatpush1.msra.mxu0 %v3560
        %v3562 = vand.u32 %v3255, 4294901760
        %v3563 = vsub.f32 %v3255, %v3562
        %v3564 = vand.u32 %v3563, 4294901760
        %v3565 = vsub.f32 %v3563, %v3564
        %v3566 = vand.u32 %v3565, 4294901760
        %3567 = vmatprep.subr.mxu0 %v3566
        %v3568 = vand.u32 %v3254, 4294901760
        %v3569 = vsub.f32 %v3254, %v3568
        %v3570 = vand.u32 %v3569, 4294901760
        %v3571 = vsub.f32 %v3569, %v3570
        %v3572 = vand.u32 %v3571, 4294901760
        %3573 = vmatpush1.msra.mxu0 %v3572
        %v3574 = vand.u32 %v3253, 4294901760
        %v3575 = vsub.f32 %v3253, %v3574
        %v3576 = vand.u32 %v3575, 4294901760
        %v3577 = vsub.f32 %v3575, %v3576
        %v3578 = vand.u32 %v3577, 4294901760
        %3579 = vmatprep.subr.mxu0 %v3578
        %v3580 = vand.u32 %v3252, 4294901760
        %v3581 = vsub.f32 %v3252, %v3580
        %v3582 = vand.u32 %v3581, 4294901760
        %v3583 = vsub.f32 %v3581, %v3582
        %v3584 = vand.u32 %v3583, 4294901760
        %3585 = vmatpush1.msra.mxu0 %v3584
        %v3586 = vand.u32 %v3251, 4294901760
        %v3587 = vsub.f32 %v3251, %v3586
        %v3588 = vand.u32 %v3587, 4294901760
        %v3589 = vsub.f32 %v3587, %v3588
        %v3590 = vand.u32 %v3589, 4294901760
        %3591 = vmatprep.subr.mxu0 %v3590
        %v3592 = vand.u32 %v3250, 4294901760
        %v3593 = vsub.f32 %v3250, %v3592
        %v3594 = vand.u32 %v3593, 4294901760
        %v3595 = vsub.f32 %v3593, %v3594
        %v3596 = vand.u32 %v3595, 4294901760
        %3597 = vmatpush1.msra.mxu0 %v3596
        %v3598 = vand.u32 %v3249, 4294901760
        %v3599 = vsub.f32 %v3249, %v3598
        %v3600 = vand.u32 %v3599, 4294901760
        %v3601 = vsub.f32 %v3599, %v3600
        %v3602 = vand.u32 %v3601, 4294901760
        %3603 = vmatprep.subr.mxu0 %v3602
        %v3604 = vand.u32 %v3248, 4294901760
        %v3605 = vsub.f32 %v3248, %v3604
        %v3606 = vand.u32 %v3605, 4294901760
        %v3607 = vsub.f32 %v3605, %v3606
        %v3608 = vand.u32 %v3607, 4294901760
        %3609 = vmatpush1.msra.mxu0 %v3608
        %v3610 = vand.u32 %v3247, 4294901760
        %v3611 = vsub.f32 %v3247, %v3610
        %v3612 = vand.u32 %v3611, 4294901760
        %v3613 = vsub.f32 %v3611, %v3612
        %v3614 = vand.u32 %v3613, 4294901760
        %3615 = vmatprep.subr.mxu0 %v3614
        %v3616 = vand.u32 %v3246, 4294901760
        %v3617 = vsub.f32 %v3246, %v3616
        %v3618 = vand.u32 %v3617, 4294901760
        %v3619 = vsub.f32 %v3617, %v3618
        %v3620 = vand.u32 %v3619, 4294901760
        %3621 = vmatpush1.msra.mxu0 %v3620
        %v3622 = vand.u32 %v3245, 4294901760
        %v3623 = vsub.f32 %v3245, %v3622
        %v3624 = vand.u32 %v3623, 4294901760
        %v3625 = vsub.f32 %v3623, %v3624
        %v3626 = vand.u32 %v3625, 4294901760
        %3627 = vmatprep.subr.mxu0 %v3626
        %v3628 = vand.u32 %v3244, 4294901760
        %v3629 = vsub.f32 %v3244, %v3628
        %v3630 = vand.u32 %v3629, 4294901760
        %v3631 = vsub.f32 %v3629, %v3630
        %v3632 = vand.u32 %v3631, 4294901760
        %3633 = vmatpush1.msra.mxu0 %v3632
        %v3634 = vand.u32 %v3243, 4294901760
        %v3635 = vsub.f32 %v3243, %v3634
        %v3636 = vand.u32 %v3635, 4294901760
        %v3637 = vsub.f32 %v3635, %v3636
        %v3638 = vand.u32 %v3637, 4294901760
        %3639 = vmatprep.subr.mxu0 %v3638
        %v3640 = vand.u32 %v3242, 4294901760
        %v3641 = vsub.f32 %v3242, %v3640
        %v3642 = vand.u32 %v3641, 4294901760
        %v3643 = vsub.f32 %v3641, %v3642
        %v3644 = vand.u32 %v3643, 4294901760
        %3645 = vmatpush1.msra.mxu0 %v3644
        %v3646 = vand.u32 %v3305, 4294901760
        %v3647 = vsub.f32 %v3305, %v3646
        %v3648 = vand.u32 %v3647, 4294901760
        %v3649 = vsub.f32 %v3647, %v3648
        %v3650 = vand.u32 %v3649, 4294901760
        %3651 = vmatprep.subr.mxu0 %v3650
        %v3652 = vand.u32 %v3304, 4294901760
        %v3653 = vsub.f32 %v3304, %v3652
        %v3654 = vand.u32 %v3653, 4294901760
        %v3655 = vsub.f32 %v3653, %v3654
        %v3656 = vand.u32 %v3655, 4294901760
        %3657 = vmatpush2.msra.mxu0 %v3656
        %v3658 = vand.u32 %v3303, 4294901760
        %v3659 = vsub.f32 %v3303, %v3658
        %v3660 = vand.u32 %v3659, 4294901760
        %v3661 = vsub.f32 %v3659, %v3660
        %v3662 = vand.u32 %v3661, 4294901760
        %3663 = vmatprep.subr.mxu0 %v3662
        %v3664 = vand.u32 %v3302, 4294901760
        %v3665 = vsub.f32 %v3302, %v3664
        %v3666 = vand.u32 %v3665, 4294901760
        %v3667 = vsub.f32 %v3665, %v3666
        %v3668 = vand.u32 %v3667, 4294901760
        %3669 = vmatpush2.msra.mxu0 %v3668
        %v3670 = vand.u32 %v3301, 4294901760
        %v3671 = vsub.f32 %v3301, %v3670
        %v3672 = vand.u32 %v3671, 4294901760
        %v3673 = vsub.f32 %v3671, %v3672
        %v3674 = vand.u32 %v3673, 4294901760
        %3675 = vmatprep.subr.mxu0 %v3674
        %v3676 = vand.u32 %v3300, 4294901760
        %v3677 = vsub.f32 %v3300, %v3676
        %v3678 = vand.u32 %v3677, 4294901760
        %v3679 = vsub.f32 %v3677, %v3678
        %v3680 = vand.u32 %v3679, 4294901760
        %3681 = vmatpush2.msra.mxu0 %v3680
        %v3682 = vand.u32 %v3299, 4294901760
        %v3683 = vsub.f32 %v3299, %v3682
        %v3684 = vand.u32 %v3683, 4294901760
        %v3685 = vsub.f32 %v3683, %v3684
        %v3686 = vand.u32 %v3685, 4294901760
        %3687 = vmatprep.subr.mxu0 %v3686
        %v3688 = vand.u32 %v3298, 4294901760
        %v3689 = vsub.f32 %v3298, %v3688
        %v3690 = vand.u32 %v3689, 4294901760
        %v3691 = vsub.f32 %v3689, %v3690
        %v3692 = vand.u32 %v3691, 4294901760
        %3693 = vmatpush2.msra.mxu0 %v3692
        %v3694 = vand.u32 %v3297, 4294901760
        %v3695 = vsub.f32 %v3297, %v3694
        %v3696 = vand.u32 %v3695, 4294901760
        %v3697 = vsub.f32 %v3695, %v3696
        %v3698 = vand.u32 %v3697, 4294901760
        %3699 = vmatprep.subr.mxu0 %v3698
        %v3700 = vand.u32 %v3296, 4294901760
        %v3701 = vsub.f32 %v3296, %v3700
        %v3702 = vand.u32 %v3701, 4294901760
        %v3703 = vsub.f32 %v3701, %v3702
        %v3704 = vand.u32 %v3703, 4294901760
        %3705 = vmatpush2.msra.mxu0 %v3704
        %v3706 = vand.u32 %v3295, 4294901760
        %v3707 = vsub.f32 %v3295, %v3706
        %v3708 = vand.u32 %v3707, 4294901760
        %v3709 = vsub.f32 %v3707, %v3708
        %v3710 = vand.u32 %v3709, 4294901760
        %3711 = vmatprep.subr.mxu0 %v3710
        %v3712 = vand.u32 %v3294, 4294901760
        %v3713 = vsub.f32 %v3294, %v3712
        %v3714 = vand.u32 %v3713, 4294901760
        %v3715 = vsub.f32 %v3713, %v3714
        %v3716 = vand.u32 %v3715, 4294901760
        %3717 = vmatpush2.msra.mxu0 %v3716
        %v3718 = vand.u32 %v3293, 4294901760
        %v3719 = vsub.f32 %v3293, %v3718
        %v3720 = vand.u32 %v3719, 4294901760
        %v3721 = vsub.f32 %v3719, %v3720
        %v3722 = vand.u32 %v3721, 4294901760
        %3723 = vmatprep.subr.mxu0 %v3722
        %v3724 = vand.u32 %v3292, 4294901760
        %v3725 = vsub.f32 %v3292, %v3724
        %v3726 = vand.u32 %v3725, 4294901760
        %v3727 = vsub.f32 %v3725, %v3726
        %v3728 = vand.u32 %v3727, 4294901760
        %3729 = vmatpush2.msra.mxu0 %v3728
        %v3730 = vand.u32 %v3291, 4294901760
        %v3731 = vsub.f32 %v3291, %v3730
        %v3732 = vand.u32 %v3731, 4294901760
        %v3733 = vsub.f32 %v3731, %v3732
        %v3734 = vand.u32 %v3733, 4294901760
        %3735 = vmatprep.subr.mxu0 %v3734
        %v3736 = vand.u32 %v3290, 4294901760
        %v3737 = vsub.f32 %v3290, %v3736
        %v3738 = vand.u32 %v3737, 4294901760
        %v3739 = vsub.f32 %v3737, %v3738
        %v3740 = vand.u32 %v3739, 4294901760
        %3741 = vmatpush2.msra.mxu0 %v3740
        %v3742 = vand.u32 %v3289, 4294901760
        %v3743 = vsub.f32 %v3289, %v3742
        %v3744 = vand.u32 %v3743, 4294901760
        %v3745 = vsub.f32 %v3743, %v3744
        %v3746 = vand.u32 %v3745, 4294901760
        %3747 = vmatprep.subr.mxu0 %v3746
        %v3748 = vand.u32 %v3288, 4294901760
        %v3749 = vsub.f32 %v3288, %v3748
        %v3750 = vand.u32 %v3749, 4294901760
        %v3751 = vsub.f32 %v3749, %v3750
        %v3752 = vand.u32 %v3751, 4294901760
        %3753 = vmatpush2.msra.mxu0 %v3752
        %v3754 = vand.u32 %v3287, 4294901760
        %v3755 = vsub.f32 %v3287, %v3754
        %v3756 = vand.u32 %v3755, 4294901760
        %v3757 = vsub.f32 %v3755, %v3756
        %v3758 = vand.u32 %v3757, 4294901760
        %3759 = vmatprep.subr.mxu0 %v3758
        %v3760 = vand.u32 %v3286, 4294901760
        %v3761 = vsub.f32 %v3286, %v3760
        %v3762 = vand.u32 %v3761, 4294901760
        %v3763 = vsub.f32 %v3761, %v3762
        %v3764 = vand.u32 %v3763, 4294901760
        %3765 = vmatpush2.msra.mxu0 %v3764
        %v3766 = vand.u32 %v3285, 4294901760
        %v3767 = vsub.f32 %v3285, %v3766
        %v3768 = vand.u32 %v3767, 4294901760
        %v3769 = vsub.f32 %v3767, %v3768
        %v3770 = vand.u32 %v3769, 4294901760
        %3771 = vmatprep.subr.mxu0 %v3770
        %v3772 = vand.u32 %v3284, 4294901760
        %v3773 = vsub.f32 %v3284, %v3772
        %v3774 = vand.u32 %v3773, 4294901760
        %v3775 = vsub.f32 %v3773, %v3774
        %v3776 = vand.u32 %v3775, 4294901760
        %3777 = vmatpush2.msra.mxu0 %v3776
        %v3778 = vand.u32 %v3283, 4294901760
        %v3779 = vsub.f32 %v3283, %v3778
        %v3780 = vand.u32 %v3779, 4294901760
        %v3781 = vsub.f32 %v3779, %v3780
        %v3782 = vand.u32 %v3781, 4294901760
        %3783 = vmatprep.subr.mxu0 %v3782
        %v3784 = vand.u32 %v3282, 4294901760
        %v3785 = vsub.f32 %v3282, %v3784
        %v3786 = vand.u32 %v3785, 4294901760
        %v3787 = vsub.f32 %v3785, %v3786
        %v3788 = vand.u32 %v3787, 4294901760
        %3789 = vmatpush2.msra.mxu0 %v3788
        %v3790 = vand.u32 %v3281, 4294901760
        %v3791 = vsub.f32 %v3281, %v3790
        %v3792 = vand.u32 %v3791, 4294901760
        %v3793 = vsub.f32 %v3791, %v3792
        %v3794 = vand.u32 %v3793, 4294901760
        %3795 = vmatprep.subr.mxu0 %v3794
        %v3796 = vand.u32 %v3280, 4294901760
        %v3797 = vsub.f32 %v3280, %v3796
        %v3798 = vand.u32 %v3797, 4294901760
        %v3799 = vsub.f32 %v3797, %v3798
        %v3800 = vand.u32 %v3799, 4294901760
        %3801 = vmatpush2.msra.mxu0 %v3800
        %v3802 = vand.u32 %v3279, 4294901760
        %v3803 = vsub.f32 %v3279, %v3802
        %v3804 = vand.u32 %v3803, 4294901760
        %v3805 = vsub.f32 %v3803, %v3804
        %v3806 = vand.u32 %v3805, 4294901760
        %3807 = vmatprep.subr.mxu0 %v3806
        %v3808 = vand.u32 %v3278, 4294901760
        %v3809 = vsub.f32 %v3278, %v3808
        %v3810 = vand.u32 %v3809, 4294901760
        %v3811 = vsub.f32 %v3809, %v3810
        %v3812 = vand.u32 %v3811, 4294901760
        %3813 = vmatpush2.msra.mxu0 %v3812
        %v3814 = vand.u32 %v3277, 4294901760
        %v3815 = vsub.f32 %v3277, %v3814
        %v3816 = vand.u32 %v3815, 4294901760
        %v3817 = vsub.f32 %v3815, %v3816
        %v3818 = vand.u32 %v3817, 4294901760
        %3819 = vmatprep.subr.mxu0 %v3818
        %v3820 = vand.u32 %v3276, 4294901760
        %v3821 = vsub.f32 %v3276, %v3820
        %v3822 = vand.u32 %v3821, 4294901760
        %v3823 = vsub.f32 %v3821, %v3822
        %v3824 = vand.u32 %v3823, 4294901760
        %3825 = vmatpush2.msra.mxu0 %v3824
        %v3826 = vand.u32 %v3275, 4294901760
        %v3827 = vsub.f32 %v3275, %v3826
        %v3828 = vand.u32 %v3827, 4294901760
        %v3829 = vsub.f32 %v3827, %v3828
        %v3830 = vand.u32 %v3829, 4294901760
        %3831 = vmatprep.subr.mxu0 %v3830
        %v3832 = vand.u32 %v3274, 4294901760
        %v3833 = vsub.f32 %v3274, %v3832
        %v3834 = vand.u32 %v3833, 4294901760
        %v3835 = vsub.f32 %v3833, %v3834
        %v3836 = vand.u32 %v3835, 4294901760
        %3837 = vmatpush2.msra.mxu0 %v3836
        %v3838 = vand.u32 %v3307, 4294901760
        %3839 = vmatprep.mubr.f32.mxu0 %v3838
        %v3840 = vand.u32 %v392, 4294901760
        %3841 = vmatmul.mubr.f32.gmra.mxu0 %v3840
        %v3842 = vpop.f32.mrf.mxu0
        %v3843 = vadd.f32 %v3450, %v3842
        %v3844 = vpop.f32.mrf.mxu0
        %v3845 = vadd.f32 %v3452, %v3844
        %3846 = vdwg.mxu0
        %v3847 = vand.u32 %v3273, 4294901760
        %v3848 = vsub.f32 %v3273, %v3847
        %3849 = vmatprep.subr.mxu0 %v3848
        %v3850 = vand.u32 %v3272, 4294901760
        %v3851 = vsub.f32 %v3272, %v3850
        %3852 = vmatpush1.msra.mxu0 %v3851
        %v3853 = vand.u32 %v3271, 4294901760
        %v3854 = vsub.f32 %v3271, %v3853
        %3855 = vmatprep.subr.mxu0 %v3854
        %v3856 = vand.u32 %v3270, 4294901760
        %v3857 = vsub.f32 %v3270, %v3856
        %3858 = vmatpush1.msra.mxu0 %v3857
        %v3859 = vand.u32 %v3269, 4294901760
        %v3860 = vsub.f32 %v3269, %v3859
        %3861 = vmatprep.subr.mxu0 %v3860
        %v3862 = vand.u32 %v3268, 4294901760
        %v3863 = vsub.f32 %v3268, %v3862
        %3864 = vmatpush1.msra.mxu0 %v3863
        %v3865 = vand.u32 %v3267, 4294901760
        %v3866 = vsub.f32 %v3267, %v3865
        %3867 = vmatprep.subr.mxu0 %v3866
        %v3868 = vand.u32 %v3266, 4294901760
        %v3869 = vsub.f32 %v3266, %v3868
        %3870 = vmatpush1.msra.mxu0 %v3869
        %v3871 = vand.u32 %v3265, 4294901760
        %v3872 = vsub.f32 %v3265, %v3871
        %3873 = vmatprep.subr.mxu0 %v3872
        %v3874 = vand.u32 %v3264, 4294901760
        %v3875 = vsub.f32 %v3264, %v3874
        %3876 = vmatpush1.msra.mxu0 %v3875
        %v3877 = vand.u32 %v3263, 4294901760
        %v3878 = vsub.f32 %v3263, %v3877
        %3879 = vmatprep.subr.mxu0 %v3878
        %v3880 = vand.u32 %v3262, 4294901760
        %v3881 = vsub.f32 %v3262, %v3880
        %3882 = vmatpush1.msra.mxu0 %v3881
        %v3883 = vand.u32 %v3261, 4294901760
        %v3884 = vsub.f32 %v3261, %v3883
        %3885 = vmatprep.subr.mxu0 %v3884
        %v3886 = vand.u32 %v3260, 4294901760
        %v3887 = vsub.f32 %v3260, %v3886
        %3888 = vmatpush1.msra.mxu0 %v3887
        %v3889 = vand.u32 %v3259, 4294901760
        %v3890 = vsub.f32 %v3259, %v3889
        %3891 = vmatprep.subr.mxu0 %v3890
        %v3892 = vand.u32 %v3258, 4294901760
        %v3893 = vsub.f32 %v3258, %v3892
        %3894 = vmatpush1.msra.mxu0 %v3893
        %v3895 = vand.u32 %v3257, 4294901760
        %v3896 = vsub.f32 %v3257, %v3895
        %3897 = vmatprep.subr.mxu0 %v3896
        %v3898 = vand.u32 %v3256, 4294901760
        %v3899 = vsub.f32 %v3256, %v3898
        %3900 = vmatpush1.msra.mxu0 %v3899
        %v3901 = vand.u32 %v3255, 4294901760
        %v3902 = vsub.f32 %v3255, %v3901
        %3903 = vmatprep.subr.mxu0 %v3902
        %v3904 = vand.u32 %v3254, 4294901760
        %v3905 = vsub.f32 %v3254, %v3904
        %3906 = vmatpush1.msra.mxu0 %v3905
        %v3907 = vand.u32 %v3253, 4294901760
        %v3908 = vsub.f32 %v3253, %v3907
        %3909 = vmatprep.subr.mxu0 %v3908
        %v3910 = vand.u32 %v3252, 4294901760
        %v3911 = vsub.f32 %v3252, %v3910
        %3912 = vmatpush1.msra.mxu0 %v3911
        %v3913 = vand.u32 %v3251, 4294901760
        %v3914 = vsub.f32 %v3251, %v3913
        %3915 = vmatprep.subr.mxu0 %v3914
        %v3916 = vand.u32 %v3250, 4294901760
        %v3917 = vsub.f32 %v3250, %v3916
        %3918 = vmatpush1.msra.mxu0 %v3917
        %v3919 = vand.u32 %v3249, 4294901760
        %v3920 = vsub.f32 %v3249, %v3919
        %3921 = vmatprep.subr.mxu0 %v3920
        %v3922 = vand.u32 %v3248, 4294901760
        %v3923 = vsub.f32 %v3248, %v3922
        %3924 = vmatpush1.msra.mxu0 %v3923
        %v3925 = vand.u32 %v3247, 4294901760
        %v3926 = vsub.f32 %v3247, %v3925
        %3927 = vmatprep.subr.mxu0 %v3926
        %v3928 = vand.u32 %v3246, 4294901760
        %v3929 = vsub.f32 %v3246, %v3928
        %3930 = vmatpush1.msra.mxu0 %v3929
        %v3931 = vand.u32 %v3245, 4294901760
        %v3932 = vsub.f32 %v3245, %v3931
        %3933 = vmatprep.subr.mxu0 %v3932
        %v3934 = vand.u32 %v3244, 4294901760
        %v3935 = vsub.f32 %v3244, %v3934
        %3936 = vmatpush1.msra.mxu0 %v3935
        %v3937 = vand.u32 %v3243, 4294901760
        %v3938 = vsub.f32 %v3243, %v3937
        %3939 = vmatprep.subr.mxu0 %v3938
        %v3940 = vand.u32 %v3242, 4294901760
        %v3941 = vsub.f32 %v3242, %v3940
        %3942 = vmatpush1.msra.mxu0 %v3941
        %v3943 = vand.u32 %v3305, 4294901760
        %v3944 = vsub.f32 %v3305, %v3943
        %3945 = vmatprep.subr.mxu0 %v3944
        %v3946 = vand.u32 %v3304, 4294901760
        %v3947 = vsub.f32 %v3304, %v3946
        %3948 = vmatpush2.msra.mxu0 %v3947
        %v3949 = vand.u32 %v3303, 4294901760
        %v3950 = vsub.f32 %v3303, %v3949
        %3951 = vmatprep.subr.mxu0 %v3950
        %v3952 = vand.u32 %v3302, 4294901760
        %v3953 = vsub.f32 %v3302, %v3952
        %3954 = vmatpush2.msra.mxu0 %v3953
        %v3955 = vand.u32 %v3301, 4294901760
        %v3956 = vsub.f32 %v3301, %v3955
        %3957 = vmatprep.subr.mxu0 %v3956
        %v3958 = vand.u32 %v3300, 4294901760
        %v3959 = vsub.f32 %v3300, %v3958
        %3960 = vmatpush2.msra.mxu0 %v3959
        %v3961 = vand.u32 %v3299, 4294901760
        %v3962 = vsub.f32 %v3299, %v3961
        %3963 = vmatprep.subr.mxu0 %v3962
        %v3964 = vand.u32 %v3298, 4294901760
        %v3965 = vsub.f32 %v3298, %v3964
        %3966 = vmatpush2.msra.mxu0 %v3965
        %v3967 = vand.u32 %v3297, 4294901760
        %v3968 = vsub.f32 %v3297, %v3967
        %3969 = vmatprep.subr.mxu0 %v3968
        %v3970 = vand.u32 %v3296, 4294901760
        %v3971 = vsub.f32 %v3296, %v3970
        %3972 = vmatpush2.msra.mxu0 %v3971
        %v3973 = vand.u32 %v3295, 4294901760
        %v3974 = vsub.f32 %v3295, %v3973
        %3975 = vmatprep.subr.mxu0 %v3974
        %v3976 = vand.u32 %v3294, 4294901760
        %v3977 = vsub.f32 %v3294, %v3976
        %3978 = vmatpush2.msra.mxu0 %v3977
        %v3979 = vand.u32 %v3293, 4294901760
        %v3980 = vsub.f32 %v3293, %v3979
        %3981 = vmatprep.subr.mxu0 %v3980
        %v3982 = vand.u32 %v3292, 4294901760
        %v3983 = vsub.f32 %v3292, %v3982
        %3984 = vmatpush2.msra.mxu0 %v3983
        %v3985 = vand.u32 %v3291, 4294901760
        %v3986 = vsub.f32 %v3291, %v3985
        %3987 = vmatprep.subr.mxu0 %v3986
        %v3988 = vand.u32 %v3290, 4294901760
        %v3989 = vsub.f32 %v3290, %v3988
        %3990 = vmatpush2.msra.mxu0 %v3989
        %v3991 = vand.u32 %v3289, 4294901760
        %v3992 = vsub.f32 %v3289, %v3991
        %3993 = vmatprep.subr.mxu0 %v3992
        %v3994 = vand.u32 %v3288, 4294901760
        %v3995 = vsub.f32 %v3288, %v3994
        %3996 = vmatpush2.msra.mxu0 %v3995
        %v3997 = vand.u32 %v3287, 4294901760
        %v3998 = vsub.f32 %v3287, %v3997
        %3999 = vmatprep.subr.mxu0 %v3998
        %v4000 = vand.u32 %v3286, 4294901760
        %v4001 = vsub.f32 %v3286, %v4000
        %4002 = vmatpush2.msra.mxu0 %v4001
        %v4003 = vand.u32 %v3285, 4294901760
        %v4004 = vsub.f32 %v3285, %v4003
        %4005 = vmatprep.subr.mxu0 %v4004
        %v4006 = vand.u32 %v3284, 4294901760
        %v4007 = vsub.f32 %v3284, %v4006
        %4008 = vmatpush2.msra.mxu0 %v4007
        %v4009 = vand.u32 %v3283, 4294901760
        %v4010 = vsub.f32 %v3283, %v4009
        %4011 = vmatprep.subr.mxu0 %v4010
        %v4012 = vand.u32 %v3282, 4294901760
        %v4013 = vsub.f32 %v3282, %v4012
        %4014 = vmatpush2.msra.mxu0 %v4013
        %v4015 = vand.u32 %v3281, 4294901760
        %v4016 = vsub.f32 %v3281, %v4015
        %4017 = vmatprep.subr.mxu0 %v4016
        %v4018 = vand.u32 %v3280, 4294901760
        %v4019 = vsub.f32 %v3280, %v4018
        %4020 = vmatpush2.msra.mxu0 %v4019
        %v4021 = vand.u32 %v3279, 4294901760
        %v4022 = vsub.f32 %v3279, %v4021
        %4023 = vmatprep.subr.mxu0 %v4022
        %v4024 = vand.u32 %v3278, 4294901760
        %v4025 = vsub.f32 %v3278, %v4024
        %4026 = vmatpush2.msra.mxu0 %v4025
        %v4027 = vand.u32 %v3277, 4294901760
        %v4028 = vsub.f32 %v3277, %v4027
        %4029 = vmatprep.subr.mxu0 %v4028
        %v4030 = vand.u32 %v3276, 4294901760
        %v4031 = vsub.f32 %v3276, %v4030
        %4032 = vmatpush2.msra.mxu0 %v4031
        %v4033 = vand.u32 %v3275, 4294901760
        %v4034 = vsub.f32 %v3275, %v4033
        %4035 = vmatprep.subr.mxu0 %v4034
        %v4036 = vand.u32 %v3274, 4294901760
        %v4037 = vsub.f32 %v3274, %v4036
        %4038 = vmatpush2.msra.mxu0 %v4037
        %v4039 = vand.u32 %v3307, 4294901760
        %v4040 = vsub.f32 %v3307, %v4039
        %4041 = vmatprep.mubr.f32.mxu0 %v4040
        %v4042 = vand.u32 %v392, 4294901760
        %v4043 = vsub.f32 %v392, %v4042
        %4044 = vmatmul.mubr.f32.gmra.mxu0 %v4043
        %v4045 = vpop.f32.mrf.mxu0
        %v4046 = vadd.f32 %v3843, %v4045
        %v4047 = vpop.f32.mrf.mxu0
        %v4048 = vadd.f32 %v3845, %v4047
        %4049 = vdwg.mxu0
        %v4050 = vand.u32 %v3273, 4294901760
        %4051 = vmatprep.subr.mxu0 %v4050
        %v4052 = vand.u32 %v3272, 4294901760
        %4053 = vmatpush1.msra.mxu0 %v4052
        %v4054 = vand.u32 %v3271, 4294901760
        %4055 = vmatprep.subr.mxu0 %v4054
        %v4056 = vand.u32 %v3270, 4294901760
        %4057 = vmatpush1.msra.mxu0 %v4056
        %v4058 = vand.u32 %v3269, 4294901760
        %4059 = vmatprep.subr.mxu0 %v4058
        %v4060 = vand.u32 %v3268, 4294901760
        %4061 = vmatpush1.msra.mxu0 %v4060
        %v4062 = vand.u32 %v3267, 4294901760
        %4063 = vmatprep.subr.mxu0 %v4062
        %v4064 = vand.u32 %v3266, 4294901760
        %4065 = vmatpush1.msra.mxu0 %v4064
        %v4066 = vand.u32 %v3265, 4294901760
        %4067 = vmatprep.subr.mxu0 %v4066
        %v4068 = vand.u32 %v3264, 4294901760
        %4069 = vmatpush1.msra.mxu0 %v4068
        %v4070 = vand.u32 %v3263, 4294901760
        %4071 = vmatprep.subr.mxu0 %v4070
        %v4072 = vand.u32 %v3262, 4294901760
        %4073 = vmatpush1.msra.mxu0 %v4072
        %v4074 = vand.u32 %v3261, 4294901760
        %4075 = vmatprep.subr.mxu0 %v4074
        %v4076 = vand.u32 %v3260, 4294901760
        %4077 = vmatpush1.msra.mxu0 %v4076
        %v4078 = vand.u32 %v3259, 4294901760
        %4079 = vmatprep.subr.mxu0 %v4078
        %v4080 = vand.u32 %v3258, 4294901760
        %4081 = vmatpush1.msra.mxu0 %v4080
        %v4082 = vand.u32 %v3257, 4294901760
        %4083 = vmatprep.subr.mxu0 %v4082
        %v4084 = vand.u32 %v3256, 4294901760
        %4085 = vmatpush1.msra.mxu0 %v4084
        %v4086 = vand.u32 %v3255, 4294901760
        %4087 = vmatprep.subr.mxu0 %v4086
        %v4088 = vand.u32 %v3254, 4294901760
        %4089 = vmatpush1.msra.mxu0 %v4088
        %v4090 = vand.u32 %v3253, 4294901760
        %4091 = vmatprep.subr.mxu0 %v4090
        %v4092 = vand.u32 %v3252, 4294901760
        %4093 = vmatpush1.msra.mxu0 %v4092
        %v4094 = vand.u32 %v3251, 4294901760
        %4095 = vmatprep.subr.mxu0 %v4094
        %v4096 = vand.u32 %v3250, 4294901760
        %4097 = vmatpush1.msra.mxu0 %v4096
        %v4098 = vand.u32 %v3249, 4294901760
        %4099 = vmatprep.subr.mxu0 %v4098
        %v4100 = vand.u32 %v3248, 4294901760
        %4101 = vmatpush1.msra.mxu0 %v4100
        %v4102 = vand.u32 %v3247, 4294901760
        %4103 = vmatprep.subr.mxu0 %v4102
        %v4104 = vand.u32 %v3246, 4294901760
        %4105 = vmatpush1.msra.mxu0 %v4104
        %v4106 = vand.u32 %v3245, 4294901760
        %4107 = vmatprep.subr.mxu0 %v4106
        %v4108 = vand.u32 %v3244, 4294901760
        %4109 = vmatpush1.msra.mxu0 %v4108
        %v4110 = vand.u32 %v3243, 4294901760
        %4111 = vmatprep.subr.mxu0 %v4110
        %v4112 = vand.u32 %v3242, 4294901760
        %4113 = vmatpush1.msra.mxu0 %v4112
        %v4114 = vand.u32 %v3305, 4294901760
        %4115 = vmatprep.subr.mxu0 %v4114
        %v4116 = vand.u32 %v3304, 4294901760
        %4117 = vmatpush2.msra.mxu0 %v4116
        %v4118 = vand.u32 %v3303, 4294901760
        %4119 = vmatprep.subr.mxu0 %v4118
        %v4120 = vand.u32 %v3302, 4294901760
        %4121 = vmatpush2.msra.mxu0 %v4120
        %v4122 = vand.u32 %v3301, 4294901760
        %4123 = vmatprep.subr.mxu0 %v4122
        %v4124 = vand.u32 %v3300, 4294901760
        %4125 = vmatpush2.msra.mxu0 %v4124
        %v4126 = vand.u32 %v3299, 4294901760
        %4127 = vmatprep.subr.mxu0 %v4126
        %v4128 = vand.u32 %v3298, 4294901760
        %4129 = vmatpush2.msra.mxu0 %v4128
        %v4130 = vand.u32 %v3297, 4294901760
        %4131 = vmatprep.subr.mxu0 %v4130
        %v4132 = vand.u32 %v3296, 4294901760
        %4133 = vmatpush2.msra.mxu0 %v4132
        %v4134 = vand.u32 %v3295, 4294901760
        %4135 = vmatprep.subr.mxu0 %v4134
        %v4136 = vand.u32 %v3294, 4294901760
        %4137 = vmatpush2.msra.mxu0 %v4136
        %v4138 = vand.u32 %v3293, 4294901760
        %4139 = vmatprep.subr.mxu0 %v4138
        %v4140 = vand.u32 %v3292, 4294901760
        %4141 = vmatpush2.msra.mxu0 %v4140
        %v4142 = vand.u32 %v3291, 4294901760
        %4143 = vmatprep.subr.mxu0 %v4142
        %v4144 = vand.u32 %v3290, 4294901760
        %4145 = vmatpush2.msra.mxu0 %v4144
        %v4146 = vand.u32 %v3289, 4294901760
        %4147 = vmatprep.subr.mxu0 %v4146
        %v4148 = vand.u32 %v3288, 4294901760
        %4149 = vmatpush2.msra.mxu0 %v4148
        %v4150 = vand.u32 %v3287, 4294901760
        %4151 = vmatprep.subr.mxu0 %v4150
        %v4152 = vand.u32 %v3286, 4294901760
        %4153 = vmatpush2.msra.mxu0 %v4152
        %v4154 = vand.u32 %v3285, 4294901760
        %4155 = vmatprep.subr.mxu0 %v4154
        %v4156 = vand.u32 %v3284, 4294901760
        %4157 = vmatpush2.msra.mxu0 %v4156
        %v4158 = vand.u32 %v3283, 4294901760
        %4159 = vmatprep.subr.mxu0 %v4158
        %v4160 = vand.u32 %v3282, 4294901760
        %4161 = vmatpush2.msra.mxu0 %v4160
        %v4162 = vand.u32 %v3281, 4294901760
        %4163 = vmatprep.subr.mxu0 %v4162
        %v4164 = vand.u32 %v3280, 4294901760
        %4165 = vmatpush2.msra.mxu0 %v4164
        %v4166 = vand.u32 %v3279, 4294901760
        %4167 = vmatprep.subr.mxu0 %v4166
        %v4168 = vand.u32 %v3278, 4294901760
        %4169 = vmatpush2.msra.mxu0 %v4168
        %v4170 = vand.u32 %v3277, 4294901760
        %4171 = vmatprep.subr.mxu0 %v4170
        %v4172 = vand.u32 %v3276, 4294901760
        %4173 = vmatpush2.msra.mxu0 %v4172
        %v4174 = vand.u32 %v3275, 4294901760
        %4175 = vmatprep.subr.mxu0 %v4174
        %v4176 = vand.u32 %v3274, 4294901760
        %4177 = vmatpush2.msra.mxu0 %v4176
        %v4178 = vand.u32 %v3307, 4294901760
        %v4179 = vsub.f32 %v3307, %v4178
        %v4180 = vand.u32 %v4179, 4294901760
        %4181 = vmatprep.mubr.f32.mxu0 %v4180
        %v4182 = vand.u32 %v392, 4294901760
        %v4183 = vsub.f32 %v392, %v4182
        %v4184 = vand.u32 %v4183, 4294901760
        %4185 = vmatmul.mubr.f32.gmra.mxu0 %v4184
        %v4186 = vpop.f32.mrf.mxu0
        %v4187 = vadd.f32 %v4046, %v4186
        %v4188 = vpop.f32.mrf.mxu0
        %v4189 = vadd.f32 %v4048, %v4188
        %4190 = vdwg.mxu0
        %v4191 = vand.u32 %v3273, 4294901760
        %v4192 = vsub.f32 %v3273, %v4191
        %v4193 = vand.u32 %v4192, 4294901760
        %4194 = vmatprep.subr.mxu0 %v4193
        %v4195 = vand.u32 %v3272, 4294901760
        %v4196 = vsub.f32 %v3272, %v4195
        %v4197 = vand.u32 %v4196, 4294901760
        %4198 = vmatpush1.msra.mxu0 %v4197
        %v4199 = vand.u32 %v3271, 4294901760
        %v4200 = vsub.f32 %v3271, %v4199
        %v4201 = vand.u32 %v4200, 4294901760
        %4202 = vmatprep.subr.mxu0 %v4201
        %v4203 = vand.u32 %v3270, 4294901760
        %v4204 = vsub.f32 %v3270, %v4203
        %v4205 = vand.u32 %v4204, 4294901760
        %4206 = vmatpush1.msra.mxu0 %v4205
        %v4207 = vand.u32 %v3269, 4294901760
        %v4208 = vsub.f32 %v3269, %v4207
        %v4209 = vand.u32 %v4208, 4294901760
        %4210 = vmatprep.subr.mxu0 %v4209
        %v4211 = vand.u32 %v3268, 4294901760
        %v4212 = vsub.f32 %v3268, %v4211
        %v4213 = vand.u32 %v4212, 4294901760
        %4214 = vmatpush1.msra.mxu0 %v4213
        %v4215 = vand.u32 %v3267, 4294901760
        %v4216 = vsub.f32 %v3267, %v4215
        %v4217 = vand.u32 %v4216, 4294901760
        %4218 = vmatprep.subr.mxu0 %v4217
        %v4219 = vand.u32 %v3266, 4294901760
        %v4220 = vsub.f32 %v3266, %v4219
        %v4221 = vand.u32 %v4220, 4294901760
        %4222 = vmatpush1.msra.mxu0 %v4221
        %v4223 = vand.u32 %v3265, 4294901760
        %v4224 = vsub.f32 %v3265, %v4223
        %v4225 = vand.u32 %v4224, 4294901760
        %4226 = vmatprep.subr.mxu0 %v4225
        %v4227 = vand.u32 %v3264, 4294901760
        %v4228 = vsub.f32 %v3264, %v4227
        %v4229 = vand.u32 %v4228, 4294901760
        %4230 = vmatpush1.msra.mxu0 %v4229
        %v4231 = vand.u32 %v3263, 4294901760
        %v4232 = vsub.f32 %v3263, %v4231
        %v4233 = vand.u32 %v4232, 4294901760
        %4234 = vmatprep.subr.mxu0 %v4233
        %v4235 = vand.u32 %v3262, 4294901760
        %v4236 = vsub.f32 %v3262, %v4235
        %v4237 = vand.u32 %v4236, 4294901760
        %4238 = vmatpush1.msra.mxu0 %v4237
        %v4239 = vand.u32 %v3261, 4294901760
        %v4240 = vsub.f32 %v3261, %v4239
        %v4241 = vand.u32 %v4240, 4294901760
        %4242 = vmatprep.subr.mxu0 %v4241
        %v4243 = vand.u32 %v3260, 4294901760
        %v4244 = vsub.f32 %v3260, %v4243
        %v4245 = vand.u32 %v4244, 4294901760
        %4246 = vmatpush1.msra.mxu0 %v4245
        %v4247 = vand.u32 %v3259, 4294901760
        %v4248 = vsub.f32 %v3259, %v4247
        %v4249 = vand.u32 %v4248, 4294901760
        %4250 = vmatprep.subr.mxu0 %v4249
        %v4251 = vand.u32 %v3258, 4294901760
        %v4252 = vsub.f32 %v3258, %v4251
        %v4253 = vand.u32 %v4252, 4294901760
        %4254 = vmatpush1.msra.mxu0 %v4253
        %v4255 = vand.u32 %v3257, 4294901760
        %v4256 = vsub.f32 %v3257, %v4255
        %v4257 = vand.u32 %v4256, 4294901760
        %4258 = vmatprep.subr.mxu0 %v4257
        %v4259 = vand.u32 %v3256, 4294901760
        %v4260 = vsub.f32 %v3256, %v4259
        %v4261 = vand.u32 %v4260, 4294901760
        %4262 = vmatpush1.msra.mxu0 %v4261
        %v4263 = vand.u32 %v3255, 4294901760
        %v4264 = vsub.f32 %v3255, %v4263
        %v4265 = vand.u32 %v4264, 4294901760
        %4266 = vmatprep.subr.mxu0 %v4265
        %v4267 = vand.u32 %v3254, 4294901760
        %v4268 = vsub.f32 %v3254, %v4267
        %v4269 = vand.u32 %v4268, 4294901760
        %4270 = vmatpush1.msra.mxu0 %v4269
        %v4271 = vand.u32 %v3253, 4294901760
        %v4272 = vsub.f32 %v3253, %v4271
        %v4273 = vand.u32 %v4272, 4294901760
        %4274 = vmatprep.subr.mxu0 %v4273
        %v4275 = vand.u32 %v3252, 4294901760
        %v4276 = vsub.f32 %v3252, %v4275
        %v4277 = vand.u32 %v4276, 4294901760
        %4278 = vmatpush1.msra.mxu0 %v4277
        %v4279 = vand.u32 %v3251, 4294901760
        %v4280 = vsub.f32 %v3251, %v4279
        %v4281 = vand.u32 %v4280, 4294901760
        %4282 = vmatprep.subr.mxu0 %v4281
        %v4283 = vand.u32 %v3250, 4294901760
        %v4284 = vsub.f32 %v3250, %v4283
        %v4285 = vand.u32 %v4284, 4294901760
        %4286 = vmatpush1.msra.mxu0 %v4285
        %v4287 = vand.u32 %v3249, 4294901760
        %v4288 = vsub.f32 %v3249, %v4287
        %v4289 = vand.u32 %v4288, 4294901760
        %4290 = vmatprep.subr.mxu0 %v4289
        %v4291 = vand.u32 %v3248, 4294901760
        %v4292 = vsub.f32 %v3248, %v4291
        %v4293 = vand.u32 %v4292, 4294901760
        %4294 = vmatpush1.msra.mxu0 %v4293
        %v4295 = vand.u32 %v3247, 4294901760
        %v4296 = vsub.f32 %v3247, %v4295
        %v4297 = vand.u32 %v4296, 4294901760
        %4298 = vmatprep.subr.mxu0 %v4297
        %v4299 = vand.u32 %v3246, 4294901760
        %v4300 = vsub.f32 %v3246, %v4299
        %v4301 = vand.u32 %v4300, 4294901760
        %4302 = vmatpush1.msra.mxu0 %v4301
        %v4303 = vand.u32 %v3245, 4294901760
        %v4304 = vsub.f32 %v3245, %v4303
        %v4305 = vand.u32 %v4304, 4294901760
        %4306 = vmatprep.subr.mxu0 %v4305
        %v4307 = vand.u32 %v3244, 4294901760
        %v4308 = vsub.f32 %v3244, %v4307
        %v4309 = vand.u32 %v4308, 4294901760
        %4310 = vmatpush1.msra.mxu0 %v4309
        %v4311 = vand.u32 %v3243, 4294901760
        %v4312 = vsub.f32 %v3243, %v4311
        %v4313 = vand.u32 %v4312, 4294901760
        %4314 = vmatprep.subr.mxu0 %v4313
        %v4315 = vand.u32 %v3242, 4294901760
        %v4316 = vsub.f32 %v3242, %v4315
        %v4317 = vand.u32 %v4316, 4294901760
        %4318 = vmatpush1.msra.mxu0 %v4317
        %v4319 = vand.u32 %v3305, 4294901760
        %v4320 = vsub.f32 %v3305, %v4319
        %v4321 = vand.u32 %v4320, 4294901760
        %4322 = vmatprep.subr.mxu0 %v4321
        %v4323 = vand.u32 %v3304, 4294901760
        %v4324 = vsub.f32 %v3304, %v4323
        %v4325 = vand.u32 %v4324, 4294901760
        %4326 = vmatpush2.msra.mxu0 %v4325
        %v4327 = vand.u32 %v3303, 4294901760
        %v4328 = vsub.f32 %v3303, %v4327
        %v4329 = vand.u32 %v4328, 4294901760
        %4330 = vmatprep.subr.mxu0 %v4329
        %v4331 = vand.u32 %v3302, 4294901760
        %v4332 = vsub.f32 %v3302, %v4331
        %v4333 = vand.u32 %v4332, 4294901760
        %4334 = vmatpush2.msra.mxu0 %v4333
        %v4335 = vand.u32 %v3301, 4294901760
        %v4336 = vsub.f32 %v3301, %v4335
        %v4337 = vand.u32 %v4336, 4294901760
        %4338 = vmatprep.subr.mxu0 %v4337
        %v4339 = vand.u32 %v3300, 4294901760
        %v4340 = vsub.f32 %v3300, %v4339
        %v4341 = vand.u32 %v4340, 4294901760
        %4342 = vmatpush2.msra.mxu0 %v4341
        %v4343 = vand.u32 %v3299, 4294901760
        %v4344 = vsub.f32 %v3299, %v4343
        %v4345 = vand.u32 %v4344, 4294901760
        %4346 = vmatprep.subr.mxu0 %v4345
        %v4347 = vand.u32 %v3298, 4294901760
        %v4348 = vsub.f32 %v3298, %v4347
        %v4349 = vand.u32 %v4348, 4294901760
        %4350 = vmatpush2.msra.mxu0 %v4349
        %v4351 = vand.u32 %v3297, 4294901760
        %v4352 = vsub.f32 %v3297, %v4351
        %v4353 = vand.u32 %v4352, 4294901760
        %4354 = vmatprep.subr.mxu0 %v4353
        %v4355 = vand.u32 %v3296, 4294901760
        %v4356 = vsub.f32 %v3296, %v4355
        %v4357 = vand.u32 %v4356, 4294901760
        %4358 = vmatpush2.msra.mxu0 %v4357
        %v4359 = vand.u32 %v3295, 4294901760
        %v4360 = vsub.f32 %v3295, %v4359
        %v4361 = vand.u32 %v4360, 4294901760
        %4362 = vmatprep.subr.mxu0 %v4361
        %v4363 = vand.u32 %v3294, 4294901760
        %v4364 = vsub.f32 %v3294, %v4363
        %v4365 = vand.u32 %v4364, 4294901760
        %4366 = vmatpush2.msra.mxu0 %v4365
        %v4367 = vand.u32 %v3293, 4294901760
        %v4368 = vsub.f32 %v3293, %v4367
        %v4369 = vand.u32 %v4368, 4294901760
        %4370 = vmatprep.subr.mxu0 %v4369
        %v4371 = vand.u32 %v3292, 4294901760
        %v4372 = vsub.f32 %v3292, %v4371
        %v4373 = vand.u32 %v4372, 4294901760
        %4374 = vmatpush2.msra.mxu0 %v4373
        %v4375 = vand.u32 %v3291, 4294901760
        %v4376 = vsub.f32 %v3291, %v4375
        %v4377 = vand.u32 %v4376, 4294901760
        %4378 = vmatprep.subr.mxu0 %v4377
        %v4379 = vand.u32 %v3290, 4294901760
        %v4380 = vsub.f32 %v3290, %v4379
        %v4381 = vand.u32 %v4380, 4294901760
        %4382 = vmatpush2.msra.mxu0 %v4381
        %v4383 = vand.u32 %v3289, 4294901760
        %v4384 = vsub.f32 %v3289, %v4383
        %v4385 = vand.u32 %v4384, 4294901760
        %4386 = vmatprep.subr.mxu0 %v4385
        %v4387 = vand.u32 %v3288, 4294901760
        %v4388 = vsub.f32 %v3288, %v4387
        %v4389 = vand.u32 %v4388, 4294901760
        %4390 = vmatpush2.msra.mxu0 %v4389
        %v4391 = vand.u32 %v3287, 4294901760
        %v4392 = vsub.f32 %v3287, %v4391
        %v4393 = vand.u32 %v4392, 4294901760
        %4394 = vmatprep.subr.mxu0 %v4393
        %v4395 = vand.u32 %v3286, 4294901760
        %v4396 = vsub.f32 %v3286, %v4395
        %v4397 = vand.u32 %v4396, 4294901760
        %4398 = vmatpush2.msra.mxu0 %v4397
        %v4399 = vand.u32 %v3285, 4294901760
        %v4400 = vsub.f32 %v3285, %v4399
        %v4401 = vand.u32 %v4400, 4294901760
        %4402 = vmatprep.subr.mxu0 %v4401
        %v4403 = vand.u32 %v3284, 4294901760
        %v4404 = vsub.f32 %v3284, %v4403
        %v4405 = vand.u32 %v4404, 4294901760
        %4406 = vmatpush2.msra.mxu0 %v4405
        %v4407 = vand.u32 %v3283, 4294901760
        %v4408 = vsub.f32 %v3283, %v4407
        %v4409 = vand.u32 %v4408, 4294901760
        %4410 = vmatprep.subr.mxu0 %v4409
        %v4411 = vand.u32 %v3282, 4294901760
        %v4412 = vsub.f32 %v3282, %v4411
        %v4413 = vand.u32 %v4412, 4294901760
        %4414 = vmatpush2.msra.mxu0 %v4413
        %v4415 = vand.u32 %v3281, 4294901760
        %v4416 = vsub.f32 %v3281, %v4415
        %v4417 = vand.u32 %v4416, 4294901760
        %4418 = vmatprep.subr.mxu0 %v4417
        %v4419 = vand.u32 %v3280, 4294901760
        %v4420 = vsub.f32 %v3280, %v4419
        %v4421 = vand.u32 %v4420, 4294901760
        %4422 = vmatpush2.msra.mxu0 %v4421
        %v4423 = vand.u32 %v3279, 4294901760
        %v4424 = vsub.f32 %v3279, %v4423
        %v4425 = vand.u32 %v4424, 4294901760
        %4426 = vmatprep.subr.mxu0 %v4425
        %v4427 = vand.u32 %v3278, 4294901760
        %v4428 = vsub.f32 %v3278, %v4427
        %v4429 = vand.u32 %v4428, 4294901760
        %4430 = vmatpush2.msra.mxu0 %v4429
        %v4431 = vand.u32 %v3277, 4294901760
        %v4432 = vsub.f32 %v3277, %v4431
        %v4433 = vand.u32 %v4432, 4294901760
        %4434 = vmatprep.subr.mxu0 %v4433
        %v4435 = vand.u32 %v3276, 4294901760
        %v4436 = vsub.f32 %v3276, %v4435
        %v4437 = vand.u32 %v4436, 4294901760
        %4438 = vmatpush2.msra.mxu0 %v4437
        %v4439 = vand.u32 %v3275, 4294901760
        %v4440 = vsub.f32 %v3275, %v4439
        %v4441 = vand.u32 %v4440, 4294901760
        %4442 = vmatprep.subr.mxu0 %v4441
        %v4443 = vand.u32 %v3274, 4294901760
        %v4444 = vsub.f32 %v3274, %v4443
        %v4445 = vand.u32 %v4444, 4294901760
        %4446 = vmatpush2.msra.mxu0 %v4445
        %v4447 = vand.u32 %v3307, 4294901760
        %4448 = vmatprep.mubr.f32.mxu0 %v4447
        %v4449 = vand.u32 %v392, 4294901760
        %4450 = vmatmul.mubr.f32.gmra.mxu0 %v4449
        %v4451 = vpop.f32.mrf.mxu0
        %v4452 = vadd.f32 %v4187, %v4451
        %v4453 = vpop.f32.mrf.mxu0
        %v4454 = vadd.f32 %v4189, %v4453
        %4455 = vdwg.mxu0
        %v4456 = vand.u32 %v3273, 4294901760
        %4457 = vmatprep.subr.mxu0 %v4456
        %v4458 = vand.u32 %v3272, 4294901760
        %4459 = vmatpush1.msra.mxu0 %v4458
        %v4460 = vand.u32 %v3271, 4294901760
        %4461 = vmatprep.subr.mxu0 %v4460
        %v4462 = vand.u32 %v3270, 4294901760
        %4463 = vmatpush1.msra.mxu0 %v4462
        %v4464 = vand.u32 %v3269, 4294901760
        %4465 = vmatprep.subr.mxu0 %v4464
        %v4466 = vand.u32 %v3268, 4294901760
        %4467 = vmatpush1.msra.mxu0 %v4466
        %v4468 = vand.u32 %v3267, 4294901760
        %4469 = vmatprep.subr.mxu0 %v4468
        %v4470 = vand.u32 %v3266, 4294901760
        %4471 = vmatpush1.msra.mxu0 %v4470
        %v4472 = vand.u32 %v3265, 4294901760
        %4473 = vmatprep.subr.mxu0 %v4472
        %v4474 = vand.u32 %v3264, 4294901760
        %4475 = vmatpush1.msra.mxu0 %v4474
        %v4476 = vand.u32 %v3263, 4294901760
        %4477 = vmatprep.subr.mxu0 %v4476
        %v4478 = vand.u32 %v3262, 4294901760
        %4479 = vmatpush1.msra.mxu0 %v4478
        %v4480 = vand.u32 %v3261, 4294901760
        %4481 = vmatprep.subr.mxu0 %v4480
        %v4482 = vand.u32 %v3260, 4294901760
        %4483 = vmatpush1.msra.mxu0 %v4482
        %v4484 = vand.u32 %v3259, 4294901760
        %4485 = vmatprep.subr.mxu0 %v4484
        %v4486 = vand.u32 %v3258, 4294901760
        %4487 = vmatpush1.msra.mxu0 %v4486
        %v4488 = vand.u32 %v3257, 4294901760
        %4489 = vmatprep.subr.mxu0 %v4488
        %v4490 = vand.u32 %v3256, 4294901760
        %4491 = vmatpush1.msra.mxu0 %v4490
        %v4492 = vand.u32 %v3255, 4294901760
        %4493 = vmatprep.subr.mxu0 %v4492
        %v4494 = vand.u32 %v3254, 4294901760
        %4495 = vmatpush1.msra.mxu0 %v4494
        %v4496 = vand.u32 %v3253, 4294901760
        %4497 = vmatprep.subr.mxu0 %v4496
        %v4498 = vand.u32 %v3252, 4294901760
        %4499 = vmatpush1.msra.mxu0 %v4498
        %v4500 = vand.u32 %v3251, 4294901760
        %4501 = vmatprep.subr.mxu0 %v4500
        %v4502 = vand.u32 %v3250, 4294901760
        %4503 = vmatpush1.msra.mxu0 %v4502
        %v4504 = vand.u32 %v3249, 4294901760
        %4505 = vmatprep.subr.mxu0 %v4504
        %v4506 = vand.u32 %v3248, 4294901760
        %4507 = vmatpush1.msra.mxu0 %v4506
        %v4508 = vand.u32 %v3247, 4294901760
        %4509 = vmatprep.subr.mxu0 %v4508
        %v4510 = vand.u32 %v3246, 4294901760
        %4511 = vmatpush1.msra.mxu0 %v4510
        %v4512 = vand.u32 %v3245, 4294901760
        %4513 = vmatprep.subr.mxu0 %v4512
        %v4514 = vand.u32 %v3244, 4294901760
        %4515 = vmatpush1.msra.mxu0 %v4514
        %v4516 = vand.u32 %v3243, 4294901760
        %4517 = vmatprep.subr.mxu0 %v4516
        %v4518 = vand.u32 %v3242, 4294901760
        %4519 = vmatpush1.msra.mxu0 %v4518
        %v4520 = vand.u32 %v3305, 4294901760
        %4521 = vmatprep.subr.mxu0 %v4520
        %v4522 = vand.u32 %v3304, 4294901760
        %4523 = vmatpush2.msra.mxu0 %v4522
        %v4524 = vand.u32 %v3303, 4294901760
        %4525 = vmatprep.subr.mxu0 %v4524
        %v4526 = vand.u32 %v3302, 4294901760
        %4527 = vmatpush2.msra.mxu0 %v4526
        %v4528 = vand.u32 %v3301, 4294901760
        %4529 = vmatprep.subr.mxu0 %v4528
        %v4530 = vand.u32 %v3300, 4294901760
        %4531 = vmatpush2.msra.mxu0 %v4530
        %v4532 = vand.u32 %v3299, 4294901760
        %4533 = vmatprep.subr.mxu0 %v4532
        %v4534 = vand.u32 %v3298, 4294901760
        %4535 = vmatpush2.msra.mxu0 %v4534
        %v4536 = vand.u32 %v3297, 4294901760
        %4537 = vmatprep.subr.mxu0 %v4536
        %v4538 = vand.u32 %v3296, 4294901760
        %4539 = vmatpush2.msra.mxu0 %v4538
        %v4540 = vand.u32 %v3295, 4294901760
        %4541 = vmatprep.subr.mxu0 %v4540
        %v4542 = vand.u32 %v3294, 4294901760
        %4543 = vmatpush2.msra.mxu0 %v4542
        %v4544 = vand.u32 %v3293, 4294901760
        %4545 = vmatprep.subr.mxu0 %v4544
        %v4546 = vand.u32 %v3292, 4294901760
        %4547 = vmatpush2.msra.mxu0 %v4546
        %v4548 = vand.u32 %v3291, 4294901760
        %4549 = vmatprep.subr.mxu0 %v4548
        %v4550 = vand.u32 %v3290, 4294901760
        %4551 = vmatpush2.msra.mxu0 %v4550
        %v4552 = vand.u32 %v3289, 4294901760
        %4553 = vmatprep.subr.mxu0 %v4552
        %v4554 = vand.u32 %v3288, 4294901760
        %4555 = vmatpush2.msra.mxu0 %v4554
        %v4556 = vand.u32 %v3287, 4294901760
        %4557 = vmatprep.subr.mxu0 %v4556
        %v4558 = vand.u32 %v3286, 4294901760
        %4559 = vmatpush2.msra.mxu0 %v4558
        %v4560 = vand.u32 %v3285, 4294901760
        %4561 = vmatprep.subr.mxu0 %v4560
        %v4562 = vand.u32 %v3284, 4294901760
        %4563 = vmatpush2.msra.mxu0 %v4562
        %v4564 = vand.u32 %v3283, 4294901760
        %4565 = vmatprep.subr.mxu0 %v4564
        %v4566 = vand.u32 %v3282, 4294901760
        %4567 = vmatpush2.msra.mxu0 %v4566
        %v4568 = vand.u32 %v3281, 4294901760
        %4569 = vmatprep.subr.mxu0 %v4568
        %v4570 = vand.u32 %v3280, 4294901760
        %4571 = vmatpush2.msra.mxu0 %v4570
        %v4572 = vand.u32 %v3279, 4294901760
        %4573 = vmatprep.subr.mxu0 %v4572
        %v4574 = vand.u32 %v3278, 4294901760
        %4575 = vmatpush2.msra.mxu0 %v4574
        %v4576 = vand.u32 %v3277, 4294901760
        %4577 = vmatprep.subr.mxu0 %v4576
        %v4578 = vand.u32 %v3276, 4294901760
        %4579 = vmatpush2.msra.mxu0 %v4578
        %v4580 = vand.u32 %v3275, 4294901760
        %4581 = vmatprep.subr.mxu0 %v4580
        %v4582 = vand.u32 %v3274, 4294901760
        %4583 = vmatpush2.msra.mxu0 %v4582
        %v4584 = vand.u32 %v3307, 4294901760
        %4585 = vmatprep.mubr.f32.mxu0 %v4584
        %v4586 = vand.u32 %v392, 4294901760
        %4587 = vmatmul.mubr.f32.gmra.mxu0 %v4586
        %v4588 = vpop.f32.mrf.mxu0
        %v4589 = vadd.f32 %v4452, %v4588
        %v4590 = vpop.f32.mrf.mxu0
        %v4591 = vadd.f32 %v4454, %v4590
        %4592 = vdwg.mxu0
        %v4595 = vcombine.low %v4589, %v4591
        %4597 = vst [vmem:[%s306] sm:$0xff] %v4595
        %v4598 = vcombine.low %v3042, %v3113
        %v4600 = vunpack.c.l.s4 1966171168
        %v4601 = vunpack.c.0.s8 %v4600
        %v4602 = vlaneseq
        %v4603 = vshrl.u32 %v4602, 7
        %v4604 = vsub.s32 %v4601, %v4603
        %v4605 = vrot.slane %v4598, %v4604
        %v4607 = vunpack.c.l.s4 1966171168
        %v4608 = vunpack.c.0.s8 %v4607
        %v4609 = vlaneseq
        %v4610 = vshrl.u32 %v4609, 7
        %v4611 = vsub.s32 %v4608, %v4610
        %v4612 = vrot.slane %v4605, %v4611
        %v4613 = vlaneseq
        %vm4614 = vcmp.ge.s32.totalorder %v4613, 0
        %vm4615 = vcmp.lt.s32.totalorder %v4613, 256
        %vm4616 = vmand %vm4614, %vm4615
        %4617 = vst.msk [vmem:[%s313] sm:$0x3] %vm4616, %v4612
        %v4618 = vmax.f32 %v3242, %v3243
        %4619 = vmax.xlane.f32.xlu0 %v4618
        %v4620 = vpop.xlane.xlu0 %4619
        %v4621 = vmax.f32 %v3244, %v3245
        %4622 = vmax.xlane.f32.xlu0 %v4621
        %v4623 = vpop.xlane.xlu0 %4622
        %v4624 = vmax.f32 %v3246, %v3247
        %4625 = vmax.xlane.f32.xlu0 %v4624
        %v4626 = vpop.xlane.xlu0 %4625
        %v4627 = vmax.f32 %v3248, %v3249
        %4628 = vmax.xlane.f32.xlu0 %v4627
        %v4629 = vpop.xlane.xlu0 %4628
        %v4630 = vmax.f32 %v3250, %v3251
        %4631 = vmax.xlane.f32.xlu0 %v4630
        %v4632 = vpop.xlane.xlu0 %4631
        %v4633 = vmax.f32 %v3252, %v3253
        %4634 = vmax.xlane.f32.xlu0 %v4633
        %v4635 = vpop.xlane.xlu0 %4634
        %v4636 = vmax.f32 %v3254, %v3255
        %4637 = vmax.xlane.f32.xlu0 %v4636
        %v4638 = vpop.xlane.xlu0 %4637
        %v4639 = vmax.f32 %v3256, %v3257
        %4640 = vmax.xlane.f32.xlu0 %v4639
        %v4641 = vpop.xlane.xlu0 %4640
        %v4642 = vmax.f32 %v3258, %v3259
        %4643 = vmax.xlane.f32.xlu0 %v4642
        %v4644 = vpop.xlane.xlu0 %4643
        %v4645 = vmax.f32 %v3260, %v3261
        %4646 = vmax.xlane.f32.xlu0 %v4645
        %v4647 = vpop.xlane.xlu0 %4646
        %v4648 = vmax.f32 %v3262, %v3263
        %4649 = vmax.xlane.f32.xlu0 %v4648
        %v4650 = vpop.xlane.xlu0 %4649
        %v4651 = vmax.f32 %v3264, %v3265
        %4652 = vmax.xlane.f32.xlu0 %v4651
        %v4653 = vpop.xlane.xlu0 %4652
        %v4654 = vmax.f32 %v3266, %v3267
        %4655 = vmax.xlane.f32.xlu0 %v4654
        %v4656 = vpop.xlane.xlu0 %4655
        %v4657 = vmax.f32 %v3268, %v3269
        %4658 = vmax.xlane.f32.xlu0 %v4657
        %v4659 = vpop.xlane.xlu0 %4658
        %v4660 = vmax.f32 %v3270, %v3271
        %4661 = vmax.xlane.f32.xlu0 %v4660
        %v4662 = vpop.xlane.xlu0 %4661
        %v4663 = vmax.f32 %v3272, %v3273
        %4664 = vmax.xlane.f32.xlu0 %v4663
        %v4665 = vpop.xlane.xlu0 %4664
        %v4666 = vmax.f32 %v3274, %v3275
        %4667 = vmax.xlane.f32.xlu0 %v4666
        %v4668 = vpop.xlane.xlu0 %4667
        %v4669 = vmax.f32 %v3276, %v3277
        %4670 = vmax.xlane.f32.xlu0 %v4669
        %v4671 = vpop.xlane.xlu0 %4670
        %v4672 = vmax.f32 %v3278, %v3279
        %4673 = vmax.xlane.f32.xlu0 %v4672
        %v4674 = vpop.xlane.xlu0 %4673
        %v4675 = vmax.f32 %v3280, %v3281
        %4676 = vmax.xlane.f32.xlu0 %v4675
        %v4677 = vpop.xlane.xlu0 %4676
        %v4678 = vmax.f32 %v3282, %v3283
        %4679 = vmax.xlane.f32.xlu0 %v4678
        %v4680 = vpop.xlane.xlu0 %4679
        %v4681 = vmax.f32 %v3284, %v3285
        %4682 = vmax.xlane.f32.xlu0 %v4681
        %v4683 = vpop.xlane.xlu0 %4682
        %v4684 = vmax.f32 %v3286, %v3287
        %4685 = vmax.xlane.f32.xlu0 %v4684
        %v4686 = vpop.xlane.xlu0 %4685
        %v4687 = vmax.f32 %v3288, %v3289
        %4688 = vmax.xlane.f32.xlu0 %v4687
        %v4689 = vpop.xlane.xlu0 %4688
        %v4690 = vmax.f32 %v3290, %v3291
        %4691 = vmax.xlane.f32.xlu0 %v4690
        %v4692 = vpop.xlane.xlu0 %4691
        %v4693 = vmax.f32 %v3292, %v3293
        %4694 = vmax.xlane.f32.xlu0 %v4693
        %v4695 = vpop.xlane.xlu0 %4694
        %v4696 = vmax.f32 %v3294, %v3295
        %4697 = vmax.xlane.f32.xlu0 %v4696
        %v4698 = vpop.xlane.xlu0 %4697
        %v4699 = vmax.f32 %v3296, %v3297
        %4700 = vmax.xlane.f32.xlu0 %v4699
        %v4701 = vpop.xlane.xlu0 %4700
        %v4702 = vmax.f32 %v3298, %v3299
        %4703 = vmax.xlane.f32.xlu0 %v4702
        %v4704 = vpop.xlane.xlu0 %4703
        %v4705 = vmax.f32 %v3300, %v3301
        %4706 = vmax.xlane.f32.xlu0 %v4705
        %v4707 = vpop.xlane.xlu0 %4706
        %v4708 = vmax.f32 %v3302, %v3303
        %4709 = vmax.xlane.f32.xlu0 %v4708
        %v4710 = vpop.xlane.xlu0 %4709
        %v4711 = vmax.f32 %v3304, %v3305
        %4712 = vmax.xlane.f32.xlu0 %v4711
        %v4713 = vpop.xlane.xlu0 %4712
        %vm4714 = vcmask 7168
        %4715 = vst.msk [vmem:[%s352] sm:$0xff] %vm4714, %v4620
        %4716 = vst.msk [vmem:[%s352 + $0x8] sm:$0xff] %vm4714, %v4623
        %4717 = vst.msk [vmem:[%s352 + $0x10] sm:$0xff] %vm4714, %v4626
        %4718 = vst.msk [vmem:[%s352 + $0x18] sm:$0xff] %vm4714, %v4629
        %4719 = vst.msk [vmem:[%s352 + $0x20] sm:$0xff] %vm4714, %v4632
        %4720 = vst.msk [vmem:[%s352 + $0x28] sm:$0xff] %vm4714, %v4635
        %4721 = vst.msk [vmem:[%s352 + $0x30] sm:$0xff] %vm4714, %v4638
        %4722 = vst.msk [vmem:[%s352 + $0x38] sm:$0xff] %vm4714, %v4641
        %4723 = vst.msk [vmem:[%s352 + $0x40] sm:$0xff] %vm4714, %v4644
        %4724 = vst.msk [vmem:[%s352 + $0x48] sm:$0xff] %vm4714, %v4647
        %4725 = vst.msk [vmem:[%s352 + $0x50] sm:$0xff] %vm4714, %v4650
        %4726 = vst.msk [vmem:[%s352 + $0x58] sm:$0xff] %vm4714, %v4653
        %4727 = vst.msk [vmem:[%s352 + $0x60] sm:$0xff] %vm4714, %v4656
        %4728 = vst.msk [vmem:[%s352 + $0x68] sm:$0xff] %vm4714, %v4659
        %4729 = vst.msk [vmem:[%s352 + $0x70] sm:$0xff] %vm4714, %v4662
        %4730 = vst.msk [vmem:[%s352 + $0x78] sm:$0xff] %vm4714, %v4665
        %4731 = vst.msk [vmem:[%s352 + $0x80] sm:$0xff] %vm4714, %v4668
        %4732 = vst.msk [vmem:[%s352 + $0x88] sm:$0xff] %vm4714, %v4671
        %4733 = vst.msk [vmem:[%s352 + $0x90] sm:$0xff] %vm4714, %v4674
        %4734 = vst.msk [vmem:[%s352 + $0x98] sm:$0xff] %vm4714, %v4677
        %4735 = vst.msk [vmem:[%s352 + $0xa0] sm:$0xff] %vm4714, %v4680
        %4736 = vst.msk [vmem:[%s352 + $0xa8] sm:$0xff] %vm4714, %v4683
        %4737 = vst.msk [vmem:[%s352 + $0xb0] sm:$0xff] %vm4714, %v4686
        %4738 = vst.msk [vmem:[%s352 + $0xb8] sm:$0xff] %vm4714, %v4689
        %4739 = vst.msk [vmem:[%s352 + $0xc0] sm:$0xff] %vm4714, %v4692
        %4740 = vst.msk [vmem:[%s352 + $0xc8] sm:$0xff] %vm4714, %v4695
        %4741 = vst.msk [vmem:[%s352 + $0xd0] sm:$0xff] %vm4714, %v4698
        %4742 = vst.msk [vmem:[%s352 + $0xd8] sm:$0xff] %vm4714, %v4701
        %4743 = vst.msk [vmem:[%s352 + $0xe0] sm:$0xff] %vm4714, %v4704
        %4744 = vst.msk [vmem:[%s352 + $0xe8] sm:$0xff] %vm4714, %v4707
        %4745 = vst.msk [vmem:[%s352 + $0xf0] sm:$0xff] %vm4714, %v4710
        %4746 = vst.msk [vmem:[%s352 + $0xf8] sm:$0xff] %vm4714, %v4713
        %v4748 = vsub.f32 %v4589, %v359
        %v4749 = vsub.f32 %v4591, %v394
        %v4750 = vmul.f32 %v4748, %v4748
        %v4751 = vmul.f32 %v4749, %v4749
        %v4752 = vsel %vm492, %v4750, 0.0
        %v4753 = vsel %vm492, %v4751, 0.0
        %v4754 = vadd.f32 %v4752, %v4753
        %4755 = vadd.xlane.f32.xlu0 %v4754
        %v4756 = vpop.xlane.xlu0 %4755
        %v4757 = vrot.slane %v4756, 4
        %v4758 = vadd.f32 %v4756, %v4757
        %v4759 = vrot.slane %v4758, 2
        %v4760 = vadd.f32 %v4758, %v4759
        %v4761 = vrot.slane %v4760, 1
        %v4762 = vadd.f32 %v4760, %v4761
        %s4763 = vtos %v4762
        %v4764 = vstv %s4763
        %vm4765 = vcmask 0
        %4766 = vst.msk [vmem:[%s358] sm:$0x1] %vm4765, %v4764
        %s4767 = sand.u32 %s138, 1
        %s4768 = scalar_lea.sflag [#allocation3], %s4767
        %s4769 = sand.u32 %s138, 1
        %s4770 = smul.addr %s4769, 8
        %s4771 = scalar_lea.vmem [#allocation2], %s4770
        %s4772 = sand.u32 %s166, 1
        %s4773 = scalar_lea.sflag [#allocation5], %s4772
        %s4774 = sand.u32 %s166, 1
        %s4775 = smul.addr %s4774, 2
        %s4776 = scalar_lea.vmem [#allocation4], %s4775
        %p4777 = scmp.lt.s32.totalorder %s29, 1
        %s4778 = scalar_select %p4777, %s29, 1
        %p4779 = scmp.lt.s32.totalorder %s30, 0
        %s4780 = scalar_select %p4779, %s30, 0
        %s4781 = smul.addr %s4780, 32
        %s4782 = smul.addr %s4778, 32
        %s4783 = sadd.s32 %s4781, %s4782
        %s4784 = smul.addr %s4783, 8
        %s4785 = scalar_lea.vmem %s6, %s4784
        %p4786 = scmp.lt.s32.totalorder %s29, 1
        %s4787 = scalar_select %p4786, %s29, 1
        %p4788 = scmp.lt.s32.totalorder %s30, 0
        %s4789 = scalar_select %p4788, %s30, 0
        %s4790 = sadd.s32 %s4789, %s4787
        %s4791 = scalar_lea.vmem %s7, %s4790
        // Predicated region
        $region37: #{tpu_custom_call.1} parent=35 // pred_check
          %p4792 = pneg %p148
        $region38: #{tpu_custom_call.1} parent=35 // pred_check_branch
          %4794 = sbr.rel (%p4792) target = $region40
        $region39: #{tpu_custom_call.1} parent=35 // pred_region
          %s4795 = smul.u32 2, %s30
          %s4797 = ssub.s32 128, 128
          %4798 = vsyncadd %s4768, %s4797
          %s4799 = smul.addr %s29, 2
          %s4800 = sadd.s32 %s4795, %s4799
          %s4801 = smul.addr %s4800, 64
          %s4802 = scalar_lea.hbm %s4, %s4801
          %s4804 = sshll.u32 %s4771, 4
          %s4805 = int_to_ptr.vmem [resolvable:$true] %s4804
          %4807 = dma.vmem_to_hbm [thread:$0]  %s4805, 128, %s4802, %s4768
        $region40: #{tpu_custom_call.1} parent=35 // pred_fallthru
          _
        // Predicated region
        $region41: #{tpu_custom_call.1} parent=35 // pred_check
          %p4808 = pneg %p176
        $region42: #{tpu_custom_call.1} parent=35 // pred_check_branch
          %4810 = sbr.rel (%p4808) target = $region44
        $region43: #{tpu_custom_call.1} parent=35 // pred_region
          %s4812 = ssub.s32 32, 32
          %4813 = vsyncadd %s4773, %s4812
          %s4814 = smul.addr %s30, 2
          %s4815 = smul.addr %s29, 2
          %s4816 = sadd.s32 %s4814, %s4815
          %s4817 = smul.addr %s4816, 16
          %s4818 = scalar_lea.hbm %s5, %s4817
          %s4820 = sshll.u32 %s4776, 4
          %s4821 = int_to_ptr.vmem [resolvable:$true] %s4820
          %4823 = dma.vmem_to_hbm [thread:$0]  %s4821, 32, %s4818, %s4773
        $region44: #{tpu_custom_call.1} parent=35 // pred_fallthru
          _
        // Predicated region
        $region45: #{tpu_custom_call.1} parent=35 // pred_check
          %p4824 = pneg %p204
        $region46: #{tpu_custom_call.1} parent=35 // pred_check_branch
          %4826 = sbr.rel (%p4824) target = $region48
        $region47: #{tpu_custom_call.1} parent=35 // pred_region
          _
        $region48: #{tpu_custom_call.1} parent=35 // pred_fallthru
          _
        // Predicated region
        $region49: #{tpu_custom_call.1} parent=35 // pred_check
          %p4827 = pneg %p232
        $region50: #{tpu_custom_call.1} parent=35 // pred_check_branch
          %4829 = sbr.rel (%p4827) target = $region52
        $region51: #{tpu_custom_call.1} parent=35 // pred_region
          _
        $region52: #{tpu_custom_call.1} parent=35 // pred_fallthru
          _
      $region36: #{tpu_custom_call.1} parent=5 // pred_fallthru
        _
      %p4830 = scmp.le.s32.totalorder 2, %s20
      // Predicated region
      $region53: #{tpu_custom_call.1} parent=5 // pred_check
        %p4831 = pneg %p4830
      $region54: #{tpu_custom_call.1} parent=5 // pred_check_branch
        %4833 = sbr.rel (%p4831) target = $region56
      $region55: #{tpu_custom_call.1} parent=5 // pred_region
        %s4834 = ssub.s32 %s20, 2
        // Predicated region
        $region57: #{tpu_custom_call.1} parent=55 // pred_check
          %p4835 = pneg %p154
        $region58: #{tpu_custom_call.1} parent=55 // pred_check_branch
          %4837 = sbr.rel (%p4835) target = $region60
        $region59: #{tpu_custom_call.1} parent=55 // pred_region
          %s4838 = sand.u32 %s139, 1
          %s4839 = scalar_lea.sflag [#allocation3], %s4838
          %s4840 = sand.u32 %s139, 1
          %s4841 = smul.addr %s4840, 8
          %s4842 = scalar_lea.vmem [#allocation2], %s4841
          %4843 = dma.done %s4839, 128
        $region60: #{tpu_custom_call.1} parent=55 // pred_fallthru
          _
        // Predicated region
        $region61: #{tpu_custom_call.1} parent=55 // pred_check
          %p4844 = pneg %p182
        $region62: #{tpu_custom_call.1} parent=55 // pred_check_branch
          %4846 = sbr.rel (%p4844) target = $region64
        $region63: #{tpu_custom_call.1} parent=55 // pred_region
          %s4847 = sand.u32 %s167, 1
          %s4848 = scalar_lea.sflag [#allocation5], %s4847
          %s4849 = sand.u32 %s167, 1
          %s4850 = smul.addr %s4849, 2
          %s4851 = scalar_lea.vmem [#allocation4], %s4850
          %4852 = dma.done %s4848, 32
        $region64: #{tpu_custom_call.1} parent=55 // pred_fallthru
          _
        // Predicated region
        $region65: #{tpu_custom_call.1} parent=55 // pred_check
          %p4853 = pneg %p210
        $region66: #{tpu_custom_call.1} parent=55 // pred_check_branch
          %4855 = sbr.rel (%p4853) target = $region68
        $region67: #{tpu_custom_call.1} parent=55 // pred_region
          %p4856 = scmp.lt.s32.totalorder %s31, 1
          %s4857 = scalar_select %p4856, %s31, 1
          %p4858 = scmp.lt.s32.totalorder %s32, 0
          %s4859 = scalar_select %p4858, %s32, 0
          %s4860 = smul.addr %s4859, 32
          %s4861 = smul.addr %s4857, 32
          %s4862 = sadd.s32 %s4860, %s4861
          %s4863 = smul.addr %s4862, 8
          %s4864 = scalar_lea.vmem %s6, %s4863
        $region68: #{tpu_custom_call.1} parent=55 // pred_fallthru
          _
        // Predicated region
        $region69: #{tpu_custom_call.1} parent=55 // pred_check
          %p4865 = pneg %p238
        $region70: #{tpu_custom_call.1} parent=55 // pred_check_branch
          %4867 = sbr.rel (%p4865) target = $region72
        $region71: #{tpu_custom_call.1} parent=55 // pred_region
          %p4868 = scmp.lt.s32.totalorder %s31, 1
          %s4869 = scalar_select %p4868, %s31, 1
          %p4870 = scmp.lt.s32.totalorder %s32, 0
          %s4871 = scalar_select %p4870, %s32, 0
          %s4872 = sadd.s32 %s4871, %s4869
          %s4873 = scalar_lea.vmem %s7, %s4872
        $region72: #{tpu_custom_call.1} parent=55 // pred_fallthru
          _
      $region56: #{tpu_custom_call.1} parent=5 // pred_fallthru
        _
    $region6: #{tpu_custom_call.1} parent=1 // loop_footer
      %s24 = sadd.s32 1, %s20
    $region7: #{tpu_custom_call.1} parent=1 // loop_footer_branch
      %19 = sbr.rel target = $region3
    $region8: #{tpu_custom_call.1} parent=1 // loop_exit
      _
    %4874 = vsyncpa [#allocation3], 1
    %s4875 = scalar_lea.sflag [#allocation3], 1
    %4876 = vsyncpa %s4875, 1
    %4877 = vsyncpa [#allocation5], 1
    %s4878 = scalar_lea.sflag [#allocation5], 1
    %4879 = vsyncpa %s4878, 1

</llo_original>
